<compile_context>
chip_gen: v6e
topology: v6e:2x2x1
jax: 0.10.0
libtpu: 0.0.40
codegen_flags: <defaults>
</compile_context>

<pallas_src>
import random

import numpy as np
import jax
import jax.numpy as jnp
from jax import lax
from jax.experimental import pallas as pl
from jax.experimental.pallas import tpu as pltpu

# Default class weights from the module's __init__.
WEIGHTS = (1.0, 9.04788032, 8.68207691, 12.9632271)
KMAX = 10                   # static upper bound of random.randint(1, 10)
KPAD = 16                   # KMAX padded to a sublane-friendly multiple
N_MASK = 4                  # damage-mask channels used for scoring (tensor ch 7..10)
_SEL_LEN = 5 + 2 * KMAX     # [try_cnt, init_r, init_c, crop_h, crop_w, cand_r, cand_c]
_SINGLE_BLOCK_BYTES = 4 << 20   # whole-tensor-in-one-grid-step threshold (2x buffered)


def _round_up(x, m):
    return (x + m - 1) // m * m


def _sublane(dtype):
    # Packed sublane multiple: 8 for 4-byte, 16 for 2-byte, 32 for 1-byte dtypes.
    return max(8, 32 // jnp.dtype(dtype).itemsize)


def _nearest_src(in_size, out_size, pad_to):
    """torch.nn.functional.interpolate(mode='nearest') source indices.

    src[i] = min(floor(i * (in/out)), in-1) computed in float32, matching the
    PyTorch NEAREST path (antialias is a no-op for NEAREST).  Padded to
    `pad_to` with the last index so padded output rows/cols stay in-bounds
    (they are sliced away on the host side).
    """
    scale = np.float32(in_size) / np.float32(out_size)
    idx = np.floor(np.arange(out_size, dtype=np.float32) * scale).astype(np.int32)
    idx = np.minimum(idx, np.int32(in_size - 1))
    full = np.full((pad_to,), idx[-1], np.int32)
    full[:out_size] = idx
    return full


def _vmem_limit_bytes(estimate):
    """Shape-aware VMEM limit, capped below the physical VMEM of this chip."""
    cap = 128 << 20
    try:
        cap = int(pltpu.get_tpu_info().vmem_capacity_bytes)
    except Exception:
        pass
    want = max(2 * int(estimate), 32 << 20)
    return int(min(want, cap * 3 // 4))


# ----------------------------------------------------------------------------
# Kernel builder.  Two structural variants:
#   * single_block=True : grid=(1,), whole tensor in VMEM, everything fused.
#   * single_block=False: grid=(n_pre + c,); steps 0..n_pre-1 score the mask
#     channels (MXU), step n_pre builds the Sy/Sx selectors, steps >= n_pre
#     resize one channel each as Sy @ X @ Sx.
# ----------------------------------------------------------------------------
def _make_kernel(*, c, h, w, out_r, out_c, n_pre, do_score, single_block,
                 weights, mm_dtype):
    w_list = [float(v) for v in weights]

    def build_sy(rel_r, r_off):
        # Sy[i, y] = 1  iff  y == r_off + rel_r[i]
        yy = lax.broadcasted_iota(jnp.int32, (out_r, h), 1)
        return (yy == (r_off + rel_r)).astype(mm_dtype)            # (out_r, h)

    def build_sx(rel_c, c_off):
        # Sx[x, j] = 1  iff  x == c_off + rel_c[j]
        xx = lax.broadcasted_iota(jnp.int32, (w, out_c), 0)
        return (xx == (c_off + rel_c)).astype(mm_dtype)            # (w, out_c)

    def smem_col(sel_ref, base):
        # Gather KMAX SMEM scalars into a (KPAD, 1) column (pad entries = 0).
        kk = lax.broadcasted_iota(jnp.int32, (KPAD, 1), 0)
        v = jnp.zeros((KPAD, 1), jnp.int32)
        for k in range(KMAX):
            v = jnp.where(kk == k, sel_ref[base + k], v)
        return v

    def window(offs, extent, size):
        # Indicator[k, p] = 1 iff offs[k] <= p < offs[k] + extent.
        pp = lax.broadcasted_iota(jnp.int32, (KPAD, size), 1)
        return ((pp >= offs) & (pp < offs + extent)).astype(jnp.float32)

    def pick_best(sel_ref, scores):
        # Running max over <= KMAX candidates, ties -> earliest, start at -1
        # with the initial random offsets (mirrors the PyTorch loop exactly).
        best_sc = jnp.full((1, 1), -1.0, jnp.float32)
        best_r = jnp.full((1, 1), sel_ref[1], jnp.int32)
        best_c = jnp.full((1, 1), sel_ref[2], jnp.int32)
        n_valid = sel_ref[0]
        for k in range(KMAX):
            sc = scores[k:k + 1, :]
            better = jnp.logical_and(n_valid > k, sc > best_sc)
            best_sc = jnp.where(better, sc, best_sc)
            best_r = jnp.where(better, sel_ref[5 + k], best_r)
            best_c = jnp.where(better, sel_ref[5 + KMAX + k], best_c)
        return best_r, best_c

    def resize_one(sy, x2d, sx):
        # Crop + NEAREST resize of one channel: one-hot gather on the MXU.
        t = jnp.dot(sy, x2d.astype(mm_dtype),
                    preferred_element_type=jnp.float32).astype(mm_dtype)
        return jnp.dot(t, sx, preferred_element_type=jnp.float32)

    if single_block:
        def kernel(sel_ref, rel_r_ref, rel_c_ref, x_ref, o_ref):
            if do_score:
                rwin = window(smem_col(sel_ref, 5), sel_ref[3], h)          # (KPAD, h)
                cwin = window(smem_col(sel_ref, 5 + KMAX), sel_ref[4], w)   # (KPAD, w)
                pacc = jnp.zeros((KPAD, w), jnp.float32)
                for j in range(N_MASK):
                    pacc = pacc + w_list[j] * jnp.dot(
                        rwin, x_ref[c - N_MASK + j].astype(jnp.float32),
                        preferred_element_type=jnp.float32)
                scores = jnp.sum(pacc * cwin, axis=1, keepdims=True)        # (KPAD, 1)
                r_off, c_off = pick_best(sel_ref, scores)
            else:
                r_off = jnp.zeros((1, 1), jnp.int32)
                c_off = jnp.zeros((1, 1), jnp.int32)
            sy = build_sy(rel_r_ref[...], r_off)
            sx = build_sx(rel_c_ref[...], c_off)
            for j in range(c):
                o_ref[j] = resize_one(sy, x_ref[j], sx).astype(o_ref.dtype)
        return kernel

    def kernel(sel_ref, rel_r_ref, rel_c_ref, x_ref, o_ref, *scratch):
        if do_score:
            rwin_ref, pacc_ref, sy_ref, sx_ref = scratch
        else:
            sy_ref, sx_ref = scratch
        step = pl.program_id(0)

        if do_score:                       # n_pre == N_MASK scoring prologue steps
            @pl.when(step == 0)
            def _init():
                rwin_ref[...] = window(smem_col(sel_ref, 5), sel_ref[3], h)
                pacc_ref[...] = jnp.zeros_like(pacc_ref)

            @pl.when(step < n_pre)
            def _score():
                # prologue step j sees tensor channel 7+j == msk[1+j] -> weight w[j]
                wt = jnp.full((), w_list[N_MASK - 1], jnp.float32)
                for j in range(N_MASK - 1):
                    wt = jnp.where(step == j, jnp.float32(w_list[j]), wt)
                pacc_ref[...] = pacc_ref[...] + wt * jnp.dot(
                    rwin_ref[...], x_ref[0].astype(jnp.float32),
                    preferred_element_type=jnp.float32)

        @pl.when(step == n_pre)
        def _selectors():
            if do_score:
                cwin = window(smem_col(sel_ref, 5 + KMAX), sel_ref[4], w)
                scores = jnp.sum(pacc_ref[...] * cwin, axis=1, keepdims=True)
                r_off, c_off = pick_best(sel_ref, scores)
            else:
                r_off = jnp.zeros((1, 1), jnp.int32)
                c_off = jnp.zeros((1, 1), jnp.int32)
            sy_ref[...] = build_sy(rel_r_ref[...], r_off)
            sx_ref[...] = build_sx(rel_c_ref[...], c_off)

        def _resize():
            o_ref[0] = resize_one(sy_ref[...], x_ref[0],
                                  sx_ref[...]).astype(o_ref.dtype)

        if n_pre > 0:
            pl.when(step >= n_pre)(_resize)
        else:
            _resize()

    return kernel


def _build_resize_crop(c, h, w, dtype, out, weights):
    dtype = jnp.dtype(dtype)
    itemsize = dtype.itemsize
    sub = _sublane(dtype)
    out_r = _round_up(max(out, sub), sub)          # packed-sublane-aligned rows
    out_c = _round_up(max(out, 128), 128)          # lane-dense columns
    do_score = (c == 11)                           # cropping requires the 11-ch layout
    single_block = (2 * c * h * w * itemsize) <= _SINGLE_BLOCK_BYTES
    n_pre = N_MASK if (do_score and not single_block) else 0
    mm_dtype = jnp.bfloat16 if dtype == jnp.bfloat16 else jnp.float32
    mm_size = jnp.dtype(mm_dtype).itemsize

    kernel = _make_kernel(c=c, h=h, w=w, out_r=out_r, out_c=out_c, n_pre=n_pre,
                          do_score=do_score, single_block=single_block,
                          weights=weights, mm_dtype=mm_dtype)

    if single_block:
        grid = (1,)
        x_spec = pl.BlockSpec((c, h, w), lambda i, sel: (0, 0, 0))
        o_spec = pl.BlockSpec((c, out_r, out_c), lambda i, sel: (0, 0, 0))
        scratch = []
        est = (2 * (c * h * w * itemsize + c * out_r * out_c * itemsize)
               + (out_r * h + w * out_c) * mm_size + 2 * KPAD * (h + w) * 4)
    else:
        grid = (n_pre + c,)
        if n_pre:
            # Prologue steps see the mask channels c-4..c-1, then 0..c-1.
            x_spec = pl.BlockSpec(
                (1, h, w), lambda i, sel: ((i + (c - n_pre)) % c, 0, 0))
            # Output block 0 is only actually written at step n_pre.
            o_spec = pl.BlockSpec(
                (1, out_r, out_c), lambda i, sel: (jnp.maximum(i - n_pre, 0), 0, 0))
        else:
            x_spec = pl.BlockSpec((1, h, w), lambda i, sel: (i, 0, 0))
            o_spec = pl.BlockSpec((1, out_r, out_c), lambda i, sel: (i, 0, 0))
        scratch = []
        if do_score:
            scratch += [pltpu.VMEM((KPAD, h), jnp.float32),   # row-window indicator
                        pltpu.VMEM((KPAD, w), jnp.float32)]   # weighted partial scores
        scratch += [pltpu.VMEM((out_r, h), mm_dtype),         # Sy (persists)
                    pltpu.VMEM((w, out_c), mm_dtype)]         # Sx (persists)
        est = (2 * (h * w * itemsize + out_r * out_c * itemsize)
               + (out_r * h + w * out_c) * mm_size
               + (KPAD * (h + w) * 4 if do_score else 0))

    grid_spec = pltpu.PrefetchScalarGridSpec(
        num_scalar_prefetch=1,
        grid=grid,
        in_specs=[
            pl.BlockSpec((out_r, 1), lambda i, sel: (0, 0)),   # rel_r (grid-invariant)
            pl.BlockSpec((1, out_c), lambda i, sel: (0, 0)),   # rel_c (grid-invariant)
            x_spec,
        ],
        out_specs=o_spec,
        scratch_shapes=scratch,
    )

    call = pl.pallas_call(
        kernel,
        out_shape=jax.ShapeDtypeStruct((c, out_r, out_c), dtype),
        grid_spec=grid_spec,
        compiler_params=pltpu.CompilerParams(
            # Selector scratch written at step n_pre is read by all later steps,
            # so the single grid axis must stay a sequential loop.
            dimension_semantics=("arbitrary",),
            vmem_limit_bytes=_vmem_limit_bytes(est),
        ),
    )

    @jax.jit
    def run(sel, rel_r, rel_c, x):
        return call(sel, rel_r, rel_c, x)[:, :out, :out]

    return run


# ----------------------------------------------------------------------------
# Host-side module mirroring the PyTorch ResizeCrop forward semantics.
# ----------------------------------------------------------------------------
class ResizeCrop:
    def __init__(self, p, input_size, weights=WEIGHTS):
        self.p = float(p)
        self.input_size = int(input_size)
        self.w = tuple(float(v) for v in weights)
        self._compiled = {}
        self.last = None   # record of the random decisions (for testing)

    def _fn(self, c, h, w, dtype):
        key = (c, h, w, jnp.dtype(dtype).name)
        if key not in self._compiled:
            self._compiled[key] = _build_resize_crop(
                c, h, w, dtype, self.input_size, self.w)
        return self._compiled[key]

    def __call__(self, tensor):
        c, h, w = tensor.shape
        out = self.input_size

        try_cnt = 0
        crop_h, crop_w = h, w
        init_r = init_c = 0
        cand_r = [0] * KMAX
        cand_c = [0] * KMAX

        if random.random() > self.p:
            assert c == 11
            crop_size = random.randint(int(out / 1.15), int(out / 0.85))
            crop_h = crop_w = crop_size
            # Mirror the module's draws exactly: x0 is drawn over dim-1 and
            # used as the *column* offset, y0 over dim-2 and used for *rows*.
            # TODO(synk): for non-square inputs with h != w the original can
            # index past the image edge; we mirror it unclamped.
            init_c = random.randint(0, h - crop_size)            # bst_x0
            init_r = random.randint(0, w - crop_size)            # bst_y0
            try_cnt = random.randint(1, 10)
            for k in range(try_cnt):
                cand_c[k] = random.randint(0, h - crop_size)     # x0 -> columns
                cand_r[k] = random.randint(0, w - crop_size)     # y0 -> rows

        sub = _sublane(tensor.dtype)
        out_r = _round_up(max(out, sub), sub)
        out_c_pad = _round_up(max(out, 128), 128)
        rel_r = _nearest_src(crop_h, out, out_r).reshape(out_r, 1)
        rel_c = _nearest_src(crop_w, out, out_c_pad).reshape(1, out_c_pad)

        sel = np.zeros((_SEL_LEN,), np.int32)
        sel[0] = try_cnt
        sel[1], sel[2] = init_r, init_c
        sel[3], sel[4] = crop_h, crop_w
        sel[5:5 + KMAX] = cand_r
        sel[5 + KMAX:5 + 2 * KMAX] = cand_c

        self.last = dict(try_cnt=try_cnt, crop_h=crop_h, crop_w=crop_w,
                         init_r=init_r, init_c=init_c,
                         cand_r=list(cand_r), cand_c=list(cand_c),
                         rel_r=np.array(rel_r[:out, 0]),
                         rel_c=np.array(rel_c[0, :out]))

        fn = self._fn(c, h, w, tensor.dtype)
        return fn(jnp.asarray(sel), jnp.asarray(rel_r), jnp.asarray(rel_c),
                  tensor)


# ----------------------------------------------------------------------------
# Host reference: replay the recorded random decisions in numpy.
# ----------------------------------------------------------------------------
def _host_reference(xn, rec, weights):
    best_sc = -1.0
    best_r, best_c = rec["init_r"], rec["init_c"]
    if rec["try_cnt"] > 0:
        m = sum(weights[j] * xn[7 + j].astype(np.float64) for j in range(N_MASK))
        for k in range(rec["try_cnt"]):
            r0, c0 = rec["cand_r"][k], rec["cand_c"][k]
            sc = m[r0:r0 + rec["crop_h"], c0:c0 + rec["crop_w"]].sum()
            if sc > best_sc:
                best_sc, best_r, best_c = sc, r0, c0
    src_r = best_r + rec["rel_r"]
    src_c = best_c + rec["rel_c"]
    return xn[:, src_r][:, :, src_c]


if __name__ == "__main__":
    random.seed(0)

    def check(mod, x):
        y = jax.block_until_ready(mod(x))
        assert y.shape == (x.shape[0], mod.input_size, mod.input_size)
        ref = _host_reference(np.asarray(x), mod.last, mod.w)
        np.testing.assert_allclose(np.asarray(y), ref, rtol=1e-6, atol=1e-6)

    k1, k2, k3 = jax.random.split(jax.random.PRNGKey(0), 3)

    # small, crop branch: scoring + argmax + crop + resize fused in one grid step
    x_small = jax.random.uniform(k1, (11, 32, 32), dtype=jnp.float32)
    check(ResizeCrop(p=0.0, input_size=16), x_small)

    # small, no-crop branch (same compiled kernel; runtime scalars disable the crop)
    check(ResizeCrop(p=1.0, input_size=16), x_small)

    # image-only tensor (c != 11): dedicated no-mask kernel variant
    x_img = jax.random.uniform(k2, (6, 32, 32), dtype=jnp.float32)
    check(ResizeCrop(p=1.0, input_size=16), x_img)

    # larger tensor: multi-step pipeline (4 MXU scoring prologue steps + 11 resize steps)
    x_big = jax.random.uniform(k3, (11, 256, 256), dtype=jnp.float32)
    check(ResizeCrop(p=0.0, input_size=128), x_big)

    print("KERNEL_OK")
</pallas_src>

<mosaic_0001>
module attributes {stable_mosaic.version = 11 : i64} {
  func.func @kernel(%arg0: i32, %arg1: memref<25xi32, #tpu.memory_space<smem>>, %arg2: memref<16x1xi32, #tpu.memory_space<vmem>>, %arg3: memref<1x128xi32, #tpu.memory_space<vmem>>, %arg4: memref<11x32x32xf32, #tpu.memory_space<vmem>>, %arg5: memref<11x16x128xf32, #tpu.memory_space<vmem>>) attributes {dimension_semantics = [#tpu.dimension_semantics<arbitrary>], iteration_bounds = array<i64: 1>, scalar_prefetch = 1 : i64, scratch_operands = 0 : i64, tpu.core_type = #tpu.core_type<tc>, window_params = [{pipeline_mode = #tpu.pipeline_mode<synchronous>, transform_indices = @transform_0, window_bounds = array<i64: 16, 1>}, {pipeline_mode = #tpu.pipeline_mode<synchronous>, transform_indices = @transform_1, window_bounds = array<i64: 1, 128>}, {pipeline_mode = #tpu.pipeline_mode<synchronous>, transform_indices = @transform_2, window_bounds = array<i64: 11, 32, 32>}, {pipeline_mode = #tpu.pipeline_mode<synchronous>, transform_indices = @transform_3, window_bounds = array<i64: 11, 16, 128>}]} {
    %0 = tpu.iota {dimensions = array<i32: 0>} : vector<16x1xi32>
    %c0_i32 = arith.constant 0 : i32
    %1 = vector.broadcast %c0_i32 : i32 to vector<16x1xi32>
    %c0_i32_0 = arith.constant 0 : i32
    %2 = vector.broadcast %c0_i32_0 : i32 to vector<16x1xi32>
    %3 = arith.cmpi eq, %0, %2 : vector<16x1xi32>
    %c5 = arith.constant 5 : index
    %4 = memref.load %arg1[%c5] : memref<25xi32, #tpu.memory_space<smem>>
    %5 = vector.broadcast %4 : i32 to vector<16x1xi32>
    %6 = arith.select %3, %5, %1 : vector<16x1xi1>, vector<16x1xi32>
    %c1_i32 = arith.constant 1 : i32
    %7 = vector.broadcast %c1_i32 : i32 to vector<16x1xi32>
    %8 = arith.cmpi eq, %0, %7 : vector<16x1xi32>
    %c6 = arith.constant 6 : index
    %9 = memref.load %arg1[%c6] : memref<25xi32, #tpu.memory_space<smem>>
    %10 = vector.broadcast %9 : i32 to vector<16x1xi32>
    %11 = arith.select %8, %10, %6 : vector<16x1xi1>, vector<16x1xi32>
    %c2_i32 = arith.constant 2 : i32
    %12 = vector.broadcast %c2_i32 : i32 to vector<16x1xi32>
    %13 = arith.cmpi eq, %0, %12 : vector<16x1xi32>
    %c7 = arith.constant 7 : index
    %14 = memref.load %arg1[%c7] : memref<25xi32, #tpu.memory_space<smem>>
    %15 = vector.broadcast %14 : i32 to vector<16x1xi32>
    %16 = arith.select %13, %15, %11 : vector<16x1xi1>, vector<16x1xi32>
    %c3_i32 = arith.constant 3 : i32
    %17 = vector.broadcast %c3_i32 : i32 to vector<16x1xi32>
    %18 = arith.cmpi eq, %0, %17 : vector<16x1xi32>
    %c8 = arith.constant 8 : index
    %19 = memref.load %arg1[%c8] : memref<25xi32, #tpu.memory_space<smem>>
    %20 = vector.broadcast %19 : i32 to vector<16x1xi32>
    %21 = arith.select %18, %20, %16 : vector<16x1xi1>, vector<16x1xi32>
    %c4_i32 = arith.constant 4 : i32
    %22 = vector.broadcast %c4_i32 : i32 to vector<16x1xi32>
    %23 = arith.cmpi eq, %0, %22 : vector<16x1xi32>
    %c9 = arith.constant 9 : index
    %24 = memref.load %arg1[%c9] : memref<25xi32, #tpu.memory_space<smem>>
    %25 = vector.broadcast %24 : i32 to vector<16x1xi32>
    %26 = arith.select %23, %25, %21 : vector<16x1xi1>, vector<16x1xi32>
    %c5_i32 = arith.constant 5 : i32
    %27 = vector.broadcast %c5_i32 : i32 to vector<16x1xi32>
    %28 = arith.cmpi eq, %0, %27 : vector<16x1xi32>
    %c10 = arith.constant 10 : index
    %29 = memref.load %arg1[%c10] : memref<25xi32, #tpu.memory_space<smem>>
    %30 = vector.broadcast %29 : i32 to vector<16x1xi32>
    %31 = arith.select %28, %30, %26 : vector<16x1xi1>, vector<16x1xi32>
    %c6_i32 = arith.constant 6 : i32
    %32 = vector.broadcast %c6_i32 : i32 to vector<16x1xi32>
    %33 = arith.cmpi eq, %0, %32 : vector<16x1xi32>
    %c11 = arith.constant 11 : index
    %34 = memref.load %arg1[%c11] : memref<25xi32, #tpu.memory_space<smem>>
    %35 = vector.broadcast %34 : i32 to vector<16x1xi32>
    %36 = arith.select %33, %35, %31 : vector<16x1xi1>, vector<16x1xi32>
    %c7_i32 = arith.constant 7 : i32
    %37 = vector.broadcast %c7_i32 : i32 to vector<16x1xi32>
    %38 = arith.cmpi eq, %0, %37 : vector<16x1xi32>
    %c12 = arith.constant 12 : index
    %39 = memref.load %arg1[%c12] : memref<25xi32, #tpu.memory_space<smem>>
    %40 = vector.broadcast %39 : i32 to vector<16x1xi32>
    %41 = arith.select %38, %40, %36 : vector<16x1xi1>, vector<16x1xi32>
    %c8_i32 = arith.constant 8 : i32
    %42 = vector.broadcast %c8_i32 : i32 to vector<16x1xi32>
    %43 = arith.cmpi eq, %0, %42 : vector<16x1xi32>
    %c13 = arith.constant 13 : index
    %44 = memref.load %arg1[%c13] : memref<25xi32, #tpu.memory_space<smem>>
    %45 = vector.broadcast %44 : i32 to vector<16x1xi32>
    %46 = arith.select %43, %45, %41 : vector<16x1xi1>, vector<16x1xi32>
    %c9_i32 = arith.constant 9 : i32
    %47 = vector.broadcast %c9_i32 : i32 to vector<16x1xi32>
    %48 = arith.cmpi eq, %0, %47 : vector<16x1xi32>
    %c14 = arith.constant 14 : index
    %49 = memref.load %arg1[%c14] : memref<25xi32, #tpu.memory_space<smem>>
    %50 = vector.broadcast %49 : i32 to vector<16x1xi32>
    %51 = arith.select %48, %50, %46 : vector<16x1xi1>, vector<16x1xi32>
    %c3 = arith.constant 3 : index
    %52 = memref.load %arg1[%c3] : memref<25xi32, #tpu.memory_space<smem>>
    %53 = tpu.iota {dimensions = array<i32: 1>} : vector<16x32xi32>
    %54 = vector.broadcast %51 : vector<16x1xi32> to vector<16x32xi32>
    %55 = arith.cmpi sge, %53, %54 : vector<16x32xi32>
    %56 = vector.broadcast %52 : i32 to vector<16x1xi32>
    %57 = arith.addi %51, %56 : vector<16x1xi32>
    %58 = vector.broadcast %57 : vector<16x1xi32> to vector<16x32xi32>
    %59 = arith.cmpi slt, %53, %58 : vector<16x32xi32>
    %60 = arith.andi %55, %59 : vector<16x32xi1>
    %61 = arith.extui %60 : vector<16x32xi1> to vector<16x32xi32>
    %62 = arith.sitofp %61 : vector<16x32xi32> to vector<16x32xf32>
    %63 = tpu.iota {dimensions = array<i32: 0>} : vector<16x1xi32>
    %c0_i32_1 = arith.constant 0 : i32
    %64 = vector.broadcast %c0_i32_1 : i32 to vector<16x1xi32>
    %c0_i32_2 = arith.constant 0 : i32
    %65 = vector.broadcast %c0_i32_2 : i32 to vector<16x1xi32>
    %66 = arith.cmpi eq, %63, %65 : vector<16x1xi32>
    %c15 = arith.constant 15 : index
    %67 = memref.load %arg1[%c15] : memref<25xi32, #tpu.memory_space<smem>>
    %68 = vector.broadcast %67 : i32 to vector<16x1xi32>
    %69 = arith.select %66, %68, %64 : vector<16x1xi1>, vector<16x1xi32>
    %c1_i32_3 = arith.constant 1 : i32
    %70 = vector.broadcast %c1_i32_3 : i32 to vector<16x1xi32>
    %71 = arith.cmpi eq, %63, %70 : vector<16x1xi32>
    %c16 = arith.constant 16 : index
    %72 = memref.load %arg1[%c16] : memref<25xi32, #tpu.memory_space<smem>>
    %73 = vector.broadcast %72 : i32 to vector<16x1xi32>
    %74 = arith.select %71, %73, %69 : vector<16x1xi1>, vector<16x1xi32>
    %c2_i32_4 = arith.constant 2 : i32
    %75 = vector.broadcast %c2_i32_4 : i32 to vector<16x1xi32>
    %76 = arith.cmpi eq, %63, %75 : vector<16x1xi32>
    %c17 = arith.constant 17 : index
    %77 = memref.load %arg1[%c17] : memref<25xi32, #tpu.memory_space<smem>>
    %78 = vector.broadcast %77 : i32 to vector<16x1xi32>
    %79 = arith.select %76, %78, %74 : vector<16x1xi1>, vector<16x1xi32>
    %c3_i32_5 = arith.constant 3 : i32
    %80 = vector.broadcast %c3_i32_5 : i32 to vector<16x1xi32>
    %81 = arith.cmpi eq, %63, %80 : vector<16x1xi32>
    %c18 = arith.constant 18 : index
    %82 = memref.load %arg1[%c18] : memref<25xi32, #tpu.memory_space<smem>>
    %83 = vector.broadcast %82 : i32 to vector<16x1xi32>
    %84 = arith.select %81, %83, %79 : vector<16x1xi1>, vector<16x1xi32>
    %c4_i32_6 = arith.constant 4 : i32
    %85 = vector.broadcast %c4_i32_6 : i32 to vector<16x1xi32>
    %86 = arith.cmpi eq, %63, %85 : vector<16x1xi32>
    %c19 = arith.constant 19 : index
    %87 = memref.load %arg1[%c19] : memref<25xi32, #tpu.memory_space<smem>>
    %88 = vector.broadcast %87 : i32 to vector<16x1xi32>
    %89 = arith.select %86, %88, %84 : vector<16x1xi1>, vector<16x1xi32>
    %c5_i32_7 = arith.constant 5 : i32
    %90 = vector.broadcast %c5_i32_7 : i32 to vector<16x1xi32>
    %91 = arith.cmpi eq, %63, %90 : vector<16x1xi32>
    %c20 = arith.constant 20 : index
    %92 = memref.load %arg1[%c20] : memref<25xi32, #tpu.memory_space<smem>>
    %93 = vector.broadcast %92 : i32 to vector<16x1xi32>
    %94 = arith.select %91, %93, %89 : vector<16x1xi1>, vector<16x1xi32>
    %c6_i32_8 = arith.constant 6 : i32
    %95 = vector.broadcast %c6_i32_8 : i32 to vector<16x1xi32>
    %96 = arith.cmpi eq, %63, %95 : vector<16x1xi32>
    %c21 = arith.constant 21 : index
    %97 = memref.load %arg1[%c21] : memref<25xi32, #tpu.memory_space<smem>>
    %98 = vector.broadcast %97 : i32 to vector<16x1xi32>
    %99 = arith.select %96, %98, %94 : vector<16x1xi1>, vector<16x1xi32>
    %c7_i32_9 = arith.constant 7 : i32
    %100 = vector.broadcast %c7_i32_9 : i32 to vector<16x1xi32>
    %101 = arith.cmpi eq, %63, %100 : vector<16x1xi32>
    %c22 = arith.constant 22 : index
    %102 = memref.load %arg1[%c22] : memref<25xi32, #tpu.memory_space<smem>>
    %103 = vector.broadcast %102 : i32 to vector<16x1xi32>
    %104 = arith.select %101, %103, %99 : vector<16x1xi1>, vector<16x1xi32>
    %c8_i32_10 = arith.constant 8 : i32
    %105 = vector.broadcast %c8_i32_10 : i32 to vector<16x1xi32>
    %106 = arith.cmpi eq, %63, %105 : vector<16x1xi32>
    %c23 = arith.constant 23 : index
    %107 = memref.load %arg1[%c23] : memref<25xi32, #tpu.memory_space<smem>>
    %108 = vector.broadcast %107 : i32 to vector<16x1xi32>
    %109 = arith.select %106, %108, %104 : vector<16x1xi1>, vector<16x1xi32>
    %c9_i32_11 = arith.constant 9 : i32
    %110 = vector.broadcast %c9_i32_11 : i32 to vector<16x1xi32>
    %111 = arith.cmpi eq, %63, %110 : vector<16x1xi32>
    %c24 = arith.constant 24 : index
    %112 = memref.load %arg1[%c24] : memref<25xi32, #tpu.memory_space<smem>>
    %113 = vector.broadcast %112 : i32 to vector<16x1xi32>
    %114 = arith.select %111, %113, %109 : vector<16x1xi1>, vector<16x1xi32>
    %c4 = arith.constant 4 : index
    %115 = memref.load %arg1[%c4] : memref<25xi32, #tpu.memory_space<smem>>
    %116 = tpu.iota {dimensions = array<i32: 1>} : vector<16x32xi32>
    %117 = vector.broadcast %114 : vector<16x1xi32> to vector<16x32xi32>
    %118 = arith.cmpi sge, %116, %117 : vector<16x32xi32>
    %119 = vector.broadcast %115 : i32 to vector<16x1xi32>
    %120 = arith.addi %114, %119 : vector<16x1xi32>
    %121 = vector.broadcast %120 : vector<16x1xi32> to vector<16x32xi32>
    %122 = arith.cmpi slt, %116, %121 : vector<16x32xi32>
    %123 = arith.andi %118, %122 : vector<16x32xi1>
    %124 = arith.extui %123 : vector<16x32xi1> to vector<16x32xi32>
    %125 = arith.sitofp %124 : vector<16x32xi32> to vector<16x32xf32>
    %cst = arith.constant 0.000000e+00 : f32
    %126 = vector.broadcast %cst : f32 to vector<16x32xf32>
    %c7_12 = arith.constant 7 : index
    %c0 = arith.constant 0 : index
    %c0_13 = arith.constant 0 : index
    %127 = vector.load %arg4[%c7_12, %c0, %c0_13] : memref<11x32x32xf32, #tpu.memory_space<vmem>>, vector<1x32x32xf32>
    %128 = vector.shape_cast %127 : vector<1x32x32xf32> to vector<32x32xf32>
    %cst_14 = arith.constant dense<0.000000e+00> : vector<16x32xf32>
    %129 = tpu.matmul %62, %128, %cst_14 {dimension_numbers = #tpu.dot_dimension_numbers<[1], [0], [0], [1], [0, 0, 1, 1], [], []>} : vector<16x32xf32>, vector<32x32xf32>, vector<16x32xf32> -> vector<16x32xf32>
    %cst_15 = arith.constant 1.000000e+00 : f32
    %130 = vector.broadcast %cst_15 : f32 to vector<16x32xf32>
    %131 = arith.mulf %130, %129 : vector<16x32xf32>
    %132 = arith.addf %126, %131 : vector<16x32xf32>
    %c8_16 = arith.constant 8 : index
    %c0_17 = arith.constant 0 : index
    %c0_18 = arith.constant 0 : index
    %133 = vector.load %arg4[%c8_16, %c0_17, %c0_18] : memref<11x32x32xf32, #tpu.memory_space<vmem>>, vector<1x32x32xf32>
    %134 = vector.shape_cast %133 : vector<1x32x32xf32> to vector<32x32xf32>
    %cst_19 = arith.constant dense<0.000000e+00> : vector<16x32xf32>
    %135 = tpu.matmul %62, %134, %cst_19 {dimension_numbers = #tpu.dot_dimension_numbers<[1], [0], [0], [1], [0, 0, 1, 1], [], []>} : vector<16x32xf32>, vector<32x32xf32>, vector<16x32xf32> -> vector<16x32xf32>
    %cst_20 = arith.constant 9.047880e+00 : f32
    %136 = vector.broadcast %cst_20 : f32 to vector<16x32xf32>
    %137 = arith.mulf %136, %135 : vector<16x32xf32>
    %138 = arith.addf %132, %137 : vector<16x32xf32>
    %c9_21 = arith.constant 9 : index
    %c0_22 = arith.constant 0 : index
    %c0_23 = arith.constant 0 : index
    %139 = vector.load %arg4[%c9_21, %c0_22, %c0_23] : memref<11x32x32xf32, #tpu.memory_space<vmem>>, vector<1x32x32xf32>
    %140 = vector.shape_cast %139 : vector<1x32x32xf32> to vector<32x32xf32>
    %cst_24 = arith.constant dense<0.000000e+00> : vector<16x32xf32>
    %141 = tpu.matmul %62, %140, %cst_24 {dimension_numbers = #tpu.dot_dimension_numbers<[1], [0], [0], [1], [0, 0, 1, 1], [], []>} : vector<16x32xf32>, vector<32x32xf32>, vector<16x32xf32> -> vector<16x32xf32>
    %cst_25 = arith.constant 8.68207645 : f32
    %142 = vector.broadcast %cst_25 : f32 to vector<16x32xf32>
    %143 = arith.mulf %142, %141 : vector<16x32xf32>
    %144 = arith.addf %138, %143 : vector<16x32xf32>
    %c10_26 = arith.constant 10 : index
    %c0_27 = arith.constant 0 : index
    %c0_28 = arith.constant 0 : index
    %145 = vector.load %arg4[%c10_26, %c0_27, %c0_28] : memref<11x32x32xf32, #tpu.memory_space<vmem>>, vector<1x32x32xf32>
    %146 = vector.shape_cast %145 : vector<1x32x32xf32> to vector<32x32xf32>
    %cst_29 = arith.constant dense<0.000000e+00> : vector<16x32xf32>
    %147 = tpu.matmul %62, %146, %cst_29 {dimension_numbers = #tpu.dot_dimension_numbers<[1], [0], [0], [1], [0, 0, 1, 1], [], []>} : vector<16x32xf32>, vector<32x32xf32>, vector<16x32xf32> -> vector<16x32xf32>
    %cst_30 = arith.constant 12.9632273 : f32
    %148 = vector.broadcast %cst_30 : f32 to vector<16x32xf32>
    %149 = arith.mulf %148, %147 : vector<16x32xf32>
    %150 = arith.addf %144, %149 : vector<16x32xf32>
    %151 = arith.mulf %150, %125 : vector<16x32xf32>
    %cst_31 = arith.constant dense<0.000000e+00> : vector<16xf32>
    %152 = vector.multi_reduction <add>, %151, %cst_31 [1] : vector<16x32xf32> to vector<16xf32>
    %153 = vector.shape_cast %152 : vector<16xf32> to vector<16x1xf32>
    %cst_32 = arith.constant -1.000000e+00 : f32
    %154 = vector.broadcast %cst_32 : f32 to vector<1x1xf32>
    %c1 = arith.constant 1 : index
    %155 = memref.load %arg1[%c1] : memref<25xi32, #tpu.memory_space<smem>>
    %156 = vector.broadcast %155 : i32 to vector<1x1xi32>
    %c2 = arith.constant 2 : index
    %157 = memref.load %arg1[%c2] : memref<25xi32, #tpu.memory_space<smem>>
    %158 = vector.broadcast %157 : i32 to vector<1x1xi32>
    %c0_33 = arith.constant 0 : index
    %159 = memref.load %arg1[%c0_33] : memref<25xi32, #tpu.memory_space<smem>>
    %160 = vector.extract_strided_slice %153 {offsets = [0, 0], sizes = [1, 1], strides = [1, 1]} : vector<16x1xf32> to vector<1x1xf32>
    %c0_i32_34 = arith.constant 0 : i32
    %161 = arith.cmpi sgt, %159, %c0_i32_34 : i32
    %162 = arith.cmpf ogt, %160, %154 : vector<1x1xf32>
    %163 = vector.broadcast %161 : i1 to vector<1x1xi1>
    %164 = arith.andi %163, %162 : vector<1x1xi1>
    %165 = arith.select %164, %160, %154 : vector<1x1xi1>, vector<1x1xf32>
    %c5_35 = arith.constant 5 : index
    %166 = memref.load %arg1[%c5_35] : memref<25xi32, #tpu.memory_space<smem>>
    %167 = vector.broadcast %166 : i32 to vector<1x1xi32>
    %168 = arith.select %164, %167, %156 : vector<1x1xi1>, vector<1x1xi32>
    %c15_36 = arith.constant 15 : index
    %169 = memref.load %arg1[%c15_36] : memref<25xi32, #tpu.memory_space<smem>>
    %170 = vector.broadcast %169 : i32 to vector<1x1xi32>
    %171 = arith.select %164, %170, %158 : vector<1x1xi1>, vector<1x1xi32>
    %172 = vector.extract_strided_slice %153 {offsets = [1, 0], sizes = [1, 1], strides = [1, 1]} : vector<16x1xf32> to vector<1x1xf32>
    %c1_i32_37 = arith.constant 1 : i32
    %173 = arith.cmpi sgt, %159, %c1_i32_37 : i32
    %174 = arith.cmpf ogt, %172, %165 : vector<1x1xf32>
    %175 = vector.broadcast %173 : i1 to vector<1x1xi1>
    %176 = arith.andi %175, %174 : vector<1x1xi1>
    %177 = arith.select %176, %172, %165 : vector<1x1xi1>, vector<1x1xf32>
    %c6_38 = arith.constant 6 : index
    %178 = memref.load %arg1[%c6_38] : memref<25xi32, #tpu.memory_space<smem>>
    %179 = vector.broadcast %178 : i32 to vector<1x1xi32>
    %180 = arith.select %176, %179, %168 : vector<1x1xi1>, vector<1x1xi32>
    %c16_39 = arith.constant 16 : index
    %181 = memref.load %arg1[%c16_39] : memref<25xi32, #tpu.memory_space<smem>>
    %182 = vector.broadcast %181 : i32 to vector<1x1xi32>
    %183 = arith.select %176, %182, %171 : vector<1x1xi1>, vector<1x1xi32>
    %184 = vector.extract_strided_slice %153 {offsets = [2, 0], sizes = [1, 1], strides = [1, 1]} : vector<16x1xf32> to vector<1x1xf32>
    %c2_i32_40 = arith.constant 2 : i32
    %185 = arith.cmpi sgt, %159, %c2_i32_40 : i32
    %186 = arith.cmpf ogt, %184, %177 : vector<1x1xf32>
    %187 = vector.broadcast %185 : i1 to vector<1x1xi1>
    %188 = arith.andi %187, %186 : vector<1x1xi1>
    %189 = arith.select %188, %184, %177 : vector<1x1xi1>, vector<1x1xf32>
    %c7_41 = arith.constant 7 : index
    %190 = memref.load %arg1[%c7_41] : memref<25xi32, #tpu.memory_space<smem>>
    %191 = vector.broadcast %190 : i32 to vector<1x1xi32>
    %192 = arith.select %188, %191, %180 : vector<1x1xi1>, vector<1x1xi32>
    %c17_42 = arith.constant 17 : index
    %193 = memref.load %arg1[%c17_42] : memref<25xi32, #tpu.memory_space<smem>>
    %194 = vector.broadcast %193 : i32 to vector<1x1xi32>
    %195 = arith.select %188, %194, %183 : vector<1x1xi1>, vector<1x1xi32>
    %196 = vector.extract_strided_slice %153 {offsets = [3, 0], sizes = [1, 1], strides = [1, 1]} : vector<16x1xf32> to vector<1x1xf32>
    %c3_i32_43 = arith.constant 3 : i32
    %197 = arith.cmpi sgt, %159, %c3_i32_43 : i32
    %198 = arith.cmpf ogt, %196, %189 : vector<1x1xf32>
    %199 = vector.broadcast %197 : i1 to vector<1x1xi1>
    %200 = arith.andi %199, %198 : vector<1x1xi1>
    %201 = arith.select %200, %196, %189 : vector<1x1xi1>, vector<1x1xf32>
    %c8_44 = arith.constant 8 : index
    %202 = memref.load %arg1[%c8_44] : memref<25xi32, #tpu.memory_space<smem>>
    %203 = vector.broadcast %202 : i32 to vector<1x1xi32>
    %204 = arith.select %200, %203, %192 : vector<1x1xi1>, vector<1x1xi32>
    %c18_45 = arith.constant 18 : index
    %205 = memref.load %arg1[%c18_45] : memref<25xi32, #tpu.memory_space<smem>>
    %206 = vector.broadcast %205 : i32 to vector<1x1xi32>
    %207 = arith.select %200, %206, %195 : vector<1x1xi1>, vector<1x1xi32>
    %208 = vector.extract_strided_slice %153 {offsets = [4, 0], sizes = [1, 1], strides = [1, 1]} : vector<16x1xf32> to vector<1x1xf32>
    %c4_i32_46 = arith.constant 4 : i32
    %209 = arith.cmpi sgt, %159, %c4_i32_46 : i32
    %210 = arith.cmpf ogt, %208, %201 : vector<1x1xf32>
    %211 = vector.broadcast %209 : i1 to vector<1x1xi1>
    %212 = arith.andi %211, %210 : vector<1x1xi1>
    %213 = arith.select %212, %208, %201 : vector<1x1xi1>, vector<1x1xf32>
    %c9_47 = arith.constant 9 : index
    %214 = memref.load %arg1[%c9_47] : memref<25xi32, #tpu.memory_space<smem>>
    %215 = vector.broadcast %214 : i32 to vector<1x1xi32>
    %216 = arith.select %212, %215, %204 : vector<1x1xi1>, vector<1x1xi32>
    %c19_48 = arith.constant 19 : index
    %217 = memref.load %arg1[%c19_48] : memref<25xi32, #tpu.memory_space<smem>>
    %218 = vector.broadcast %217 : i32 to vector<1x1xi32>
    %219 = arith.select %212, %218, %207 : vector<1x1xi1>, vector<1x1xi32>
    %220 = vector.extract_strided_slice %153 {offsets = [5, 0], sizes = [1, 1], strides = [1, 1]} : vector<16x1xf32> to vector<1x1xf32>
    %c5_i32_49 = arith.constant 5 : i32
    %221 = arith.cmpi sgt, %159, %c5_i32_49 : i32
    %222 = arith.cmpf ogt, %220, %213 : vector<1x1xf32>
    %223 = vector.broadcast %221 : i1 to vector<1x1xi1>
    %224 = arith.andi %223, %222 : vector<1x1xi1>
    %225 = arith.select %224, %220, %213 : vector<1x1xi1>, vector<1x1xf32>
    %c10_50 = arith.constant 10 : index
    %226 = memref.load %arg1[%c10_50] : memref<25xi32, #tpu.memory_space<smem>>
    %227 = vector.broadcast %226 : i32 to vector<1x1xi32>
    %228 = arith.select %224, %227, %216 : vector<1x1xi1>, vector<1x1xi32>
    %c20_51 = arith.constant 20 : index
    %229 = memref.load %arg1[%c20_51] : memref<25xi32, #tpu.memory_space<smem>>
    %230 = vector.broadcast %229 : i32 to vector<1x1xi32>
    %231 = arith.select %224, %230, %219 : vector<1x1xi1>, vector<1x1xi32>
    %232 = vector.extract_strided_slice %153 {offsets = [6, 0], sizes = [1, 1], strides = [1, 1]} : vector<16x1xf32> to vector<1x1xf32>
    %c6_i32_52 = arith.constant 6 : i32
    %233 = arith.cmpi sgt, %159, %c6_i32_52 : i32
    %234 = arith.cmpf ogt, %232, %225 : vector<1x1xf32>
    %235 = vector.broadcast %233 : i1 to vector<1x1xi1>
    %236 = arith.andi %235, %234 : vector<1x1xi1>
    %237 = arith.select %236, %232, %225 : vector<1x1xi1>, vector<1x1xf32>
    %c11_53 = arith.constant 11 : index
    %238 = memref.load %arg1[%c11_53] : memref<25xi32, #tpu.memory_space<smem>>
    %239 = vector.broadcast %238 : i32 to vector<1x1xi32>
    %240 = arith.select %236, %239, %228 : vector<1x1xi1>, vector<1x1xi32>
    %c21_54 = arith.constant 21 : index
    %241 = memref.load %arg1[%c21_54] : memref<25xi32, #tpu.memory_space<smem>>
    %242 = vector.broadcast %241 : i32 to vector<1x1xi32>
    %243 = arith.select %236, %242, %231 : vector<1x1xi1>, vector<1x1xi32>
    %244 = vector.extract_strided_slice %153 {offsets = [7, 0], sizes = [1, 1], strides = [1, 1]} : vector<16x1xf32> to vector<1x1xf32>
    %c7_i32_55 = arith.constant 7 : i32
    %245 = arith.cmpi sgt, %159, %c7_i32_55 : i32
    %246 = arith.cmpf ogt, %244, %237 : vector<1x1xf32>
    %247 = vector.broadcast %245 : i1 to vector<1x1xi1>
    %248 = arith.andi %247, %246 : vector<1x1xi1>
    %249 = arith.select %248, %244, %237 : vector<1x1xi1>, vector<1x1xf32>
    %c12_56 = arith.constant 12 : index
    %250 = memref.load %arg1[%c12_56] : memref<25xi32, #tpu.memory_space<smem>>
    %251 = vector.broadcast %250 : i32 to vector<1x1xi32>
    %252 = arith.select %248, %251, %240 : vector<1x1xi1>, vector<1x1xi32>
    %c22_57 = arith.constant 22 : index
    %253 = memref.load %arg1[%c22_57] : memref<25xi32, #tpu.memory_space<smem>>
    %254 = vector.broadcast %253 : i32 to vector<1x1xi32>
    %255 = arith.select %248, %254, %243 : vector<1x1xi1>, vector<1x1xi32>
    %256 = vector.extract_strided_slice %153 {offsets = [8, 0], sizes = [1, 1], strides = [1, 1]} : vector<16x1xf32> to vector<1x1xf32>
    %c8_i32_58 = arith.constant 8 : i32
    %257 = arith.cmpi sgt, %159, %c8_i32_58 : i32
    %258 = arith.cmpf ogt, %256, %249 : vector<1x1xf32>
    %259 = vector.broadcast %257 : i1 to vector<1x1xi1>
    %260 = arith.andi %259, %258 : vector<1x1xi1>
    %261 = arith.select %260, %256, %249 : vector<1x1xi1>, vector<1x1xf32>
    %c13_59 = arith.constant 13 : index
    %262 = memref.load %arg1[%c13_59] : memref<25xi32, #tpu.memory_space<smem>>
    %263 = vector.broadcast %262 : i32 to vector<1x1xi32>
    %264 = arith.select %260, %263, %252 : vector<1x1xi1>, vector<1x1xi32>
    %c23_60 = arith.constant 23 : index
    %265 = memref.load %arg1[%c23_60] : memref<25xi32, #tpu.memory_space<smem>>
    %266 = vector.broadcast %265 : i32 to vector<1x1xi32>
    %267 = arith.select %260, %266, %255 : vector<1x1xi1>, vector<1x1xi32>
    %268 = vector.extract_strided_slice %153 {offsets = [9, 0], sizes = [1, 1], strides = [1, 1]} : vector<16x1xf32> to vector<1x1xf32>
    %c9_i32_61 = arith.constant 9 : i32
    %269 = arith.cmpi sgt, %159, %c9_i32_61 : i32
    %270 = arith.cmpf ogt, %268, %261 : vector<1x1xf32>
    %271 = vector.broadcast %269 : i1 to vector<1x1xi1>
    %272 = arith.andi %271, %270 : vector<1x1xi1>
    %c14_62 = arith.constant 14 : index
    %273 = memref.load %arg1[%c14_62] : memref<25xi32, #tpu.memory_space<smem>>
    %274 = vector.broadcast %273 : i32 to vector<1x1xi32>
    %275 = arith.select %272, %274, %264 : vector<1x1xi1>, vector<1x1xi32>
    %c24_63 = arith.constant 24 : index
    %276 = memref.load %arg1[%c24_63] : memref<25xi32, #tpu.memory_space<smem>>
    %277 = vector.broadcast %276 : i32 to vector<1x1xi32>
    %278 = arith.select %272, %277, %267 : vector<1x1xi1>, vector<1x1xi32>
    %c0_64 = arith.constant 0 : index
    %c0_65 = arith.constant 0 : index
    %279 = vector.load %arg2[%c0_64, %c0_65] : memref<16x1xi32, #tpu.memory_space<vmem>>, vector<16x1xi32>
    %280 = tpu.iota {dimensions = array<i32: 1>} : vector<16x32xi32>
    %281 = vector.broadcast %275 : vector<1x1xi32> to vector<16x1xi32>
    %282 = arith.addi %281, %279 : vector<16x1xi32>
    %283 = vector.broadcast %282 : vector<16x1xi32> to vector<16x32xi32>
    %284 = arith.cmpi eq, %280, %283 : vector<16x32xi32>
    %285 = arith.extui %284 : vector<16x32xi1> to vector<16x32xi32>
    %286 = arith.sitofp %285 : vector<16x32xi32> to vector<16x32xf32>
    %c0_66 = arith.constant 0 : index
    %c0_67 = arith.constant 0 : index
    %287 = vector.load %arg3[%c0_66, %c0_67] : memref<1x128xi32, #tpu.memory_space<vmem>>, vector<1x128xi32>
    %288 = tpu.iota {dimensions = array<i32: 0>} : vector<32x128xi32>
    %289 = vector.broadcast %278 : vector<1x1xi32> to vector<1x128xi32>
    %290 = arith.addi %289, %287 : vector<1x128xi32>
    %291 = vector.broadcast %290 : vector<1x128xi32> to vector<32x128xi32>
    %292 = arith.cmpi eq, %288, %291 : vector<32x128xi32>
    %293 = arith.extui %292 : vector<32x128xi1> to vector<32x128xi32>
    %294 = arith.sitofp %293 : vector<32x128xi32> to vector<32x128xf32>
    %c0_68 = arith.constant 0 : index
    %c0_69 = arith.constant 0 : index
    %c0_70 = arith.constant 0 : index
    %295 = vector.load %arg4[%c0_68, %c0_69, %c0_70] : memref<11x32x32xf32, #tpu.memory_space<vmem>>, vector<1x32x32xf32>
    %296 = vector.shape_cast %295 : vector<1x32x32xf32> to vector<32x32xf32>
    %cst_71 = arith.constant dense<0.000000e+00> : vector<16x32xf32>
    %297 = tpu.matmul %286, %296, %cst_71 {dimension_numbers = #tpu.dot_dimension_numbers<[1], [0], [0], [1], [0, 0, 1, 1], [], []>} : vector<16x32xf32>, vector<32x32xf32>, vector<16x32xf32> -> vector<16x32xf32>
    %cst_72 = arith.constant dense<0.000000e+00> : vector<16x128xf32>
    %298 = tpu.matmul %297, %294, %cst_72 {dimension_numbers = #tpu.dot_dimension_numbers<[1], [0], [0], [1], [0, 0, 1, 1], [], []>} : vector<16x32xf32>, vector<32x128xf32>, vector<16x128xf32> -> vector<16x128xf32>
    %c0_73 = arith.constant 0 : index
    %c0_74 = arith.constant 0 : index
    %c0_75 = arith.constant 0 : index
    %299 = vector.load %arg5[%c0_73, %c0_74, %c0_75] : memref<11x16x128xf32, #tpu.memory_space<vmem>>, vector<1x16x128xf32>
    %300 = vector.shape_cast %299 : vector<1x16x128xf32> to vector<16x128xf32>
    %301 = vector.shape_cast %298 : vector<16x128xf32> to vector<1x16x128xf32>
    tpu.vector_store %arg5[%c0_73, %c0_74, %c0_75], %301 {strides = array<i32>} : memref<11x16x128xf32, #tpu.memory_space<vmem>>, vector<1x16x128xf32>,
    %c1_76 = arith.constant 1 : index
    %c0_77 = arith.constant 0 : index
    %c0_78 = arith.constant 0 : index
    %302 = vector.load %arg4[%c1_76, %c0_77, %c0_78] : memref<11x32x32xf32, #tpu.memory_space<vmem>>, vector<1x32x32xf32>
    %303 = vector.shape_cast %302 : vector<1x32x32xf32> to vector<32x32xf32>
    %cst_79 = arith.constant dense<0.000000e+00> : vector<16x32xf32>
    %304 = tpu.matmul %286, %303, %cst_79 {dimension_numbers = #tpu.dot_dimension_numbers<[1], [0], [0], [1], [0, 0, 1, 1], [], []>} : vector<16x32xf32>, vector<32x32xf32>, vector<16x32xf32> -> vector<16x32xf32>
    %cst_80 = arith.constant dense<0.000000e+00> : vector<16x128xf32>
    %305 = tpu.matmul %304, %294, %cst_80 {dimension_numbers = #tpu.dot_dimension_numbers<[1], [0], [0], [1], [0, 0, 1, 1], [], []>} : vector<16x32xf32>, vector<32x128xf32>, vector<16x128xf32> -> vector<16x128xf32>
    %c1_81 = arith.constant 1 : index
    %c0_82 = arith.constant 0 : index
    %c0_83 = arith.constant 0 : index
    %306 = vector.load %arg5[%c1_81, %c0_82, %c0_83] : memref<11x16x128xf32, #tpu.memory_space<vmem>>, vector<1x16x128xf32>
    %307 = vector.shape_cast %306 : vector<1x16x128xf32> to vector<16x128xf32>
    %308 = vector.shape_cast %305 : vector<16x128xf32> to vector<1x16x128xf32>
    tpu.vector_store %arg5[%c1_81, %c0_82, %c0_83], %308 {strides = array<i32>} : memref<11x16x128xf32, #tpu.memory_space<vmem>>, vector<1x16x128xf32>,
    %c2_84 = arith.constant 2 : index
    %c0_85 = arith.constant 0 : index
    %c0_86 = arith.constant 0 : index
    %309 = vector.load %arg4[%c2_84, %c0_85, %c0_86] : memref<11x32x32xf32, #tpu.memory_space<vmem>>, vector<1x32x32xf32>
    %310 = vector.shape_cast %309 : vector<1x32x32xf32> to vector<32x32xf32>
    %cst_87 = arith.constant dense<0.000000e+00> : vector<16x32xf32>
    %311 = tpu.matmul %286, %310, %cst_87 {dimension_numbers = #tpu.dot_dimension_numbers<[1], [0], [0], [1], [0, 0, 1, 1], [], []>} : vector<16x32xf32>, vector<32x32xf32>, vector<16x32xf32> -> vector<16x32xf32>
    %cst_88 = arith.constant dense<0.000000e+00> : vector<16x128xf32>
    %312 = tpu.matmul %311, %294, %cst_88 {dimension_numbers = #tpu.dot_dimension_numbers<[1], [0], [0], [1], [0, 0, 1, 1], [], []>} : vector<16x32xf32>, vector<32x128xf32>, vector<16x128xf32> -> vector<16x128xf32>
    %c2_89 = arith.constant 2 : index
    %c0_90 = arith.constant 0 : index
    %c0_91 = arith.constant 0 : index
    %313 = vector.load %arg5[%c2_89, %c0_90, %c0_91] : memref<11x16x128xf32, #tpu.memory_space<vmem>>, vector<1x16x128xf32>
    %314 = vector.shape_cast %313 : vector<1x16x128xf32> to vector<16x128xf32>
    %315 = vector.shape_cast %312 : vector<16x128xf32> to vector<1x16x128xf32>
    tpu.vector_store %arg5[%c2_89, %c0_90, %c0_91], %315 {strides = array<i32>} : memref<11x16x128xf32, #tpu.memory_space<vmem>>, vector<1x16x128xf32>,
    %c3_92 = arith.constant 3 : index
    %c0_93 = arith.constant 0 : index
    %c0_94 = arith.constant 0 : index
    %316 = vector.load %arg4[%c3_92, %c0_93, %c0_94] : memref<11x32x32xf32, #tpu.memory_space<vmem>>, vector<1x32x32xf32>
    %317 = vector.shape_cast %316 : vector<1x32x32xf32> to vector<32x32xf32>
    %cst_95 = arith.constant dense<0.000000e+00> : vector<16x32xf32>
    %318 = tpu.matmul %286, %317, %cst_95 {dimension_numbers = #tpu.dot_dimension_numbers<[1], [0], [0], [1], [0, 0, 1, 1], [], []>} : vector<16x32xf32>, vector<32x32xf32>, vector<16x32xf32> -> vector<16x32xf32>
    %cst_96 = arith.constant dense<0.000000e+00> : vector<16x128xf32>
    %319 = tpu.matmul %318, %294, %cst_96 {dimension_numbers = #tpu.dot_dimension_numbers<[1], [0], [0], [1], [0, 0, 1, 1], [], []>} : vector<16x32xf32>, vector<32x128xf32>, vector<16x128xf32> -> vector<16x128xf32>
    %c3_97 = arith.constant 3 : index
    %c0_98 = arith.constant 0 : index
    %c0_99 = arith.constant 0 : index
    %320 = vector.load %arg5[%c3_97, %c0_98, %c0_99] : memref<11x16x128xf32, #tpu.memory_space<vmem>>, vector<1x16x128xf32>
    %321 = vector.shape_cast %320 : vector<1x16x128xf32> to vector<16x128xf32>
    %322 = vector.shape_cast %319 : vector<16x128xf32> to vector<1x16x128xf32>
    tpu.vector_store %arg5[%c3_97, %c0_98, %c0_99], %322 {strides = array<i32>} : memref<11x16x128xf32, #tpu.memory_space<vmem>>, vector<1x16x128xf32>,
    %c4_100 = arith.constant 4 : index
    %c0_101 = arith.constant 0 : index
    %c0_102 = arith.constant 0 : index
    %323 = vector.load %arg4[%c4_100, %c0_101, %c0_102] : memref<11x32x32xf32, #tpu.memory_space<vmem>>, vector<1x32x32xf32>
    %324 = vector.shape_cast %323 : vector<1x32x32xf32> to vector<32x32xf32>
    %cst_103 = arith.constant dense<0.000000e+00> : vector<16x32xf32>
    %325 = tpu.matmul %286, %324, %cst_103 {dimension_numbers = #tpu.dot_dimension_numbers<[1], [0], [0], [1], [0, 0, 1, 1], [], []>} : vector<16x32xf32>, vector<32x32xf32>, vector<16x32xf32> -> vector<16x32xf32>
    %cst_104 = arith.constant dense<0.000000e+00> : vector<16x128xf32>
    %326 = tpu.matmul %325, %294, %cst_104 {dimension_numbers = #tpu.dot_dimension_numbers<[1], [0], [0], [1], [0, 0, 1, 1], [], []>} : vector<16x32xf32>, vector<32x128xf32>, vector<16x128xf32> -> vector<16x128xf32>
    %c4_105 = arith.constant 4 : index
    %c0_106 = arith.constant 0 : index
    %c0_107 = arith.constant 0 : index
    %327 = vector.load %arg5[%c4_105, %c0_106, %c0_107] : memref<11x16x128xf32, #tpu.memory_space<vmem>>, vector<1x16x128xf32>
    %328 = vector.shape_cast %327 : vector<1x16x128xf32> to vector<16x128xf32>
    %329 = vector.shape_cast %326 : vector<16x128xf32> to vector<1x16x128xf32>
    tpu.vector_store %arg5[%c4_105, %c0_106, %c0_107], %329 {strides = array<i32>} : memref<11x16x128xf32, #tpu.memory_space<vmem>>, vector<1x16x128xf32>,
    %c5_108 = arith.constant 5 : index
    %c0_109 = arith.constant 0 : index
    %c0_110 = arith.constant 0 : index
    %330 = vector.load %arg4[%c5_108, %c0_109, %c0_110] : memref<11x32x32xf32, #tpu.memory_space<vmem>>, vector<1x32x32xf32>
    %331 = vector.shape_cast %330 : vector<1x32x32xf32> to vector<32x32xf32>
    %cst_111 = arith.constant dense<0.000000e+00> : vector<16x32xf32>
    %332 = tpu.matmul %286, %331, %cst_111 {dimension_numbers = #tpu.dot_dimension_numbers<[1], [0], [0], [1], [0, 0, 1, 1], [], []>} : vector<16x32xf32>, vector<32x32xf32>, vector<16x32xf32> -> vector<16x32xf32>
    %cst_112 = arith.constant dense<0.000000e+00> : vector<16x128xf32>
    %333 = tpu.matmul %332, %294, %cst_112 {dimension_numbers = #tpu.dot_dimension_numbers<[1], [0], [0], [1], [0, 0, 1, 1], [], []>} : vector<16x32xf32>, vector<32x128xf32>, vector<16x128xf32> -> vector<16x128xf32>
    %c5_113 = arith.constant 5 : index
    %c0_114 = arith.constant 0 : index
    %c0_115 = arith.constant 0 : index
    %334 = vector.load %arg5[%c5_113, %c0_114, %c0_115] : memref<11x16x128xf32, #tpu.memory_space<vmem>>, vector<1x16x128xf32>
    %335 = vector.shape_cast %334 : vector<1x16x128xf32> to vector<16x128xf32>
    %336 = vector.shape_cast %333 : vector<16x128xf32> to vector<1x16x128xf32>
    tpu.vector_store %arg5[%c5_113, %c0_114, %c0_115], %336 {strides = array<i32>} : memref<11x16x128xf32, #tpu.memory_space<vmem>>, vector<1x16x128xf32>,
    %c6_116 = arith.constant 6 : index
    %c0_117 = arith.constant 0 : index
    %c0_118 = arith.constant 0 : index
    %337 = vector.load %arg4[%c6_116, %c0_117, %c0_118] : memref<11x32x32xf32, #tpu.memory_space<vmem>>, vector<1x32x32xf32>
    %338 = vector.shape_cast %337 : vector<1x32x32xf32> to vector<32x32xf32>
    %cst_119 = arith.constant dense<0.000000e+00> : vector<16x32xf32>
    %339 = tpu.matmul %286, %338, %cst_119 {dimension_numbers = #tpu.dot_dimension_numbers<[1], [0], [0], [1], [0, 0, 1, 1], [], []>} : vector<16x32xf32>, vector<32x32xf32>, vector<16x32xf32> -> vector<16x32xf32>
    %cst_120 = arith.constant dense<0.000000e+00> : vector<16x128xf32>
    %340 = tpu.matmul %339, %294, %cst_120 {dimension_numbers = #tpu.dot_dimension_numbers<[1], [0], [0], [1], [0, 0, 1, 1], [], []>} : vector<16x32xf32>, vector<32x128xf32>, vector<16x128xf32> -> vector<16x128xf32>
    %c6_121 = arith.constant 6 : index
    %c0_122 = arith.constant 0 : index
    %c0_123 = arith.constant 0 : index
    %341 = vector.load %arg5[%c6_121, %c0_122, %c0_123] : memref<11x16x128xf32, #tpu.memory_space<vmem>>, vector<1x16x128xf32>
    %342 = vector.shape_cast %341 : vector<1x16x128xf32> to vector<16x128xf32>
    %343 = vector.shape_cast %340 : vector<16x128xf32> to vector<1x16x128xf32>
    tpu.vector_store %arg5[%c6_121, %c0_122, %c0_123], %343 {strides = array<i32>} : memref<11x16x128xf32, #tpu.memory_space<vmem>>, vector<1x16x128xf32>,
    %c7_124 = arith.constant 7 : index
    %c0_125 = arith.constant 0 : index
    %c0_126 = arith.constant 0 : index
    %344 = vector.load %arg4[%c7_124, %c0_125, %c0_126] : memref<11x32x32xf32, #tpu.memory_space<vmem>>, vector<1x32x32xf32>
    %345 = vector.shape_cast %344 : vector<1x32x32xf32> to vector<32x32xf32>
    %cst_127 = arith.constant dense<0.000000e+00> : vector<16x32xf32>
    %346 = tpu.matmul %286, %345, %cst_127 {dimension_numbers = #tpu.dot_dimension_numbers<[1], [0], [0], [1], [0, 0, 1, 1], [], []>} : vector<16x32xf32>, vector<32x32xf32>, vector<16x32xf32> -> vector<16x32xf32>
    %cst_128 = arith.constant dense<0.000000e+00> : vector<16x128xf32>
    %347 = tpu.matmul %346, %294, %cst_128 {dimension_numbers = #tpu.dot_dimension_numbers<[1], [0], [0], [1], [0, 0, 1, 1], [], []>} : vector<16x32xf32>, vector<32x128xf32>, vector<16x128xf32> -> vector<16x128xf32>
    %c7_129 = arith.constant 7 : index
    %c0_130 = arith.constant 0 : index
    %c0_131 = arith.constant 0 : index
    %348 = vector.load %arg5[%c7_129, %c0_130, %c0_131] : memref<11x16x128xf32, #tpu.memory_space<vmem>>, vector<1x16x128xf32>
    %349 = vector.shape_cast %348 : vector<1x16x128xf32> to vector<16x128xf32>
    %350 = vector.shape_cast %347 : vector<16x128xf32> to vector<1x16x128xf32>
    tpu.vector_store %arg5[%c7_129, %c0_130, %c0_131], %350 {strides = array<i32>} : memref<11x16x128xf32, #tpu.memory_space<vmem>>, vector<1x16x128xf32>,
    %c8_132 = arith.constant 8 : index
    %c0_133 = arith.constant 0 : index
    %c0_134 = arith.constant 0 : index
    %351 = vector.load %arg4[%c8_132, %c0_133, %c0_134] : memref<11x32x32xf32, #tpu.memory_space<vmem>>, vector<1x32x32xf32>
    %352 = vector.shape_cast %351 : vector<1x32x32xf32> to vector<32x32xf32>
    %cst_135 = arith.constant dense<0.000000e+00> : vector<16x32xf32>
    %353 = tpu.matmul %286, %352, %cst_135 {dimension_numbers = #tpu.dot_dimension_numbers<[1], [0], [0], [1], [0, 0, 1, 1], [], []>} : vector<16x32xf32>, vector<32x32xf32>, vector<16x32xf32> -> vector<16x32xf32>
    %cst_136 = arith.constant dense<0.000000e+00> : vector<16x128xf32>
    %354 = tpu.matmul %353, %294, %cst_136 {dimension_numbers = #tpu.dot_dimension_numbers<[1], [0], [0], [1], [0, 0, 1, 1], [], []>} : vector<16x32xf32>, vector<32x128xf32>, vector<16x128xf32> -> vector<16x128xf32>
    %c8_137 = arith.constant 8 : index
    %c0_138 = arith.constant 0 : index
    %c0_139 = arith.constant 0 : index
    %355 = vector.load %arg5[%c8_137, %c0_138, %c0_139] : memref<11x16x128xf32, #tpu.memory_space<vmem>>, vector<1x16x128xf32>
    %356 = vector.shape_cast %355 : vector<1x16x128xf32> to vector<16x128xf32>
    %357 = vector.shape_cast %354 : vector<16x128xf32> to vector<1x16x128xf32>
    tpu.vector_store %arg5[%c8_137, %c0_138, %c0_139], %357 {strides = array<i32>} : memref<11x16x128xf32, #tpu.memory_space<vmem>>, vector<1x16x128xf32>,
    %c9_140 = arith.constant 9 : index
    %c0_141 = arith.constant 0 : index
    %c0_142 = arith.constant 0 : index
    %358 = vector.load %arg4[%c9_140, %c0_141, %c0_142] : memref<11x32x32xf32, #tpu.memory_space<vmem>>, vector<1x32x32xf32>
    %359 = vector.shape_cast %358 : vector<1x32x32xf32> to vector<32x32xf32>
    %cst_143 = arith.constant dense<0.000000e+00> : vector<16x32xf32>
    %360 = tpu.matmul %286, %359, %cst_143 {dimension_numbers = #tpu.dot_dimension_numbers<[1], [0], [0], [1], [0, 0, 1, 1], [], []>} : vector<16x32xf32>, vector<32x32xf32>, vector<16x32xf32> -> vector<16x32xf32>
    %cst_144 = arith.constant dense<0.000000e+00> : vector<16x128xf32>
    %361 = tpu.matmul %360, %294, %cst_144 {dimension_numbers = #tpu.dot_dimension_numbers<[1], [0], [0], [1], [0, 0, 1, 1], [], []>} : vector<16x32xf32>, vector<32x128xf32>, vector<16x128xf32> -> vector<16x128xf32>
    %c9_145 = arith.constant 9 : index
    %c0_146 = arith.constant 0 : index
    %c0_147 = arith.constant 0 : index
    %362 = vector.load %arg5[%c9_145, %c0_146, %c0_147] : memref<11x16x128xf32, #tpu.memory_space<vmem>>, vector<1x16x128xf32>
    %363 = vector.shape_cast %362 : vector<1x16x128xf32> to vector<16x128xf32>
    %364 = vector.shape_cast %361 : vector<16x128xf32> to vector<1x16x128xf32>
    tpu.vector_store %arg5[%c9_145, %c0_146, %c0_147], %364 {strides = array<i32>} : memref<11x16x128xf32, #tpu.memory_space<vmem>>, vector<1x16x128xf32>,
    %c10_148 = arith.constant 10 : index
    %c0_149 = arith.constant 0 : index
    %c0_150 = arith.constant 0 : index
    %365 = vector.load %arg4[%c10_148, %c0_149, %c0_150] : memref<11x32x32xf32, #tpu.memory_space<vmem>>, vector<1x32x32xf32>
    %366 = vector.shape_cast %365 : vector<1x32x32xf32> to vector<32x32xf32>
    %cst_151 = arith.constant dense<0.000000e+00> : vector<16x32xf32>
    %367 = tpu.matmul %286, %366, %cst_151 {dimension_numbers = #tpu.dot_dimension_numbers<[1], [0], [0], [1], [0, 0, 1, 1], [], []>} : vector<16x32xf32>, vector<32x32xf32>, vector<16x32xf32> -> vector<16x32xf32>
    %cst_152 = arith.constant dense<0.000000e+00> : vector<16x128xf32>
    %368 = tpu.matmul %367, %294, %cst_152 {dimension_numbers = #tpu.dot_dimension_numbers<[1], [0], [0], [1], [0, 0, 1, 1], [], []>} : vector<16x32xf32>, vector<32x128xf32>, vector<16x128xf32> -> vector<16x128xf32>
    %c10_153 = arith.constant 10 : index
    %c0_154 = arith.constant 0 : index
    %c0_155 = arith.constant 0 : index
    %369 = vector.load %arg5[%c10_153, %c0_154, %c0_155] : memref<11x16x128xf32, #tpu.memory_space<vmem>>, vector<1x16x128xf32>
    %370 = vector.shape_cast %369 : vector<1x16x128xf32> to vector<16x128xf32>
    %371 = vector.shape_cast %368 : vector<16x128xf32> to vector<1x16x128xf32>
    tpu.vector_store %arg5[%c10_153, %c0_154, %c0_155], %371 {strides = array<i32>} : memref<11x16x128xf32, #tpu.memory_space<vmem>>, vector<1x16x128xf32>,
    return
  }
  func.func @transform_0(%arg0: i32, %arg1: memref<25xi32, #tpu.memory_space<smem>>) -> (i32, i32) {
    %c0_i32 = arith.constant 0 : i32
    %c0_i32_0 = arith.constant 0 : i32
    %c0_i32_1 = arith.constant 0 : i32
    return %c0_i32, %c0_i32_0 : i32, i32
  }
  func.func @transform_1(%arg0: i32, %arg1: memref<25xi32, #tpu.memory_space<smem>>) -> (i32, i32) {
    %c0_i32 = arith.constant 0 : i32
    %c0_i32_0 = arith.constant 0 : i32
    %c0_i32_1 = arith.constant 0 : i32
    return %c0_i32, %c0_i32_0 : i32, i32
  }
  func.func @transform_2(%arg0: i32, %arg1: memref<25xi32, #tpu.memory_space<smem>>) -> (i32, i32, i32) {
    %c0_i32 = arith.constant 0 : i32
    %c0_i32_0 = arith.constant 0 : i32
    %c0_i32_1 = arith.constant 0 : i32
    %c0_i32_2 = arith.constant 0 : i32
    return %c0_i32, %c0_i32_0, %c0_i32_1 : i32, i32, i32
  }
  func.func @transform_3(%arg0: i32, %arg1: memref<25xi32, #tpu.memory_space<smem>>) -> (i32, i32, i32) {
    %c0_i32 = arith.constant 0 : i32
    %c0_i32_0 = arith.constant 0 : i32
    %c0_i32_1 = arith.constant 0 : i32
    %c0_i32_2 = arith.constant 0 : i32
    return %c0_i32, %c0_i32_0, %c0_i32_1 : i32, i32, i32
  }
}

</mosaic_0001>

<llo_original>
// kernel: run.1
$region0: #{run.1}
  #allocation0 [shape = 'u32[]', space=smem, size = 0x4, offset = 0x4, fixed_abs, tag = 'smem constant byte address 0x4 - core index']
  #allocation1 [shape = 'u32[144,128]{1,0:T(1,128)}', space=vmem, size = 0x12000, scoped, tag = 'internal scratch']
  #allocation2 [shape = 's32[1]{0}', space=sflag, size = 0x4, scoped, tag = 'scoped memory for run.1']
  #allocation3 [shape = 'u8[512]{0}', space=smem, size = 0x200, scoped, tag = 'prefetched SMEM operand 0']
  %s0 = inlined_call_operand.vmem [shape: s32[25], index: 0, kind: input, shape index: {}]
  %s1 = inlined_call_operand.vmem [shape: s32[16,1], index: 1, kind: input, shape index: {}]
  %s2 = inlined_call_operand.vmem [shape: s32[1,128], index: 2, kind: input, shape index: {}]
  %s3 = inlined_call_operand.hbm [shape: f32[11,32,32], index: 3, kind: input, shape index: {}]
  %s4 = inlined_call_operand.hbm [shape: f32[11,16,128], index: 4, kind: output, shape index: {}]
  %s5 = sld [smem:[#allocation0]]
  $region26: #{run.1} parent=0
    _
  %s7 = ssub.s32 1, %s5
  %s8 = scalar_select 0, %s7, %s5
  %s9 = sshll.u32 %s0, 4
  %s10 = int_to_ptr.vmem [resolvable:$true] %s9
  %12 = dma.vmem_to_smem %s10, 16, [#allocation3], [#allocation2]
  %13 = dma.done [#allocation2], 16
  %14 = sfence
  $region1: #{run.1} parent=0
    #allocation4 [shape = 'u8[180224]{0}', space=vmem, size = 0x2c000, scoped, tag = 'input window, operand 3, single buffered']
    #allocation5 [shape = 's32[1]{0}', space=sflag, size = 0x4, scoped, tag = 'scoped memory for run.1']
    #allocation6 [shape = 's32[1]{0}', space=sflag, size = 0x4, scoped, tag = 'scoped memory for run.1']
    #allocation7 [shape = 'u8[90112]{0}', space=vmem, size = 0x16000, scoped, tag = 'output window, operand 0, single buffered']
    %15 = vsyncpa [#allocation5], 0
    %16 = vsyncpa [#allocation6], 0
    // Predicated region
    $region2: #{run.1} parent=1 // pred_check
      _
    $region3: #{run.1} parent=1 // pred_check_branch
      %18 = sbr.rel (0) target = $region5
    $region4: #{run.1} parent=1 // pred_region
      _
    $region5: #{run.1} parent=1 // pred_fallthru
      _
    // Predicated region
    $region6: #{run.1} parent=1 // pred_check
      _
    $region7: #{run.1} parent=1 // pred_check_branch
      %20 = sbr.rel (0) target = $region9
    $region8: #{run.1} parent=1 // pred_region
      _
    $region9: #{run.1} parent=1 // pred_fallthru
      _
    // Predicated region
    $region10: #{run.1} parent=1 // pred_check
      _
    $region11: #{run.1} parent=1 // pred_check_branch
      %22 = sbr.rel (0) target = $region13
    $region12: #{run.1} parent=1 // pred_region
      %s24 = ssub.s32 5632, 5632
      %25 = vsyncadd [#allocation5], %s24
      %s26 = sshll.u32 [#allocation4], 4
      %s27 = int_to_ptr.vmem [resolvable:$true] %s26
      %32 = dma.hbm_to_vmem [thread:$0]  %s3, 5632, %s27, [#allocation5], 128, 128, 8
    $region13: #{run.1} parent=1 // pred_fallthru
      _
    // Predicated region
    $region14: #{run.1} parent=1 // pred_check
      _
    $region15: #{run.1} parent=1 // pred_check_branch
      %34 = sbr.rel (0) target = $region17
    $region16: #{run.1} parent=1 // pred_region
      %35 = dma.done [#allocation5], 5632
    $region17: #{run.1} parent=1 // pred_fallthru
      _
    %v36 = vlaneseq
    %v37 = vshrl.u32 %v36, 7
    %v38 = vadd.s32 %v37, 8
    %vm39 = vcmp.eq.s32.totalorder %v37, 0
    %vm40 = vcmp.eq.s32.totalorder %v38, 0
    %s41 = sld [smem:[#allocation3 + $0x5]]
    %v42 = vstv %s41
    %v43 = vsel %vm39, %v42, 0
    %v44 = vsel %vm40, %v42, 0
    %vm45 = vcmp.eq.s32.totalorder %v37, 1
    %vm46 = vcmp.eq.s32.totalorder %v38, 1
    %s47 = sld [smem:[#allocation3 + $0x6]]
    %v48 = vstv %s47
    %v49 = vsel %vm45, %v48, %v43
    %v50 = vsel %vm46, %v48, %v44
    %vm51 = vcmp.eq.s32.totalorder %v37, 2
    %vm52 = vcmp.eq.s32.totalorder %v38, 2
    %s53 = sld [smem:[#allocation3 + $0x7]]
    %v54 = vstv %s53
    %v55 = vsel %vm51, %v54, %v49
    %v56 = vsel %vm52, %v54, %v50
    %vm57 = vcmp.eq.s32.totalorder %v37, 3
    %vm58 = vcmp.eq.s32.totalorder %v38, 3
    %s59 = sld [smem:[#allocation3 + $0x8]]
    %v60 = vstv %s59
    %v61 = vsel %vm57, %v60, %v55
    %v62 = vsel %vm58, %v60, %v56
    %vm63 = vcmp.eq.s32.totalorder %v37, 4
    %vm64 = vcmp.eq.s32.totalorder %v38, 4
    %s65 = sld [smem:[#allocation3 + $0x9]]
    %v66 = vstv %s65
    %v67 = vsel %vm63, %v66, %v61
    %v68 = vsel %vm64, %v66, %v62
    %vm69 = vcmp.eq.s32.totalorder %v37, 5
    %vm70 = vcmp.eq.s32.totalorder %v38, 5
    %s71 = sld [smem:[#allocation3 + $0xa]]
    %v72 = vstv %s71
    %v73 = vsel %vm69, %v72, %v67
    %v74 = vsel %vm70, %v72, %v68
    %vm75 = vcmp.eq.s32.totalorder %v37, 6
    %vm76 = vcmp.eq.s32.totalorder %v38, 6
    %s77 = sld [smem:[#allocation3 + $0xb]]
    %v78 = vstv %s77
    %v79 = vsel %vm75, %v78, %v73
    %v80 = vsel %vm76, %v78, %v74
    %vm81 = vcmp.eq.s32.totalorder %v37, 7
    %vm82 = vcmp.eq.s32.totalorder %v38, 7
    %s83 = sld [smem:[#allocation3 + $0xc]]
    %v84 = vstv %s83
    %v85 = vsel %vm81, %v84, %v79
    %v86 = vsel %vm82, %v84, %v80
    %vm87 = vcmp.eq.s32.totalorder %v37, 8
    %vm88 = vcmp.eq.s32.totalorder %v38, 8
    %s89 = sld [smem:[#allocation3 + $0xd]]
    %v90 = vstv %s89
    %v91 = vsel %vm87, %v90, %v85
    %v92 = vsel %vm88, %v90, %v86
    %vm93 = vcmp.eq.s32.totalorder %v37, 9
    %vm94 = vcmp.eq.s32.totalorder %v38, 9
    %s95 = sld [smem:[#allocation3 + $0xe]]
    %v96 = vstv %s95
    %v97 = vsel %vm93, %v96, %v91
    %v98 = vsel %vm94, %v96, %v92
    %s99 = sld [smem:[#allocation3 + $0x3]]
    %v100 = vlaneseq
    %v101 = vand.u32 %v100, 127
    %vm102 = vcmp.ge.s32.totalorder %v101, %v97
    %vm103 = vcmp.ge.s32.totalorder %v101, %v98
    %v104 = vstv %s99
    %v105 = vadd.s32 %v97, %v104
    %v106 = vadd.s32 %v98, %v104
    %vm107 = vcmp.lt.s32.totalorder %v101, %v105
    %vm108 = vcmp.lt.s32.totalorder %v101, %v106
    %vm109 = vmand %vm102, %vm107
    %vm110 = vmand %vm103, %vm108
    %v111 = vsel %vm109, 1, 0
    %v112 = vsel %vm110, 1, 0
    %v113 = vcvt.s32.f32 %v111
    %v114 = vcvt.s32.f32 %v112
    %s115 = sld [smem:[#allocation3 + $0xf]]
    %v116 = vstv %s115
    %v117 = vsel %vm39, %v116, 0
    %v118 = vsel %vm40, %v116, 0
    %s119 = sld [smem:[#allocation3 + $0x10]]
    %v120 = vstv %s119
    %v121 = vsel %vm45, %v120, %v117
    %v122 = vsel %vm46, %v120, %v118
    %s123 = sld [smem:[#allocation3 + $0x11]]
    %v124 = vstv %s123
    %v125 = vsel %vm51, %v124, %v121
    %v126 = vsel %vm52, %v124, %v122
    %s127 = sld [smem:[#allocation3 + $0x12]]
    %v128 = vstv %s127
    %v129 = vsel %vm57, %v128, %v125
    %v130 = vsel %vm58, %v128, %v126
    %s131 = sld [smem:[#allocation3 + $0x13]]
    %v132 = vstv %s131
    %v133 = vsel %vm63, %v132, %v129
    %v134 = vsel %vm64, %v132, %v130
    %s135 = sld [smem:[#allocation3 + $0x14]]
    %v136 = vstv %s135
    %v137 = vsel %vm69, %v136, %v133
    %v138 = vsel %vm70, %v136, %v134
    %s139 = sld [smem:[#allocation3 + $0x15]]
    %v140 = vstv %s139
    %v141 = vsel %vm75, %v140, %v137
    %v142 = vsel %vm76, %v140, %v138
    %s143 = sld [smem:[#allocation3 + $0x16]]
    %v144 = vstv %s143
    %v145 = vsel %vm81, %v144, %v141
    %v146 = vsel %vm82, %v144, %v142
    %s147 = sld [smem:[#allocation3 + $0x17]]
    %v148 = vstv %s147
    %v149 = vsel %vm87, %v148, %v145
    %v150 = vsel %vm88, %v148, %v146
    %s151 = sld [smem:[#allocation3 + $0x18]]
    %v152 = vstv %s151
    %v153 = vsel %vm93, %v152, %v149
    %v154 = vsel %vm94, %v152, %v150
    %s155 = sld [smem:[#allocation3 + $0x4]]
    %vm156 = vcmp.ge.s32.totalorder %v101, %v153
    %vm157 = vcmp.ge.s32.totalorder %v101, %v154
    %v158 = vstv %s155
    %v159 = vadd.s32 %v153, %v158
    %v160 = vadd.s32 %v154, %v158
    %vm161 = vcmp.lt.s32.totalorder %v101, %v159
    %vm162 = vcmp.lt.s32.totalorder %v101, %v160
    %vm163 = vmand %vm156, %vm161
    %vm164 = vmand %vm157, %vm162
    %v165 = vsel %vm163, 1, 0
    %v166 = vsel %vm164, 1, 0
    %v167 = vcvt.s32.f32 %v165
    %v168 = vcvt.s32.f32 %v166
    %s169 = scalar_lea.vmem [#allocation4], 224
    %v170 = vld [vmem:[%s169] sm:$0xff]
    %v171 = vld [vmem:[%s169 + $0x8] sm:$0xff]
    %v172 = vld [vmem:[%s169 + $0x10] sm:$0xff]
    %v173 = vld [vmem:[%s169 + $0x18] sm:$0xff]
    %s174 = scalar_lea.vmem [#allocation4], 256
    %v175 = vld [vmem:[%s174] sm:$0xff]
    %v176 = vld [vmem:[%s174 + $0x8] sm:$0xff]
    %v177 = vld [vmem:[%s174 + $0x10] sm:$0xff]
    %v178 = vld [vmem:[%s174 + $0x18] sm:$0xff]
    %vm179 = vcmask 261120
    %v181 = vsel %vm179, %v113, 0
    %v184 = vsel %vm179, %v114, 0
    %186 = vmatprep.subr.mxu0 0.0
    %187 = vmatpush1.msra.mxu0 0.0
    %188 = vmatprep.subr.mxu0 0.0
    %189 = vmatpush1.msra.mxu0 0.0
    %190 = vmatprep.subr.mxu0 0.0
    %191 = vmatpush1.msra.mxu0 0.0
    %192 = vmatprep.subr.mxu0 0.0
    %193 = vmatpush1.msra.mxu0 0.0
    %194 = vmatprep.subr.mxu0 0.0
    %195 = vmatpush1.msra.mxu0 0.0
    %196 = vmatprep.subr.mxu0 0.0
    %197 = vmatpush1.msra.mxu0 0.0
    %198 = vmatprep.subr.mxu0 0.0
    %199 = vmatpush1.msra.mxu0 0.0
    %200 = vmatprep.subr.mxu0 0.0
    %201 = vmatpush1.msra.mxu0 0.0
    %202 = vmatprep.subr.mxu0 0.0
    %203 = vmatpush1.msra.mxu0 0.0
    %204 = vmatprep.subr.mxu0 0.0
    %205 = vmatpush1.msra.mxu0 0.0
    %206 = vmatprep.subr.mxu0 0.0
    %207 = vmatpush1.msra.mxu0 0.0
    %208 = vmatprep.subr.mxu0 0.0
    %209 = vmatpush1.msra.mxu0 0.0
    %210 = vmatprep.subr.mxu0 0.0
    %211 = vmatpush1.msra.mxu0 %v178
    %212 = vmatprep.subr.mxu0 0.0
    %213 = vmatpush1.msra.mxu0 %v177
    %214 = vmatprep.subr.mxu0 0.0
    %215 = vmatpush1.msra.mxu0 %v176
    %216 = vmatprep.subr.mxu0 0.0
    %217 = vmatpush1.msra.mxu0 %v175
    %218 = vmatprep.subr.mxu0 0.0
    %219 = vmatpush2.msra.mxu0 0.0
    %220 = vmatprep.subr.mxu0 0.0
    %221 = vmatpush2.msra.mxu0 0.0
    %222 = vmatprep.subr.mxu0 0.0
    %223 = vmatpush2.msra.mxu0 0.0
    %224 = vmatprep.subr.mxu0 0.0
    %225 = vmatpush2.msra.mxu0 0.0
    %226 = vmatprep.subr.mxu0 0.0
    %227 = vmatpush2.msra.mxu0 0.0
    %228 = vmatprep.subr.mxu0 0.0
    %229 = vmatpush2.msra.mxu0 0.0
    %230 = vmatprep.subr.mxu0 0.0
    %231 = vmatpush2.msra.mxu0 0.0
    %232 = vmatprep.subr.mxu0 0.0
    %233 = vmatpush2.msra.mxu0 0.0
    %234 = vmatprep.subr.mxu0 0.0
    %235 = vmatpush2.msra.mxu0 0.0
    %236 = vmatprep.subr.mxu0 0.0
    %237 = vmatpush2.msra.mxu0 0.0
    %238 = vmatprep.subr.mxu0 0.0
    %239 = vmatpush2.msra.mxu0 0.0
    %240 = vmatprep.subr.mxu0 0.0
    %241 = vmatpush2.msra.mxu0 0.0
    %242 = vmatprep.subr.mxu0 0.0
    %243 = vmatpush2.msra.mxu0 0.0
    %244 = vmatprep.subr.mxu0 0.0
    %245 = vmatpush2.msra.mxu0 0.0
    %246 = vmatprep.subr.mxu0 0.0
    %247 = vmatpush2.msra.mxu0 0.0
    %248 = vmatprep.subr.mxu0 0.0
    %249 = vmatpush2.msra.mxu0 0.0
    %250 = vmatprep.mubr.f32.mxu0 0.0
    %251 = vmatmul.mubr.f32.gmra.mxu0 %v181
    %v252 = vpop.f32.mrf.mxu0
    %v253 = vadd.f32 0.0, %v252
    %v254 = vpop.f32.mrf.mxu0
    %255 = vmatprep.mubr.f32.mxu0 0.0
    %256 = vmatmul.mubr.f32.gmra.mxu0 %v184
    %v257 = vpop.f32.mrf.mxu0
    %v258 = vadd.f32 0.0, %v257
    %v259 = vpop.f32.mrf.mxu0
    %260 = vdwg.mxu0
    %v261 = vmul.f32 %v253, 9.04788
    %v262 = vmul.f32 %v258, 9.04788
    %263 = vmatprep.subr.mxu0 0.0
    %264 = vmatpush1.msra.mxu0 0.0
    %265 = vmatprep.subr.mxu0 0.0
    %266 = vmatpush1.msra.mxu0 0.0
    %267 = vmatprep.subr.mxu0 0.0
    %268 = vmatpush1.msra.mxu0 0.0
    %269 = vmatprep.subr.mxu0 0.0
    %270 = vmatpush1.msra.mxu0 0.0
    %271 = vmatprep.subr.mxu0 0.0
    %272 = vmatpush1.msra.mxu0 0.0
    %273 = vmatprep.subr.mxu0 0.0
    %274 = vmatpush1.msra.mxu0 0.0
    %275 = vmatprep.subr.mxu0 0.0
    %276 = vmatpush1.msra.mxu0 0.0
    %277 = vmatprep.subr.mxu0 0.0
    %278 = vmatpush1.msra.mxu0 0.0
    %279 = vmatprep.subr.mxu0 0.0
    %280 = vmatpush1.msra.mxu0 0.0
    %281 = vmatprep.subr.mxu0 0.0
    %282 = vmatpush1.msra.mxu0 0.0
    %283 = vmatprep.subr.mxu0 0.0
    %284 = vmatpush1.msra.mxu0 0.0
    %285 = vmatprep.subr.mxu0 0.0
    %286 = vmatpush1.msra.mxu0 0.0
    %287 = vmatprep.subr.mxu0 0.0
    %288 = vmatpush1.msra.mxu0 %v173
    %289 = vmatprep.subr.mxu0 0.0
    %290 = vmatpush1.msra.mxu0 %v172
    %291 = vmatprep.subr.mxu0 0.0
    %292 = vmatpush1.msra.mxu0 %v171
    %293 = vmatprep.subr.mxu0 0.0
    %294 = vmatpush1.msra.mxu0 %v170
    %295 = vmatprep.subr.mxu0 0.0
    %296 = vmatpush2.msra.mxu0 0.0
    %297 = vmatprep.subr.mxu0 0.0
    %298 = vmatpush2.msra.mxu0 0.0
    %299 = vmatprep.subr.mxu0 0.0
    %300 = vmatpush2.msra.mxu0 0.0
    %301 = vmatprep.subr.mxu0 0.0
    %302 = vmatpush2.msra.mxu0 0.0
    %303 = vmatprep.subr.mxu0 0.0
    %304 = vmatpush2.msra.mxu0 0.0
    %305 = vmatprep.subr.mxu0 0.0
    %306 = vmatpush2.msra.mxu0 0.0
    %307 = vmatprep.subr.mxu0 0.0
    %308 = vmatpush2.msra.mxu0 0.0
    %309 = vmatprep.subr.mxu0 0.0
    %310 = vmatpush2.msra.mxu0 0.0
    %311 = vmatprep.subr.mxu0 0.0
    %312 = vmatpush2.msra.mxu0 0.0
    %313 = vmatprep.subr.mxu0 0.0
    %314 = vmatpush2.msra.mxu0 0.0
    %315 = vmatprep.subr.mxu0 0.0
    %316 = vmatpush2.msra.mxu0 0.0
    %317 = vmatprep.subr.mxu0 0.0
    %318 = vmatpush2.msra.mxu0 0.0
    %319 = vmatprep.subr.mxu0 0.0
    %320 = vmatpush2.msra.mxu0 0.0
    %321 = vmatprep.subr.mxu0 0.0
    %322 = vmatpush2.msra.mxu0 0.0
    %323 = vmatprep.subr.mxu0 0.0
    %324 = vmatpush2.msra.mxu0 0.0
    %325 = vmatprep.subr.mxu0 0.0
    %326 = vmatpush2.msra.mxu0 0.0
    %327 = vmatprep.mubr.f32.mxu0 0.0
    %328 = vmatmul.mubr.f32.gmra.mxu0 %v181
    %v329 = vpop.f32.mrf.mxu0
    %v330 = vadd.f32 %v261, %v329
    %v331 = vpop.f32.mrf.mxu0
    %332 = vmatprep.mubr.f32.mxu0 0.0
    %333 = vmatmul.mubr.f32.gmra.mxu0 %v184
    %v334 = vpop.f32.mrf.mxu0
    %v335 = vadd.f32 %v262, %v334
    %v336 = vpop.f32.mrf.mxu0
    %337 = vdwg.mxu0
    %s338 = scalar_lea.vmem [#allocation4], 288
    %v339 = vld [vmem:[%s338] sm:$0xff]
    %v340 = vld [vmem:[%s338 + $0x8] sm:$0xff]
    %v341 = vld [vmem:[%s338 + $0x10] sm:$0xff]
    %v342 = vld [vmem:[%s338 + $0x18] sm:$0xff]
    %343 = vmatprep.subr.mxu0 0.0
    %344 = vmatpush1.msra.mxu0 0.0
    %345 = vmatprep.subr.mxu0 0.0
    %346 = vmatpush1.msra.mxu0 0.0
    %347 = vmatprep.subr.mxu0 0.0
    %348 = vmatpush1.msra.mxu0 0.0
    %349 = vmatprep.subr.mxu0 0.0
    %350 = vmatpush1.msra.mxu0 0.0
    %351 = vmatprep.subr.mxu0 0.0
    %352 = vmatpush1.msra.mxu0 0.0
    %353 = vmatprep.subr.mxu0 0.0
    %354 = vmatpush1.msra.mxu0 0.0
    %355 = vmatprep.subr.mxu0 0.0
    %356 = vmatpush1.msra.mxu0 0.0
    %357 = vmatprep.subr.mxu0 0.0
    %358 = vmatpush1.msra.mxu0 0.0
    %359 = vmatprep.subr.mxu0 0.0
    %360 = vmatpush1.msra.mxu0 0.0
    %361 = vmatprep.subr.mxu0 0.0
    %362 = vmatpush1.msra.mxu0 0.0
    %363 = vmatprep.subr.mxu0 0.0
    %364 = vmatpush1.msra.mxu0 0.0
    %365 = vmatprep.subr.mxu0 0.0
    %366 = vmatpush1.msra.mxu0 0.0
    %367 = vmatprep.subr.mxu0 0.0
    %368 = vmatpush1.msra.mxu0 %v342
    %369 = vmatprep.subr.mxu0 0.0
    %370 = vmatpush1.msra.mxu0 %v341
    %371 = vmatprep.subr.mxu0 0.0
    %372 = vmatpush1.msra.mxu0 %v340
    %373 = vmatprep.subr.mxu0 0.0
    %374 = vmatpush1.msra.mxu0 %v339
    %375 = vmatprep.subr.mxu0 0.0
    %376 = vmatpush2.msra.mxu0 0.0
    %377 = vmatprep.subr.mxu0 0.0
    %378 = vmatpush2.msra.mxu0 0.0
    %379 = vmatprep.subr.mxu0 0.0
    %380 = vmatpush2.msra.mxu0 0.0
    %381 = vmatprep.subr.mxu0 0.0
    %382 = vmatpush2.msra.mxu0 0.0
    %383 = vmatprep.subr.mxu0 0.0
    %384 = vmatpush2.msra.mxu0 0.0
    %385 = vmatprep.subr.mxu0 0.0
    %386 = vmatpush2.msra.mxu0 0.0
    %387 = vmatprep.subr.mxu0 0.0
    %388 = vmatpush2.msra.mxu0 0.0
    %389 = vmatprep.subr.mxu0 0.0
    %390 = vmatpush2.msra.mxu0 0.0
    %391 = vmatprep.subr.mxu0 0.0
    %392 = vmatpush2.msra.mxu0 0.0
    %393 = vmatprep.subr.mxu0 0.0
    %394 = vmatpush2.msra.mxu0 0.0
    %395 = vmatprep.subr.mxu0 0.0
    %396 = vmatpush2.msra.mxu0 0.0
    %397 = vmatprep.subr.mxu0 0.0
    %398 = vmatpush2.msra.mxu0 0.0
    %399 = vmatprep.subr.mxu0 0.0
    %400 = vmatpush2.msra.mxu0 0.0
    %401 = vmatprep.subr.mxu0 0.0
    %402 = vmatpush2.msra.mxu0 0.0
    %403 = vmatprep.subr.mxu0 0.0
    %404 = vmatpush2.msra.mxu0 0.0
    %405 = vmatprep.subr.mxu0 0.0
    %406 = vmatpush2.msra.mxu0 0.0
    %407 = vmatprep.mubr.f32.mxu0 0.0
    %408 = vmatmul.mubr.f32.gmra.mxu0 %v181
    %v409 = vpop.f32.mrf.mxu0
    %v410 = vadd.f32 0.0, %v409
    %v411 = vpop.f32.mrf.mxu0
    %412 = vmatprep.mubr.f32.mxu0 0.0
    %413 = vmatmul.mubr.f32.gmra.mxu0 %v184
    %v414 = vpop.f32.mrf.mxu0
    %v415 = vadd.f32 0.0, %v414
    %v416 = vpop.f32.mrf.mxu0
    %417 = vdwg.mxu0
    %v418 = vmul.f32 %v410, 8.682076
    %v419 = vmul.f32 %v415, 8.682076
    %v420 = vadd.f32 %v330, %v418
    %v421 = vadd.f32 %v335, %v419
    %s422 = scalar_lea.vmem [#allocation4], 320
    %v423 = vld [vmem:[%s422] sm:$0xff]
    %v424 = vld [vmem:[%s422 + $0x8] sm:$0xff]
    %v425 = vld [vmem:[%s422 + $0x10] sm:$0xff]
    %v426 = vld [vmem:[%s422 + $0x18] sm:$0xff]
    %427 = vmatprep.subr.mxu0 0.0
    %428 = vmatpush1.msra.mxu0 0.0
    %429 = vmatprep.subr.mxu0 0.0
    %430 = vmatpush1.msra.mxu0 0.0
    %431 = vmatprep.subr.mxu0 0.0
    %432 = vmatpush1.msra.mxu0 0.0
    %433 = vmatprep.subr.mxu0 0.0
    %434 = vmatpush1.msra.mxu0 0.0
    %435 = vmatprep.subr.mxu0 0.0
    %436 = vmatpush1.msra.mxu0 0.0
    %437 = vmatprep.subr.mxu0 0.0
    %438 = vmatpush1.msra.mxu0 0.0
    %439 = vmatprep.subr.mxu0 0.0
    %440 = vmatpush1.msra.mxu0 0.0
    %441 = vmatprep.subr.mxu0 0.0
    %442 = vmatpush1.msra.mxu0 0.0
    %443 = vmatprep.subr.mxu0 0.0
    %444 = vmatpush1.msra.mxu0 0.0
    %445 = vmatprep.subr.mxu0 0.0
    %446 = vmatpush1.msra.mxu0 0.0
    %447 = vmatprep.subr.mxu0 0.0
    %448 = vmatpush1.msra.mxu0 0.0
    %449 = vmatprep.subr.mxu0 0.0
    %450 = vmatpush1.msra.mxu0 0.0
    %451 = vmatprep.subr.mxu0 0.0
    %452 = vmatpush1.msra.mxu0 %v426
    %453 = vmatprep.subr.mxu0 0.0
    %454 = vmatpush1.msra.mxu0 %v425
    %455 = vmatprep.subr.mxu0 0.0
    %456 = vmatpush1.msra.mxu0 %v424
    %457 = vmatprep.subr.mxu0 0.0
    %458 = vmatpush1.msra.mxu0 %v423
    %459 = vmatprep.subr.mxu0 0.0
    %460 = vmatpush2.msra.mxu0 0.0
    %461 = vmatprep.subr.mxu0 0.0
    %462 = vmatpush2.msra.mxu0 0.0
    %463 = vmatprep.subr.mxu0 0.0
    %464 = vmatpush2.msra.mxu0 0.0
    %465 = vmatprep.subr.mxu0 0.0
    %466 = vmatpush2.msra.mxu0 0.0
    %467 = vmatprep.subr.mxu0 0.0
    %468 = vmatpush2.msra.mxu0 0.0
    %469 = vmatprep.subr.mxu0 0.0
    %470 = vmatpush2.msra.mxu0 0.0
    %471 = vmatprep.subr.mxu0 0.0
    %472 = vmatpush2.msra.mxu0 0.0
    %473 = vmatprep.subr.mxu0 0.0
    %474 = vmatpush2.msra.mxu0 0.0
    %475 = vmatprep.subr.mxu0 0.0
    %476 = vmatpush2.msra.mxu0 0.0
    %477 = vmatprep.subr.mxu0 0.0
    %478 = vmatpush2.msra.mxu0 0.0
    %479 = vmatprep.subr.mxu0 0.0
    %480 = vmatpush2.msra.mxu0 0.0
    %481 = vmatprep.subr.mxu0 0.0
    %482 = vmatpush2.msra.mxu0 0.0
    %483 = vmatprep.subr.mxu0 0.0
    %484 = vmatpush2.msra.mxu0 0.0
    %485 = vmatprep.subr.mxu0 0.0
    %486 = vmatpush2.msra.mxu0 0.0
    %487 = vmatprep.subr.mxu0 0.0
    %488 = vmatpush2.msra.mxu0 0.0
    %489 = vmatprep.subr.mxu0 0.0
    %490 = vmatpush2.msra.mxu0 0.0
    %491 = vmatprep.mubr.f32.mxu0 0.0
    %492 = vmatmul.mubr.f32.gmra.mxu0 %v181
    %v493 = vpop.f32.mrf.mxu0
    %v494 = vadd.f32 0.0, %v493
    %v495 = vpop.f32.mrf.mxu0
    %496 = vmatprep.mubr.f32.mxu0 0.0
    %497 = vmatmul.mubr.f32.gmra.mxu0 %v184
    %v498 = vpop.f32.mrf.mxu0
    %v499 = vadd.f32 0.0, %v498
    %v500 = vpop.f32.mrf.mxu0
    %501 = vdwg.mxu0
    %v502 = vmul.f32 %v494, 12.963227
    %v503 = vmul.f32 %v499, 12.963227
    %v504 = vadd.f32 %v420, %v502
    %v505 = vadd.f32 %v421, %v503
    %v506 = vmul.f32 %v504, %v167
    %v507 = vmul.f32 %v505, %v168
    %v508 = vsel %vm179, %v506, 0.0
    %509 = vadd.xlane.f32.xlu0 %v508
    %v510 = vpop.xlane.xlu0 %509
    %v511 = vsel %vm179, %v507, 0.0
    %512 = vadd.xlane.f32.xlu0 %v511
    %v513 = vpop.xlane.xlu0 %512
    %s514 = sld [smem:[#allocation3 + $0x1]]
    %v515 = vstv %s514
    %s516 = sld [smem:[#allocation3 + $0x2]]
    %v517 = vstv %s516
    %s518 = sld [smem:[#allocation3]]
    %p519 = scmp.gt.s32.totalorder %s518, 0
    %vm520 = vcmp.gt.f32.partialorder %v510, -1.0
    %s521 = scalar_select %p519, 1, 0
    %v522 = vstv %s521
    %vm523 = vcmp.eq.s32.totalorder %v522, 1
    %vm524 = vmand %vm523, %vm520
    %v525 = vsel %vm524, %v510, -1.0
    %v526 = vsel %vm524, %v42, %v515
    %v527 = vsel %vm524, %v116, %v517
    %p528 = scmp.gt.s32.totalorder %s518, 1
    %v530 = vrot.slane %v525, 7
    %vm532 = vcmp.gt.f32.partialorder %v510, %v530
    %s533 = scalar_select %p528, 1, 0
    %v534 = vstv %s533
    %vm535 = vcmp.eq.s32.totalorder %v534, 1
    %vm536 = vmand %vm535, %vm532
    %v537 = vsel %vm536, %v510, %v530
    %v538 = vrot.slane %v526, 7
    %v539 = vsel %vm536, %v48, %v538
    %v540 = vrot.slane %v527, 7
    %v541 = vsel %vm536, %v120, %v540
    %p542 = scmp.gt.s32.totalorder %s518, 2
    %v544 = vrot.slane %v537, 7
    %vm546 = vcmp.gt.f32.partialorder %v510, %v544
    %s547 = scalar_select %p542, 1, 0
    %v548 = vstv %s547
    %vm549 = vcmp.eq.s32.totalorder %v548, 1
    %vm550 = vmand %vm549, %vm546
    %v551 = vsel %vm550, %v510, %v544
    %v552 = vrot.slane %v539, 7
    %v553 = vsel %vm550, %v54, %v552
    %v554 = vrot.slane %v541, 7
    %v555 = vsel %vm550, %v124, %v554
    %p556 = scmp.gt.s32.totalorder %s518, 3
    %v558 = vrot.slane %v551, 7
    %vm560 = vcmp.gt.f32.partialorder %v510, %v558
    %s561 = scalar_select %p556, 1, 0
    %v562 = vstv %s561
    %vm563 = vcmp.eq.s32.totalorder %v562, 1
    %vm564 = vmand %vm563, %vm560
    %v565 = vsel %vm564, %v510, %v558
    %v566 = vrot.slane %v553, 7
    %v567 = vsel %vm564, %v60, %v566
    %v568 = vrot.slane %v555, 7
    %v569 = vsel %vm564, %v128, %v568
    %p570 = scmp.gt.s32.totalorder %s518, 4
    %v572 = vrot.slane %v565, 7
    %vm574 = vcmp.gt.f32.partialorder %v510, %v572
    %s575 = scalar_select %p570, 1, 0
    %v576 = vstv %s575
    %vm577 = vcmp.eq.s32.totalorder %v576, 1
    %vm578 = vmand %vm577, %vm574
    %v579 = vsel %vm578, %v510, %v572
    %v580 = vrot.slane %v567, 7
    %v581 = vsel %vm578, %v66, %v580
    %v582 = vrot.slane %v569, 7
    %v583 = vsel %vm578, %v132, %v582
    %p584 = scmp.gt.s32.totalorder %s518, 5
    %v586 = vrot.slane %v579, 7
    %vm588 = vcmp.gt.f32.partialorder %v510, %v586
    %s589 = scalar_select %p584, 1, 0
    %v590 = vstv %s589
    %vm591 = vcmp.eq.s32.totalorder %v590, 1
    %vm592 = vmand %vm591, %vm588
    %v593 = vsel %vm592, %v510, %v586
    %v594 = vrot.slane %v581, 7
    %v595 = vsel %vm592, %v72, %v594
    %v596 = vrot.slane %v583, 7
    %v597 = vsel %vm592, %v136, %v596
    %p598 = scmp.gt.s32.totalorder %s518, 6
    %v600 = vrot.slane %v593, 7
    %vm602 = vcmp.gt.f32.partialorder %v510, %v600
    %s603 = scalar_select %p598, 1, 0
    %v604 = vstv %s603
    %vm605 = vcmp.eq.s32.totalorder %v604, 1
    %vm606 = vmand %vm605, %vm602
    %v607 = vsel %vm606, %v510, %v600
    %v608 = vrot.slane %v595, 7
    %v609 = vsel %vm606, %v78, %v608
    %v610 = vrot.slane %v597, 7
    %v611 = vsel %vm606, %v140, %v610
    %p612 = scmp.gt.s32.totalorder %s518, 7
    %v614 = vrot.slane %v607, 7
    %vm616 = vcmp.gt.f32.partialorder %v510, %v614
    %s617 = scalar_select %p612, 1, 0
    %v618 = vstv %s617
    %vm619 = vcmp.eq.s32.totalorder %v618, 1
    %vm620 = vmand %vm619, %vm616
    %v621 = vsel %vm620, %v510, %v614
    %v622 = vrot.slane %v609, 7
    %v623 = vsel %vm620, %v84, %v622
    %v624 = vrot.slane %v611, 7
    %v625 = vsel %vm620, %v144, %v624
    %p626 = scmp.gt.s32.totalorder %s518, 8
    %v628 = vrot.slane %v621, 7
    %vm630 = vcmp.gt.f32.partialorder %v513, %v628
    %s631 = scalar_select %p626, 1, 0
    %v632 = vstv %s631
    %vm633 = vcmp.eq.s32.totalorder %v632, 1
    %vm634 = vmand %vm633, %vm630
    %v635 = vsel %vm634, %v513, %v628
    %v636 = vrot.slane %v623, 7
    %v637 = vsel %vm634, %v90, %v636
    %v638 = vrot.slane %v625, 7
    %v639 = vsel %vm634, %v148, %v638
    %p640 = scmp.gt.s32.totalorder %s518, 9
    %v642 = vrot.slane %v635, 7
    %vm644 = vcmp.gt.f32.partialorder %v513, %v642
    %s645 = scalar_select %p640, 1, 0
    %v646 = vstv %s645
    %vm647 = vcmp.eq.s32.totalorder %v646, 1
    %vm648 = vmand %vm647, %vm644
    %v649 = vrot.slane %v637, 7
    %v650 = vsel %vm648, %v96, %v649
    %v651 = vrot.slane %v639, 7
    %v652 = vsel %vm648, %v152, %v651
    %v653 = vld [vmem:[%s1] sm:$0xff]
    %v654 = vld [vmem:[%s1 + $0x8] sm:$0xff]
    %v655 = vlaneseq
    %v656 = vshrl.u32 %v655, 7
    %v657 = vsub.s32 1, %v656
    %v658 = vrot.slane %v650, %v657
    %v659 = vadd.s32 %v658, %v653
    %v660 = vadd.s32 %v658, %v654
    %661 = vset.pattern.permute.xlu0 0
    %662 = vperm.xlu0 %661, %v659
    %v663 = vpop.permute.xlu0 %662
    %664 = vset.pattern.permute.xlu0 0
    %665 = vperm.xlu0 %664, %v660
    %v666 = vpop.permute.xlu0 %665
    %vm667 = vcmp.eq.s32.totalorder %v101, %v663
    %vm668 = vcmp.eq.s32.totalorder %v101, %v666
    %v669 = vsel %vm667, 1, 0
    %v670 = vsel %vm668, 1, 0
    %v671 = vcvt.s32.f32 %v669
    %v672 = vcvt.s32.f32 %v670
    %v673 = vld [vmem:[%s2] sm:$0x1]
    %v674 = vadd.s32 %v37, 16
    %v675 = vadd.s32 %v37, 24
    %676 = vset.pattern.permute.xlu0 0
    %677 = vperm.xlu0 %676, %v652
    %v678 = vpop.permute.xlu0 %677
    %v679 = vlaneseq
    %v680 = vshrl.u32 %v679, 7
    %v681 = vsub.s32 0, %v680
    %v682 = vrot.slane %v673, %v681
    %v683 = vadd.s32 %v678, %v682
    %v684 = vlaneseq
    %v685 = vshrl.u32 %v684, 7
    %v686 = vsub.s32 1, %v685
    %v687 = vrot.slane %v683, %v686
    %vm688 = vcmp.eq.s32.totalorder %v37, %v687
    %vm689 = vcmp.eq.s32.totalorder %v38, %v687
    %vm690 = vcmp.eq.s32.totalorder %v674, %v687
    %vm691 = vcmp.eq.s32.totalorder %v675, %v687
    %v692 = vsel %vm688, 1, 0
    %v693 = vsel %vm689, 1, 0
    %v694 = vsel %vm690, 1, 0
    %v695 = vsel %vm691, 1, 0
    %v696 = vcvt.s32.f32 %v692
    %v697 = vcvt.s32.f32 %v693
    %v698 = vcvt.s32.f32 %v694
    %v699 = vcvt.s32.f32 %v695
    %v700 = vld [vmem:[#allocation4] sm:$0xff]
    %v701 = vld [vmem:[#allocation4 + $0x8] sm:$0xff]
    %v702 = vld [vmem:[#allocation4 + $0x10] sm:$0xff]
    %v703 = vld [vmem:[#allocation4 + $0x18] sm:$0xff]
    %v705 = vsel %vm179, %v671, 0
    %v708 = vsel %vm179, %v672, 0
    %710 = vmatprep.subr.mxu0 0.0
    %711 = vmatpush1.msra.mxu0 0.0
    %712 = vmatprep.subr.mxu0 0.0
    %713 = vmatpush1.msra.mxu0 0.0
    %714 = vmatprep.subr.mxu0 0.0
    %715 = vmatpush1.msra.mxu0 0.0
    %716 = vmatprep.subr.mxu0 0.0
    %717 = vmatpush1.msra.mxu0 0.0
    %718 = vmatprep.subr.mxu0 0.0
    %719 = vmatpush1.msra.mxu0 0.0
    %720 = vmatprep.subr.mxu0 0.0
    %721 = vmatpush1.msra.mxu0 0.0
    %722 = vmatprep.subr.mxu0 0.0
    %723 = vmatpush1.msra.mxu0 0.0
    %724 = vmatprep.subr.mxu0 0.0
    %725 = vmatpush1.msra.mxu0 0.0
    %726 = vmatprep.subr.mxu0 0.0
    %727 = vmatpush1.msra.mxu0 0.0
    %728 = vmatprep.subr.mxu0 0.0
    %729 = vmatpush1.msra.mxu0 0.0
    %730 = vmatprep.subr.mxu0 0.0
    %731 = vmatpush1.msra.mxu0 0.0
    %732 = vmatprep.subr.mxu0 0.0
    %733 = vmatpush1.msra.mxu0 0.0
    %734 = vmatprep.subr.mxu0 0.0
    %735 = vmatpush1.msra.mxu0 %v703
    %736 = vmatprep.subr.mxu0 0.0
    %737 = vmatpush1.msra.mxu0 %v702
    %738 = vmatprep.subr.mxu0 0.0
    %739 = vmatpush1.msra.mxu0 %v701
    %740 = vmatprep.subr.mxu0 0.0
    %741 = vmatpush1.msra.mxu0 %v700
    %742 = vmatprep.subr.mxu0 0.0
    %743 = vmatpush2.msra.mxu0 0.0
    %744 = vmatprep.subr.mxu0 0.0
    %745 = vmatpush2.msra.mxu0 0.0
    %746 = vmatprep.subr.mxu0 0.0
    %747 = vmatpush2.msra.mxu0 0.0
    %748 = vmatprep.subr.mxu0 0.0
    %749 = vmatpush2.msra.mxu0 0.0
    %750 = vmatprep.subr.mxu0 0.0
    %751 = vmatpush2.msra.mxu0 0.0
    %752 = vmatprep.subr.mxu0 0.0
    %753 = vmatpush2.msra.mxu0 0.0
    %754 = vmatprep.subr.mxu0 0.0
    %755 = vmatpush2.msra.mxu0 0.0
    %756 = vmatprep.subr.mxu0 0.0
    %757 = vmatpush2.msra.mxu0 0.0
    %758 = vmatprep.subr.mxu0 0.0
    %759 = vmatpush2.msra.mxu0 0.0
    %760 = vmatprep.subr.mxu0 0.0
    %761 = vmatpush2.msra.mxu0 0.0
    %762 = vmatprep.subr.mxu0 0.0
    %763 = vmatpush2.msra.mxu0 0.0
    %764 = vmatprep.subr.mxu0 0.0
    %765 = vmatpush2.msra.mxu0 0.0
    %766 = vmatprep.subr.mxu0 0.0
    %767 = vmatpush2.msra.mxu0 0.0
    %768 = vmatprep.subr.mxu0 0.0
    %769 = vmatpush2.msra.mxu0 0.0
    %770 = vmatprep.subr.mxu0 0.0
    %771 = vmatpush2.msra.mxu0 0.0
    %772 = vmatprep.subr.mxu0 0.0
    %773 = vmatpush2.msra.mxu0 0.0
    %774 = vmatprep.mubr.f32.mxu0 0.0
    %775 = vmatmul.mubr.f32.gmra.mxu0 %v705
    %v776 = vpop.f32.mrf.mxu0
    %v777 = vadd.f32 0.0, %v776
    %v778 = vpop.f32.mrf.mxu0
    %779 = vmatprep.mubr.f32.mxu0 0.0
    %780 = vmatmul.mubr.f32.gmra.mxu0 %v708
    %v781 = vpop.f32.mrf.mxu0
    %v782 = vadd.f32 0.0, %v781
    %v783 = vpop.f32.mrf.mxu0
    %784 = vdwg.mxu0
    %v786 = vsel %vm179, %v777, 0
    %v789 = vsel %vm179, %v782, 0
    %791 = vmatprep.subr.mxu0 0.0
    %792 = vmatpush1.msra.mxu0 0.0
    %793 = vmatprep.subr.mxu0 0.0
    %794 = vmatpush1.msra.mxu0 0.0
    %795 = vmatprep.subr.mxu0 0.0
    %796 = vmatpush1.msra.mxu0 0.0
    %797 = vmatprep.subr.mxu0 0.0
    %798 = vmatpush1.msra.mxu0 0.0
    %799 = vmatprep.subr.mxu0 0.0
    %800 = vmatpush1.msra.mxu0 0.0
    %801 = vmatprep.subr.mxu0 0.0
    %802 = vmatpush1.msra.mxu0 0.0
    %803 = vmatprep.subr.mxu0 0.0
    %804 = vmatpush1.msra.mxu0 0.0
    %805 = vmatprep.subr.mxu0 0.0
    %806 = vmatpush1.msra.mxu0 0.0
    %807 = vmatprep.subr.mxu0 0.0
    %808 = vmatpush1.msra.mxu0 0.0
    %809 = vmatprep.subr.mxu0 0.0
    %810 = vmatpush1.msra.mxu0 0.0
    %811 = vmatprep.subr.mxu0 0.0
    %812 = vmatpush1.msra.mxu0 0.0
    %813 = vmatprep.subr.mxu0 0.0
    %814 = vmatpush1.msra.mxu0 0.0
    %815 = vmatprep.subr.mxu0 0.0
    %816 = vmatpush1.msra.mxu0 %v699
    %817 = vmatprep.subr.mxu0 0.0
    %818 = vmatpush1.msra.mxu0 %v698
    %819 = vmatprep.subr.mxu0 0.0
    %820 = vmatpush1.msra.mxu0 %v697
    %821 = vmatprep.subr.mxu0 0.0
    %822 = vmatpush1.msra.mxu0 %v696
    %823 = vmatprep.subr.mxu0 0.0
    %824 = vmatpush2.msra.mxu0 0.0
    %825 = vmatprep.subr.mxu0 0.0
    %826 = vmatpush2.msra.mxu0 0.0
    %827 = vmatprep.subr.mxu0 0.0
    %828 = vmatpush2.msra.mxu0 0.0
    %829 = vmatprep.subr.mxu0 0.0
    %830 = vmatpush2.msra.mxu0 0.0
    %831 = vmatprep.subr.mxu0 0.0
    %832 = vmatpush2.msra.mxu0 0.0
    %833 = vmatprep.subr.mxu0 0.0
    %834 = vmatpush2.msra.mxu0 0.0
    %835 = vmatprep.subr.mxu0 0.0
    %836 = vmatpush2.msra.mxu0 0.0
    %837 = vmatprep.subr.mxu0 0.0
    %838 = vmatpush2.msra.mxu0 0.0
    %839 = vmatprep.subr.mxu0 0.0
    %840 = vmatpush2.msra.mxu0 0.0
    %841 = vmatprep.subr.mxu0 0.0
    %842 = vmatpush2.msra.mxu0 0.0
    %843 = vmatprep.subr.mxu0 0.0
    %844 = vmatpush2.msra.mxu0 0.0
    %845 = vmatprep.subr.mxu0 0.0
    %846 = vmatpush2.msra.mxu0 0.0
    %847 = vmatprep.subr.mxu0 0.0
    %848 = vmatpush2.msra.mxu0 0.0
    %849 = vmatprep.subr.mxu0 0.0
    %850 = vmatpush2.msra.mxu0 0.0
    %851 = vmatprep.subr.mxu0 0.0
    %852 = vmatpush2.msra.mxu0 0.0
    %853 = vmatprep.subr.mxu0 0.0
    %854 = vmatpush2.msra.mxu0 0.0
    %855 = vmatprep.mubr.f32.mxu0 0.0
    %856 = vmatmul.mubr.f32.gmra.mxu0 %v786
    %v857 = vpop.f32.mrf.mxu0
    %v858 = vadd.f32 0.0, %v857
    %v859 = vpop.f32.mrf.mxu0
    %860 = vmatprep.mubr.f32.mxu0 0.0
    %861 = vmatmul.mubr.f32.gmra.mxu0 %v789
    %v862 = vpop.f32.mrf.mxu0
    %v863 = vadd.f32 0.0, %v862
    %v864 = vpop.f32.mrf.mxu0
    %865 = vdwg.mxu0
    %866 = vst [vmem:[#allocation7] sm:$0xff] %v858
    %867 = vst [vmem:[#allocation7 + $0x8] sm:$0xff] %v863
    %s868 = scalar_lea.vmem [#allocation4], 32
    %v869 = vld [vmem:[%s868] sm:$0xff]
    %v870 = vld [vmem:[%s868 + $0x8] sm:$0xff]
    %v871 = vld [vmem:[%s868 + $0x10] sm:$0xff]
    %v872 = vld [vmem:[%s868 + $0x18] sm:$0xff]
    %873 = vmatprep.subr.mxu0 0.0
    %874 = vmatpush1.msra.mxu0 0.0
    %875 = vmatprep.subr.mxu0 0.0
    %876 = vmatpush1.msra.mxu0 0.0
    %877 = vmatprep.subr.mxu0 0.0
    %878 = vmatpush1.msra.mxu0 0.0
    %879 = vmatprep.subr.mxu0 0.0
    %880 = vmatpush1.msra.mxu0 0.0
    %881 = vmatprep.subr.mxu0 0.0
    %882 = vmatpush1.msra.mxu0 0.0
    %883 = vmatprep.subr.mxu0 0.0
    %884 = vmatpush1.msra.mxu0 0.0
    %885 = vmatprep.subr.mxu0 0.0
    %886 = vmatpush1.msra.mxu0 0.0
    %887 = vmatprep.subr.mxu0 0.0
    %888 = vmatpush1.msra.mxu0 0.0
    %889 = vmatprep.subr.mxu0 0.0
    %890 = vmatpush1.msra.mxu0 0.0
    %891 = vmatprep.subr.mxu0 0.0
    %892 = vmatpush1.msra.mxu0 0.0
    %893 = vmatprep.subr.mxu0 0.0
    %894 = vmatpush1.msra.mxu0 0.0
    %895 = vmatprep.subr.mxu0 0.0
    %896 = vmatpush1.msra.mxu0 0.0
    %897 = vmatprep.subr.mxu0 0.0
    %898 = vmatpush1.msra.mxu0 %v872
    %899 = vmatprep.subr.mxu0 0.0
    %900 = vmatpush1.msra.mxu0 %v871
    %901 = vmatprep.subr.mxu0 0.0
    %902 = vmatpush1.msra.mxu0 %v870
    %903 = vmatprep.subr.mxu0 0.0
    %904 = vmatpush1.msra.mxu0 %v869
    %905 = vmatprep.subr.mxu0 0.0
    %906 = vmatpush2.msra.mxu0 0.0
    %907 = vmatprep.subr.mxu0 0.0
    %908 = vmatpush2.msra.mxu0 0.0
    %909 = vmatprep.subr.mxu0 0.0
    %910 = vmatpush2.msra.mxu0 0.0
    %911 = vmatprep.subr.mxu0 0.0
    %912 = vmatpush2.msra.mxu0 0.0
    %913 = vmatprep.subr.mxu0 0.0
    %914 = vmatpush2.msra.mxu0 0.0
    %915 = vmatprep.subr.mxu0 0.0
    %916 = vmatpush2.msra.mxu0 0.0
    %917 = vmatprep.subr.mxu0 0.0
    %918 = vmatpush2.msra.mxu0 0.0
    %919 = vmatprep.subr.mxu0 0.0
    %920 = vmatpush2.msra.mxu0 0.0
    %921 = vmatprep.subr.mxu0 0.0
    %922 = vmatpush2.msra.mxu0 0.0
    %923 = vmatprep.subr.mxu0 0.0
    %924 = vmatpush2.msra.mxu0 0.0
    %925 = vmatprep.subr.mxu0 0.0
    %926 = vmatpush2.msra.mxu0 0.0
    %927 = vmatprep.subr.mxu0 0.0
    %928 = vmatpush2.msra.mxu0 0.0
    %929 = vmatprep.subr.mxu0 0.0
    %930 = vmatpush2.msra.mxu0 0.0
    %931 = vmatprep.subr.mxu0 0.0
    %932 = vmatpush2.msra.mxu0 0.0
    %933 = vmatprep.subr.mxu0 0.0
    %934 = vmatpush2.msra.mxu0 0.0
    %935 = vmatprep.subr.mxu0 0.0
    %936 = vmatpush2.msra.mxu0 0.0
    %937 = vmatprep.mubr.f32.mxu0 0.0
    %938 = vmatmul.mubr.f32.gmra.mxu0 %v705
    %v939 = vpop.f32.mrf.mxu0
    %v940 = vadd.f32 0.0, %v939
    %v941 = vpop.f32.mrf.mxu0
    %942 = vmatprep.mubr.f32.mxu0 0.0
    %943 = vmatmul.mubr.f32.gmra.mxu0 %v708
    %v944 = vpop.f32.mrf.mxu0
    %v945 = vadd.f32 0.0, %v944
    %v946 = vpop.f32.mrf.mxu0
    %947 = vdwg.mxu0
    %v949 = vsel %vm179, %v940, 0
    %v952 = vsel %vm179, %v945, 0
    %954 = vmatprep.subr.mxu0 0.0
    %955 = vmatpush1.msra.mxu0 0.0
    %956 = vmatprep.subr.mxu0 0.0
    %957 = vmatpush1.msra.mxu0 0.0
    %958 = vmatprep.subr.mxu0 0.0
    %959 = vmatpush1.msra.mxu0 0.0
    %960 = vmatprep.subr.mxu0 0.0
    %961 = vmatpush1.msra.mxu0 0.0
    %962 = vmatprep.subr.mxu0 0.0
    %963 = vmatpush1.msra.mxu0 0.0
    %964 = vmatprep.subr.mxu0 0.0
    %965 = vmatpush1.msra.mxu0 0.0
    %966 = vmatprep.subr.mxu0 0.0
    %967 = vmatpush1.msra.mxu0 0.0
    %968 = vmatprep.subr.mxu0 0.0
    %969 = vmatpush1.msra.mxu0 0.0
    %970 = vmatprep.subr.mxu0 0.0
    %971 = vmatpush1.msra.mxu0 0.0
    %972 = vmatprep.subr.mxu0 0.0
    %973 = vmatpush1.msra.mxu0 0.0
    %974 = vmatprep.subr.mxu0 0.0
    %975 = vmatpush1.msra.mxu0 0.0
    %976 = vmatprep.subr.mxu0 0.0
    %977 = vmatpush1.msra.mxu0 0.0
    %978 = vmatprep.subr.mxu0 0.0
    %979 = vmatpush1.msra.mxu0 %v699
    %980 = vmatprep.subr.mxu0 0.0
    %981 = vmatpush1.msra.mxu0 %v698
    %982 = vmatprep.subr.mxu0 0.0
    %983 = vmatpush1.msra.mxu0 %v697
    %984 = vmatprep.subr.mxu0 0.0
    %985 = vmatpush1.msra.mxu0 %v696
    %986 = vmatprep.subr.mxu0 0.0
    %987 = vmatpush2.msra.mxu0 0.0
    %988 = vmatprep.subr.mxu0 0.0
    %989 = vmatpush2.msra.mxu0 0.0
    %990 = vmatprep.subr.mxu0 0.0
    %991 = vmatpush2.msra.mxu0 0.0
    %992 = vmatprep.subr.mxu0 0.0
    %993 = vmatpush2.msra.mxu0 0.0
    %994 = vmatprep.subr.mxu0 0.0
    %995 = vmatpush2.msra.mxu0 0.0
    %996 = vmatprep.subr.mxu0 0.0
    %997 = vmatpush2.msra.mxu0 0.0
    %998 = vmatprep.subr.mxu0 0.0
    %999 = vmatpush2.msra.mxu0 0.0
    %1000 = vmatprep.subr.mxu0 0.0
    %1001 = vmatpush2.msra.mxu0 0.0
    %1002 = vmatprep.subr.mxu0 0.0
    %1003 = vmatpush2.msra.mxu0 0.0
    %1004 = vmatprep.subr.mxu0 0.0
    %1005 = vmatpush2.msra.mxu0 0.0
    %1006 = vmatprep.subr.mxu0 0.0
    %1007 = vmatpush2.msra.mxu0 0.0
    %1008 = vmatprep.subr.mxu0 0.0
    %1009 = vmatpush2.msra.mxu0 0.0
    %1010 = vmatprep.subr.mxu0 0.0
    %1011 = vmatpush2.msra.mxu0 0.0
    %1012 = vmatprep.subr.mxu0 0.0
    %1013 = vmatpush2.msra.mxu0 0.0
    %1014 = vmatprep.subr.mxu0 0.0
    %1015 = vmatpush2.msra.mxu0 0.0
    %1016 = vmatprep.subr.mxu0 0.0
    %1017 = vmatpush2.msra.mxu0 0.0
    %1018 = vmatprep.mubr.f32.mxu0 0.0
    %1019 = vmatmul.mubr.f32.gmra.mxu0 %v949
    %v1020 = vpop.f32.mrf.mxu0
    %v1021 = vadd.f32 0.0, %v1020
    %v1022 = vpop.f32.mrf.mxu0
    %1023 = vmatprep.mubr.f32.mxu0 0.0
    %1024 = vmatmul.mubr.f32.gmra.mxu0 %v952
    %v1025 = vpop.f32.mrf.mxu0
    %v1026 = vadd.f32 0.0, %v1025
    %v1027 = vpop.f32.mrf.mxu0
    %1028 = vdwg.mxu0
    %s1029 = scalar_lea.vmem [#allocation7], 16
    %1030 = vst [vmem:[%s1029] sm:$0xff] %v1021
    %1031 = vst [vmem:[%s1029 + $0x8] sm:$0xff] %v1026
    %s1032 = scalar_lea.vmem [#allocation4], 64
    %v1033 = vld [vmem:[%s1032] sm:$0xff]
    %v1034 = vld [vmem:[%s1032 + $0x8] sm:$0xff]
    %v1035 = vld [vmem:[%s1032 + $0x10] sm:$0xff]
    %v1036 = vld [vmem:[%s1032 + $0x18] sm:$0xff]
    %1037 = vmatprep.subr.mxu0 0.0
    %1038 = vmatpush1.msra.mxu0 0.0
    %1039 = vmatprep.subr.mxu0 0.0
    %1040 = vmatpush1.msra.mxu0 0.0
    %1041 = vmatprep.subr.mxu0 0.0
    %1042 = vmatpush1.msra.mxu0 0.0
    %1043 = vmatprep.subr.mxu0 0.0
    %1044 = vmatpush1.msra.mxu0 0.0
    %1045 = vmatprep.subr.mxu0 0.0
    %1046 = vmatpush1.msra.mxu0 0.0
    %1047 = vmatprep.subr.mxu0 0.0
    %1048 = vmatpush1.msra.mxu0 0.0
    %1049 = vmatprep.subr.mxu0 0.0
    %1050 = vmatpush1.msra.mxu0 0.0
    %1051 = vmatprep.subr.mxu0 0.0
    %1052 = vmatpush1.msra.mxu0 0.0
    %1053 = vmatprep.subr.mxu0 0.0
    %1054 = vmatpush1.msra.mxu0 0.0
    %1055 = vmatprep.subr.mxu0 0.0
    %1056 = vmatpush1.msra.mxu0 0.0
    %1057 = vmatprep.subr.mxu0 0.0
    %1058 = vmatpush1.msra.mxu0 0.0
    %1059 = vmatprep.subr.mxu0 0.0
    %1060 = vmatpush1.msra.mxu0 0.0
    %1061 = vmatprep.subr.mxu0 0.0
    %1062 = vmatpush1.msra.mxu0 %v1036
    %1063 = vmatprep.subr.mxu0 0.0
    %1064 = vmatpush1.msra.mxu0 %v1035
    %1065 = vmatprep.subr.mxu0 0.0
    %1066 = vmatpush1.msra.mxu0 %v1034
    %1067 = vmatprep.subr.mxu0 0.0
    %1068 = vmatpush1.msra.mxu0 %v1033
    %1069 = vmatprep.subr.mxu0 0.0
    %1070 = vmatpush2.msra.mxu0 0.0
    %1071 = vmatprep.subr.mxu0 0.0
    %1072 = vmatpush2.msra.mxu0 0.0
    %1073 = vmatprep.subr.mxu0 0.0
    %1074 = vmatpush2.msra.mxu0 0.0
    %1075 = vmatprep.subr.mxu0 0.0
    %1076 = vmatpush2.msra.mxu0 0.0
    %1077 = vmatprep.subr.mxu0 0.0
    %1078 = vmatpush2.msra.mxu0 0.0
    %1079 = vmatprep.subr.mxu0 0.0
    %1080 = vmatpush2.msra.mxu0 0.0
    %1081 = vmatprep.subr.mxu0 0.0
    %1082 = vmatpush2.msra.mxu0 0.0
    %1083 = vmatprep.subr.mxu0 0.0
    %1084 = vmatpush2.msra.mxu0 0.0
    %1085 = vmatprep.subr.mxu0 0.0
    %1086 = vmatpush2.msra.mxu0 0.0
    %1087 = vmatprep.subr.mxu0 0.0
    %1088 = vmatpush2.msra.mxu0 0.0
    %1089 = vmatprep.subr.mxu0 0.0
    %1090 = vmatpush2.msra.mxu0 0.0
    %1091 = vmatprep.subr.mxu0 0.0
    %1092 = vmatpush2.msra.mxu0 0.0
    %1093 = vmatprep.subr.mxu0 0.0
    %1094 = vmatpush2.msra.mxu0 0.0
    %1095 = vmatprep.subr.mxu0 0.0
    %1096 = vmatpush2.msra.mxu0 0.0
    %1097 = vmatprep.subr.mxu0 0.0
    %1098 = vmatpush2.msra.mxu0 0.0
    %1099 = vmatprep.subr.mxu0 0.0
    %1100 = vmatpush2.msra.mxu0 0.0
    %1101 = vmatprep.mubr.f32.mxu0 0.0
    %1102 = vmatmul.mubr.f32.gmra.mxu0 %v705
    %v1103 = vpop.f32.mrf.mxu0
    %v1104 = vadd.f32 0.0, %v1103
    %v1105 = vpop.f32.mrf.mxu0
    %1106 = vmatprep.mubr.f32.mxu0 0.0
    %1107 = vmatmul.mubr.f32.gmra.mxu0 %v708
    %v1108 = vpop.f32.mrf.mxu0
    %v1109 = vadd.f32 0.0, %v1108
    %v1110 = vpop.f32.mrf.mxu0
    %1111 = vdwg.mxu0
    %v1113 = vsel %vm179, %v1104, 0
    %v1116 = vsel %vm179, %v1109, 0
    %1118 = vmatprep.subr.mxu0 0.0
    %1119 = vmatpush1.msra.mxu0 0.0
    %1120 = vmatprep.subr.mxu0 0.0
    %1121 = vmatpush1.msra.mxu0 0.0
    %1122 = vmatprep.subr.mxu0 0.0
    %1123 = vmatpush1.msra.mxu0 0.0
    %1124 = vmatprep.subr.mxu0 0.0
    %1125 = vmatpush1.msra.mxu0 0.0
    %1126 = vmatprep.subr.mxu0 0.0
    %1127 = vmatpush1.msra.mxu0 0.0
    %1128 = vmatprep.subr.mxu0 0.0
    %1129 = vmatpush1.msra.mxu0 0.0
    %1130 = vmatprep.subr.mxu0 0.0
    %1131 = vmatpush1.msra.mxu0 0.0
    %1132 = vmatprep.subr.mxu0 0.0
    %1133 = vmatpush1.msra.mxu0 0.0
    %1134 = vmatprep.subr.mxu0 0.0
    %1135 = vmatpush1.msra.mxu0 0.0
    %1136 = vmatprep.subr.mxu0 0.0
    %1137 = vmatpush1.msra.mxu0 0.0
    %1138 = vmatprep.subr.mxu0 0.0
    %1139 = vmatpush1.msra.mxu0 0.0
    %1140 = vmatprep.subr.mxu0 0.0
    %1141 = vmatpush1.msra.mxu0 0.0
    %1142 = vmatprep.subr.mxu0 0.0
    %1143 = vmatpush1.msra.mxu0 %v699
    %1144 = vmatprep.subr.mxu0 0.0
    %1145 = vmatpush1.msra.mxu0 %v698
    %1146 = vmatprep.subr.mxu0 0.0
    %1147 = vmatpush1.msra.mxu0 %v697
    %1148 = vmatprep.subr.mxu0 0.0
    %1149 = vmatpush1.msra.mxu0 %v696
    %1150 = vmatprep.subr.mxu0 0.0
    %1151 = vmatpush2.msra.mxu0 0.0
    %1152 = vmatprep.subr.mxu0 0.0
    %1153 = vmatpush2.msra.mxu0 0.0
    %1154 = vmatprep.subr.mxu0 0.0
    %1155 = vmatpush2.msra.mxu0 0.0
    %1156 = vmatprep.subr.mxu0 0.0
    %1157 = vmatpush2.msra.mxu0 0.0
    %1158 = vmatprep.subr.mxu0 0.0
    %1159 = vmatpush2.msra.mxu0 0.0
    %1160 = vmatprep.subr.mxu0 0.0
    %1161 = vmatpush2.msra.mxu0 0.0
    %1162 = vmatprep.subr.mxu0 0.0
    %1163 = vmatpush2.msra.mxu0 0.0
    %1164 = vmatprep.subr.mxu0 0.0
    %1165 = vmatpush2.msra.mxu0 0.0
    %1166 = vmatprep.subr.mxu0 0.0
    %1167 = vmatpush2.msra.mxu0 0.0
    %1168 = vmatprep.subr.mxu0 0.0
    %1169 = vmatpush2.msra.mxu0 0.0
    %1170 = vmatprep.subr.mxu0 0.0
    %1171 = vmatpush2.msra.mxu0 0.0
    %1172 = vmatprep.subr.mxu0 0.0
    %1173 = vmatpush2.msra.mxu0 0.0
    %1174 = vmatprep.subr.mxu0 0.0
    %1175 = vmatpush2.msra.mxu0 0.0
    %1176 = vmatprep.subr.mxu0 0.0
    %1177 = vmatpush2.msra.mxu0 0.0
    %1178 = vmatprep.subr.mxu0 0.0
    %1179 = vmatpush2.msra.mxu0 0.0
    %1180 = vmatprep.subr.mxu0 0.0
    %1181 = vmatpush2.msra.mxu0 0.0
    %1182 = vmatprep.mubr.f32.mxu0 0.0
    %1183 = vmatmul.mubr.f32.gmra.mxu0 %v1113
    %v1184 = vpop.f32.mrf.mxu0
    %v1185 = vadd.f32 0.0, %v1184
    %v1186 = vpop.f32.mrf.mxu0
    %1187 = vmatprep.mubr.f32.mxu0 0.0
    %1188 = vmatmul.mubr.f32.gmra.mxu0 %v1116
    %v1189 = vpop.f32.mrf.mxu0
    %v1190 = vadd.f32 0.0, %v1189
    %v1191 = vpop.f32.mrf.mxu0
    %1192 = vdwg.mxu0
    %s1193 = scalar_lea.vmem [#allocation7], 32
    %1194 = vst [vmem:[%s1193] sm:$0xff] %v1185
    %1195 = vst [vmem:[%s1193 + $0x8] sm:$0xff] %v1190
    %s1196 = scalar_lea.vmem [#allocation4], 96
    %v1197 = vld [vmem:[%s1196] sm:$0xff]
    %v1198 = vld [vmem:[%s1196 + $0x8] sm:$0xff]
    %v1199 = vld [vmem:[%s1196 + $0x10] sm:$0xff]
    %v1200 = vld [vmem:[%s1196 + $0x18] sm:$0xff]
    %1201 = vmatprep.subr.mxu0 0.0
    %1202 = vmatpush1.msra.mxu0 0.0
    %1203 = vmatprep.subr.mxu0 0.0
    %1204 = vmatpush1.msra.mxu0 0.0
    %1205 = vmatprep.subr.mxu0 0.0
    %1206 = vmatpush1.msra.mxu0 0.0
    %1207 = vmatprep.subr.mxu0 0.0
    %1208 = vmatpush1.msra.mxu0 0.0
    %1209 = vmatprep.subr.mxu0 0.0
    %1210 = vmatpush1.msra.mxu0 0.0
    %1211 = vmatprep.subr.mxu0 0.0
    %1212 = vmatpush1.msra.mxu0 0.0
    %1213 = vmatprep.subr.mxu0 0.0
    %1214 = vmatpush1.msra.mxu0 0.0
    %1215 = vmatprep.subr.mxu0 0.0
    %1216 = vmatpush1.msra.mxu0 0.0
    %1217 = vmatprep.subr.mxu0 0.0
    %1218 = vmatpush1.msra.mxu0 0.0
    %1219 = vmatprep.subr.mxu0 0.0
    %1220 = vmatpush1.msra.mxu0 0.0
    %1221 = vmatprep.subr.mxu0 0.0
    %1222 = vmatpush1.msra.mxu0 0.0
    %1223 = vmatprep.subr.mxu0 0.0
    %1224 = vmatpush1.msra.mxu0 0.0
    %1225 = vmatprep.subr.mxu0 0.0
    %1226 = vmatpush1.msra.mxu0 %v1200
    %1227 = vmatprep.subr.mxu0 0.0
    %1228 = vmatpush1.msra.mxu0 %v1199
    %1229 = vmatprep.subr.mxu0 0.0
    %1230 = vmatpush1.msra.mxu0 %v1198
    %1231 = vmatprep.subr.mxu0 0.0
    %1232 = vmatpush1.msra.mxu0 %v1197
    %1233 = vmatprep.subr.mxu0 0.0
    %1234 = vmatpush2.msra.mxu0 0.0
    %1235 = vmatprep.subr.mxu0 0.0
    %1236 = vmatpush2.msra.mxu0 0.0
    %1237 = vmatprep.subr.mxu0 0.0
    %1238 = vmatpush2.msra.mxu0 0.0
    %1239 = vmatprep.subr.mxu0 0.0
    %1240 = vmatpush2.msra.mxu0 0.0
    %1241 = vmatprep.subr.mxu0 0.0
    %1242 = vmatpush2.msra.mxu0 0.0
    %1243 = vmatprep.subr.mxu0 0.0
    %1244 = vmatpush2.msra.mxu0 0.0
    %1245 = vmatprep.subr.mxu0 0.0
    %1246 = vmatpush2.msra.mxu0 0.0
    %1247 = vmatprep.subr.mxu0 0.0
    %1248 = vmatpush2.msra.mxu0 0.0
    %1249 = vmatprep.subr.mxu0 0.0
    %1250 = vmatpush2.msra.mxu0 0.0
    %1251 = vmatprep.subr.mxu0 0.0
    %1252 = vmatpush2.msra.mxu0 0.0
    %1253 = vmatprep.subr.mxu0 0.0
    %1254 = vmatpush2.msra.mxu0 0.0
    %1255 = vmatprep.subr.mxu0 0.0
    %1256 = vmatpush2.msra.mxu0 0.0
    %1257 = vmatprep.subr.mxu0 0.0
    %1258 = vmatpush2.msra.mxu0 0.0
    %1259 = vmatprep.subr.mxu0 0.0
    %1260 = vmatpush2.msra.mxu0 0.0
    %1261 = vmatprep.subr.mxu0 0.0
    %1262 = vmatpush2.msra.mxu0 0.0
    %1263 = vmatprep.subr.mxu0 0.0
    %1264 = vmatpush2.msra.mxu0 0.0
    %1265 = vmatprep.mubr.f32.mxu0 0.0
    %1266 = vmatmul.mubr.f32.gmra.mxu0 %v705
    %v1267 = vpop.f32.mrf.mxu0
    %v1268 = vadd.f32 0.0, %v1267
    %v1269 = vpop.f32.mrf.mxu0
    %1270 = vmatprep.mubr.f32.mxu0 0.0
    %1271 = vmatmul.mubr.f32.gmra.mxu0 %v708
    %v1272 = vpop.f32.mrf.mxu0
    %v1273 = vadd.f32 0.0, %v1272
    %v1274 = vpop.f32.mrf.mxu0
    %1275 = vdwg.mxu0
    %v1277 = vsel %vm179, %v1268, 0
    %v1280 = vsel %vm179, %v1273, 0
    %1282 = vmatprep.subr.mxu0 0.0
    %1283 = vmatpush1.msra.mxu0 0.0
    %1284 = vmatprep.subr.mxu0 0.0
    %1285 = vmatpush1.msra.mxu0 0.0
    %1286 = vmatprep.subr.mxu0 0.0
    %1287 = vmatpush1.msra.mxu0 0.0
    %1288 = vmatprep.subr.mxu0 0.0
    %1289 = vmatpush1.msra.mxu0 0.0
    %1290 = vmatprep.subr.mxu0 0.0
    %1291 = vmatpush1.msra.mxu0 0.0
    %1292 = vmatprep.subr.mxu0 0.0
    %1293 = vmatpush1.msra.mxu0 0.0
    %1294 = vmatprep.subr.mxu0 0.0
    %1295 = vmatpush1.msra.mxu0 0.0
    %1296 = vmatprep.subr.mxu0 0.0
    %1297 = vmatpush1.msra.mxu0 0.0
    %1298 = vmatprep.subr.mxu0 0.0
    %1299 = vmatpush1.msra.mxu0 0.0
    %1300 = vmatprep.subr.mxu0 0.0
    %1301 = vmatpush1.msra.mxu0 0.0
    %1302 = vmatprep.subr.mxu0 0.0
    %1303 = vmatpush1.msra.mxu0 0.0
    %1304 = vmatprep.subr.mxu0 0.0
    %1305 = vmatpush1.msra.mxu0 0.0
    %1306 = vmatprep.subr.mxu0 0.0
    %1307 = vmatpush1.msra.mxu0 %v699
    %1308 = vmatprep.subr.mxu0 0.0
    %1309 = vmatpush1.msra.mxu0 %v698
    %1310 = vmatprep.subr.mxu0 0.0
    %1311 = vmatpush1.msra.mxu0 %v697
    %1312 = vmatprep.subr.mxu0 0.0
    %1313 = vmatpush1.msra.mxu0 %v696
    %1314 = vmatprep.subr.mxu0 0.0
    %1315 = vmatpush2.msra.mxu0 0.0
    %1316 = vmatprep.subr.mxu0 0.0
    %1317 = vmatpush2.msra.mxu0 0.0
    %1318 = vmatprep.subr.mxu0 0.0
    %1319 = vmatpush2.msra.mxu0 0.0
    %1320 = vmatprep.subr.mxu0 0.0
    %1321 = vmatpush2.msra.mxu0 0.0
    %1322 = vmatprep.subr.mxu0 0.0
    %1323 = vmatpush2.msra.mxu0 0.0
    %1324 = vmatprep.subr.mxu0 0.0
    %1325 = vmatpush2.msra.mxu0 0.0
    %1326 = vmatprep.subr.mxu0 0.0
    %1327 = vmatpush2.msra.mxu0 0.0
    %1328 = vmatprep.subr.mxu0 0.0
    %1329 = vmatpush2.msra.mxu0 0.0
    %1330 = vmatprep.subr.mxu0 0.0
    %1331 = vmatpush2.msra.mxu0 0.0
    %1332 = vmatprep.subr.mxu0 0.0
    %1333 = vmatpush2.msra.mxu0 0.0
    %1334 = vmatprep.subr.mxu0 0.0
    %1335 = vmatpush2.msra.mxu0 0.0
    %1336 = vmatprep.subr.mxu0 0.0
    %1337 = vmatpush2.msra.mxu0 0.0
    %1338 = vmatprep.subr.mxu0 0.0
    %1339 = vmatpush2.msra.mxu0 0.0
    %1340 = vmatprep.subr.mxu0 0.0
    %1341 = vmatpush2.msra.mxu0 0.0
    %1342 = vmatprep.subr.mxu0 0.0
    %1343 = vmatpush2.msra.mxu0 0.0
    %1344 = vmatprep.subr.mxu0 0.0
    %1345 = vmatpush2.msra.mxu0 0.0
    %1346 = vmatprep.mubr.f32.mxu0 0.0
    %1347 = vmatmul.mubr.f32.gmra.mxu0 %v1277
    %v1348 = vpop.f32.mrf.mxu0
    %v1349 = vadd.f32 0.0, %v1348
    %v1350 = vpop.f32.mrf.mxu0
    %1351 = vmatprep.mubr.f32.mxu0 0.0
    %1352 = vmatmul.mubr.f32.gmra.mxu0 %v1280
    %v1353 = vpop.f32.mrf.mxu0
    %v1354 = vadd.f32 0.0, %v1353
    %v1355 = vpop.f32.mrf.mxu0
    %1356 = vdwg.mxu0
    %s1357 = scalar_lea.vmem [#allocation7], 48
    %1358 = vst [vmem:[%s1357] sm:$0xff] %v1349
    %1359 = vst [vmem:[%s1357 + $0x8] sm:$0xff] %v1354
    %s1360 = scalar_lea.vmem [#allocation4], 128
    %v1361 = vld [vmem:[%s1360] sm:$0xff]
    %v1362 = vld [vmem:[%s1360 + $0x8] sm:$0xff]
    %v1363 = vld [vmem:[%s1360 + $0x10] sm:$0xff]
    %v1364 = vld [vmem:[%s1360 + $0x18] sm:$0xff]
    %1365 = vmatprep.subr.mxu0 0.0
    %1366 = vmatpush1.msra.mxu0 0.0
    %1367 = vmatprep.subr.mxu0 0.0
    %1368 = vmatpush1.msra.mxu0 0.0
    %1369 = vmatprep.subr.mxu0 0.0
    %1370 = vmatpush1.msra.mxu0 0.0
    %1371 = vmatprep.subr.mxu0 0.0
    %1372 = vmatpush1.msra.mxu0 0.0
    %1373 = vmatprep.subr.mxu0 0.0
    %1374 = vmatpush1.msra.mxu0 0.0
    %1375 = vmatprep.subr.mxu0 0.0
    %1376 = vmatpush1.msra.mxu0 0.0
    %1377 = vmatprep.subr.mxu0 0.0
    %1378 = vmatpush1.msra.mxu0 0.0
    %1379 = vmatprep.subr.mxu0 0.0
    %1380 = vmatpush1.msra.mxu0 0.0
    %1381 = vmatprep.subr.mxu0 0.0
    %1382 = vmatpush1.msra.mxu0 0.0
    %1383 = vmatprep.subr.mxu0 0.0
    %1384 = vmatpush1.msra.mxu0 0.0
    %1385 = vmatprep.subr.mxu0 0.0
    %1386 = vmatpush1.msra.mxu0 0.0
    %1387 = vmatprep.subr.mxu0 0.0
    %1388 = vmatpush1.msra.mxu0 0.0
    %1389 = vmatprep.subr.mxu0 0.0
    %1390 = vmatpush1.msra.mxu0 %v1364
    %1391 = vmatprep.subr.mxu0 0.0
    %1392 = vmatpush1.msra.mxu0 %v1363
    %1393 = vmatprep.subr.mxu0 0.0
    %1394 = vmatpush1.msra.mxu0 %v1362
    %1395 = vmatprep.subr.mxu0 0.0
    %1396 = vmatpush1.msra.mxu0 %v1361
    %1397 = vmatprep.subr.mxu0 0.0
    %1398 = vmatpush2.msra.mxu0 0.0
    %1399 = vmatprep.subr.mxu0 0.0
    %1400 = vmatpush2.msra.mxu0 0.0
    %1401 = vmatprep.subr.mxu0 0.0
    %1402 = vmatpush2.msra.mxu0 0.0
    %1403 = vmatprep.subr.mxu0 0.0
    %1404 = vmatpush2.msra.mxu0 0.0
    %1405 = vmatprep.subr.mxu0 0.0
    %1406 = vmatpush2.msra.mxu0 0.0
    %1407 = vmatprep.subr.mxu0 0.0
    %1408 = vmatpush2.msra.mxu0 0.0
    %1409 = vmatprep.subr.mxu0 0.0
    %1410 = vmatpush2.msra.mxu0 0.0
    %1411 = vmatprep.subr.mxu0 0.0
    %1412 = vmatpush2.msra.mxu0 0.0
    %1413 = vmatprep.subr.mxu0 0.0
    %1414 = vmatpush2.msra.mxu0 0.0
    %1415 = vmatprep.subr.mxu0 0.0
    %1416 = vmatpush2.msra.mxu0 0.0
    %1417 = vmatprep.subr.mxu0 0.0
    %1418 = vmatpush2.msra.mxu0 0.0
    %1419 = vmatprep.subr.mxu0 0.0
    %1420 = vmatpush2.msra.mxu0 0.0
    %1421 = vmatprep.subr.mxu0 0.0
    %1422 = vmatpush2.msra.mxu0 0.0
    %1423 = vmatprep.subr.mxu0 0.0
    %1424 = vmatpush2.msra.mxu0 0.0
    %1425 = vmatprep.subr.mxu0 0.0
    %1426 = vmatpush2.msra.mxu0 0.0
    %1427 = vmatprep.subr.mxu0 0.0
    %1428 = vmatpush2.msra.mxu0 0.0
    %1429 = vmatprep.mubr.f32.mxu0 0.0
    %1430 = vmatmul.mubr.f32.gmra.mxu0 %v705
    %v1431 = vpop.f32.mrf.mxu0
    %v1432 = vadd.f32 0.0, %v1431
    %v1433 = vpop.f32.mrf.mxu0
    %1434 = vmatprep.mubr.f32.mxu0 0.0
    %1435 = vmatmul.mubr.f32.gmra.mxu0 %v708
    %v1436 = vpop.f32.mrf.mxu0
    %v1437 = vadd.f32 0.0, %v1436
    %v1438 = vpop.f32.mrf.mxu0
    %1439 = vdwg.mxu0
    %v1441 = vsel %vm179, %v1432, 0
    %v1444 = vsel %vm179, %v1437, 0
    %1446 = vmatprep.subr.mxu0 0.0
    %1447 = vmatpush1.msra.mxu0 0.0
    %1448 = vmatprep.subr.mxu0 0.0
    %1449 = vmatpush1.msra.mxu0 0.0
    %1450 = vmatprep.subr.mxu0 0.0
    %1451 = vmatpush1.msra.mxu0 0.0
    %1452 = vmatprep.subr.mxu0 0.0
    %1453 = vmatpush1.msra.mxu0 0.0
    %1454 = vmatprep.subr.mxu0 0.0
    %1455 = vmatpush1.msra.mxu0 0.0
    %1456 = vmatprep.subr.mxu0 0.0
    %1457 = vmatpush1.msra.mxu0 0.0
    %1458 = vmatprep.subr.mxu0 0.0
    %1459 = vmatpush1.msra.mxu0 0.0
    %1460 = vmatprep.subr.mxu0 0.0
    %1461 = vmatpush1.msra.mxu0 0.0
    %1462 = vmatprep.subr.mxu0 0.0
    %1463 = vmatpush1.msra.mxu0 0.0
    %1464 = vmatprep.subr.mxu0 0.0
    %1465 = vmatpush1.msra.mxu0 0.0
    %1466 = vmatprep.subr.mxu0 0.0
    %1467 = vmatpush1.msra.mxu0 0.0
    %1468 = vmatprep.subr.mxu0 0.0
    %1469 = vmatpush1.msra.mxu0 0.0
    %1470 = vmatprep.subr.mxu0 0.0
    %1471 = vmatpush1.msra.mxu0 %v699
    %1472 = vmatprep.subr.mxu0 0.0
    %1473 = vmatpush1.msra.mxu0 %v698
    %1474 = vmatprep.subr.mxu0 0.0
    %1475 = vmatpush1.msra.mxu0 %v697
    %1476 = vmatprep.subr.mxu0 0.0
    %1477 = vmatpush1.msra.mxu0 %v696
    %1478 = vmatprep.subr.mxu0 0.0
    %1479 = vmatpush2.msra.mxu0 0.0
    %1480 = vmatprep.subr.mxu0 0.0
    %1481 = vmatpush2.msra.mxu0 0.0
    %1482 = vmatprep.subr.mxu0 0.0
    %1483 = vmatpush2.msra.mxu0 0.0
    %1484 = vmatprep.subr.mxu0 0.0
    %1485 = vmatpush2.msra.mxu0 0.0
    %1486 = vmatprep.subr.mxu0 0.0
    %1487 = vmatpush2.msra.mxu0 0.0
    %1488 = vmatprep.subr.mxu0 0.0
    %1489 = vmatpush2.msra.mxu0 0.0
    %1490 = vmatprep.subr.mxu0 0.0
    %1491 = vmatpush2.msra.mxu0 0.0
    %1492 = vmatprep.subr.mxu0 0.0
    %1493 = vmatpush2.msra.mxu0 0.0
    %1494 = vmatprep.subr.mxu0 0.0
    %1495 = vmatpush2.msra.mxu0 0.0
    %1496 = vmatprep.subr.mxu0 0.0
    %1497 = vmatpush2.msra.mxu0 0.0
    %1498 = vmatprep.subr.mxu0 0.0
    %1499 = vmatpush2.msra.mxu0 0.0
    %1500 = vmatprep.subr.mxu0 0.0
    %1501 = vmatpush2.msra.mxu0 0.0
    %1502 = vmatprep.subr.mxu0 0.0
    %1503 = vmatpush2.msra.mxu0 0.0
    %1504 = vmatprep.subr.mxu0 0.0
    %1505 = vmatpush2.msra.mxu0 0.0
    %1506 = vmatprep.subr.mxu0 0.0
    %1507 = vmatpush2.msra.mxu0 0.0
    %1508 = vmatprep.subr.mxu0 0.0
    %1509 = vmatpush2.msra.mxu0 0.0
    %1510 = vmatprep.mubr.f32.mxu0 0.0
    %1511 = vmatmul.mubr.f32.gmra.mxu0 %v1441
    %v1512 = vpop.f32.mrf.mxu0
    %v1513 = vadd.f32 0.0, %v1512
    %v1514 = vpop.f32.mrf.mxu0
    %1515 = vmatprep.mubr.f32.mxu0 0.0
    %1516 = vmatmul.mubr.f32.gmra.mxu0 %v1444
    %v1517 = vpop.f32.mrf.mxu0
    %v1518 = vadd.f32 0.0, %v1517
    %v1519 = vpop.f32.mrf.mxu0
    %1520 = vdwg.mxu0
    %s1521 = scalar_lea.vmem [#allocation7], 64
    %1522 = vst [vmem:[%s1521] sm:$0xff] %v1513
    %1523 = vst [vmem:[%s1521 + $0x8] sm:$0xff] %v1518
    %s1524 = scalar_lea.vmem [#allocation4], 160
    %v1525 = vld [vmem:[%s1524] sm:$0xff]
    %v1526 = vld [vmem:[%s1524 + $0x8] sm:$0xff]
    %v1527 = vld [vmem:[%s1524 + $0x10] sm:$0xff]
    %v1528 = vld [vmem:[%s1524 + $0x18] sm:$0xff]
    %1529 = vmatprep.subr.mxu0 0.0
    %1530 = vmatpush1.msra.mxu0 0.0
    %1531 = vmatprep.subr.mxu0 0.0
    %1532 = vmatpush1.msra.mxu0 0.0
    %1533 = vmatprep.subr.mxu0 0.0
    %1534 = vmatpush1.msra.mxu0 0.0
    %1535 = vmatprep.subr.mxu0 0.0
    %1536 = vmatpush1.msra.mxu0 0.0
    %1537 = vmatprep.subr.mxu0 0.0
    %1538 = vmatpush1.msra.mxu0 0.0
    %1539 = vmatprep.subr.mxu0 0.0
    %1540 = vmatpush1.msra.mxu0 0.0
    %1541 = vmatprep.subr.mxu0 0.0
    %1542 = vmatpush1.msra.mxu0 0.0
    %1543 = vmatprep.subr.mxu0 0.0
    %1544 = vmatpush1.msra.mxu0 0.0
    %1545 = vmatprep.subr.mxu0 0.0
    %1546 = vmatpush1.msra.mxu0 0.0
    %1547 = vmatprep.subr.mxu0 0.0
    %1548 = vmatpush1.msra.mxu0 0.0
    %1549 = vmatprep.subr.mxu0 0.0
    %1550 = vmatpush1.msra.mxu0 0.0
    %1551 = vmatprep.subr.mxu0 0.0
    %1552 = vmatpush1.msra.mxu0 0.0
    %1553 = vmatprep.subr.mxu0 0.0
    %1554 = vmatpush1.msra.mxu0 %v1528
    %1555 = vmatprep.subr.mxu0 0.0
    %1556 = vmatpush1.msra.mxu0 %v1527
    %1557 = vmatprep.subr.mxu0 0.0
    %1558 = vmatpush1.msra.mxu0 %v1526
    %1559 = vmatprep.subr.mxu0 0.0
    %1560 = vmatpush1.msra.mxu0 %v1525
    %1561 = vmatprep.subr.mxu0 0.0
    %1562 = vmatpush2.msra.mxu0 0.0
    %1563 = vmatprep.subr.mxu0 0.0
    %1564 = vmatpush2.msra.mxu0 0.0
    %1565 = vmatprep.subr.mxu0 0.0
    %1566 = vmatpush2.msra.mxu0 0.0
    %1567 = vmatprep.subr.mxu0 0.0
    %1568 = vmatpush2.msra.mxu0 0.0
    %1569 = vmatprep.subr.mxu0 0.0
    %1570 = vmatpush2.msra.mxu0 0.0
    %1571 = vmatprep.subr.mxu0 0.0
    %1572 = vmatpush2.msra.mxu0 0.0
    %1573 = vmatprep.subr.mxu0 0.0
    %1574 = vmatpush2.msra.mxu0 0.0
    %1575 = vmatprep.subr.mxu0 0.0
    %1576 = vmatpush2.msra.mxu0 0.0
    %1577 = vmatprep.subr.mxu0 0.0
    %1578 = vmatpush2.msra.mxu0 0.0
    %1579 = vmatprep.subr.mxu0 0.0
    %1580 = vmatpush2.msra.mxu0 0.0
    %1581 = vmatprep.subr.mxu0 0.0
    %1582 = vmatpush2.msra.mxu0 0.0
    %1583 = vmatprep.subr.mxu0 0.0
    %1584 = vmatpush2.msra.mxu0 0.0
    %1585 = vmatprep.subr.mxu0 0.0
    %1586 = vmatpush2.msra.mxu0 0.0
    %1587 = vmatprep.subr.mxu0 0.0
    %1588 = vmatpush2.msra.mxu0 0.0
    %1589 = vmatprep.subr.mxu0 0.0
    %1590 = vmatpush2.msra.mxu0 0.0
    %1591 = vmatprep.subr.mxu0 0.0
    %1592 = vmatpush2.msra.mxu0 0.0
    %1593 = vmatprep.mubr.f32.mxu0 0.0
    %1594 = vmatmul.mubr.f32.gmra.mxu0 %v705
    %v1595 = vpop.f32.mrf.mxu0
    %v1596 = vadd.f32 0.0, %v1595
    %v1597 = vpop.f32.mrf.mxu0
    %1598 = vmatprep.mubr.f32.mxu0 0.0
    %1599 = vmatmul.mubr.f32.gmra.mxu0 %v708
    %v1600 = vpop.f32.mrf.mxu0
    %v1601 = vadd.f32 0.0, %v1600
    %v1602 = vpop.f32.mrf.mxu0
    %1603 = vdwg.mxu0
    %v1605 = vsel %vm179, %v1596, 0
    %v1608 = vsel %vm179, %v1601, 0
    %1610 = vmatprep.subr.mxu0 0.0
    %1611 = vmatpush1.msra.mxu0 0.0
    %1612 = vmatprep.subr.mxu0 0.0
    %1613 = vmatpush1.msra.mxu0 0.0
    %1614 = vmatprep.subr.mxu0 0.0
    %1615 = vmatpush1.msra.mxu0 0.0
    %1616 = vmatprep.subr.mxu0 0.0
    %1617 = vmatpush1.msra.mxu0 0.0
    %1618 = vmatprep.subr.mxu0 0.0
    %1619 = vmatpush1.msra.mxu0 0.0
    %1620 = vmatprep.subr.mxu0 0.0
    %1621 = vmatpush1.msra.mxu0 0.0
    %1622 = vmatprep.subr.mxu0 0.0
    %1623 = vmatpush1.msra.mxu0 0.0
    %1624 = vmatprep.subr.mxu0 0.0
    %1625 = vmatpush1.msra.mxu0 0.0
    %1626 = vmatprep.subr.mxu0 0.0
    %1627 = vmatpush1.msra.mxu0 0.0
    %1628 = vmatprep.subr.mxu0 0.0
    %1629 = vmatpush1.msra.mxu0 0.0
    %1630 = vmatprep.subr.mxu0 0.0
    %1631 = vmatpush1.msra.mxu0 0.0
    %1632 = vmatprep.subr.mxu0 0.0
    %1633 = vmatpush1.msra.mxu0 0.0
    %1634 = vmatprep.subr.mxu0 0.0
    %1635 = vmatpush1.msra.mxu0 %v699
    %1636 = vmatprep.subr.mxu0 0.0
    %1637 = vmatpush1.msra.mxu0 %v698
    %1638 = vmatprep.subr.mxu0 0.0
    %1639 = vmatpush1.msra.mxu0 %v697
    %1640 = vmatprep.subr.mxu0 0.0
    %1641 = vmatpush1.msra.mxu0 %v696
    %1642 = vmatprep.subr.mxu0 0.0
    %1643 = vmatpush2.msra.mxu0 0.0
    %1644 = vmatprep.subr.mxu0 0.0
    %1645 = vmatpush2.msra.mxu0 0.0
    %1646 = vmatprep.subr.mxu0 0.0
    %1647 = vmatpush2.msra.mxu0 0.0
    %1648 = vmatprep.subr.mxu0 0.0
    %1649 = vmatpush2.msra.mxu0 0.0
    %1650 = vmatprep.subr.mxu0 0.0
    %1651 = vmatpush2.msra.mxu0 0.0
    %1652 = vmatprep.subr.mxu0 0.0
    %1653 = vmatpush2.msra.mxu0 0.0
    %1654 = vmatprep.subr.mxu0 0.0
    %1655 = vmatpush2.msra.mxu0 0.0
    %1656 = vmatprep.subr.mxu0 0.0
    %1657 = vmatpush2.msra.mxu0 0.0
    %1658 = vmatprep.subr.mxu0 0.0
    %1659 = vmatpush2.msra.mxu0 0.0
    %1660 = vmatprep.subr.mxu0 0.0
    %1661 = vmatpush2.msra.mxu0 0.0
    %1662 = vmatprep.subr.mxu0 0.0
    %1663 = vmatpush2.msra.mxu0 0.0
    %1664 = vmatprep.subr.mxu0 0.0
    %1665 = vmatpush2.msra.mxu0 0.0
    %1666 = vmatprep.subr.mxu0 0.0
    %1667 = vmatpush2.msra.mxu0 0.0
    %1668 = vmatprep.subr.mxu0 0.0
    %1669 = vmatpush2.msra.mxu0 0.0
    %1670 = vmatprep.subr.mxu0 0.0
    %1671 = vmatpush2.msra.mxu0 0.0
    %1672 = vmatprep.subr.mxu0 0.0
    %1673 = vmatpush2.msra.mxu0 0.0
    %1674 = vmatprep.mubr.f32.mxu0 0.0
    %1675 = vmatmul.mubr.f32.gmra.mxu0 %v1605
    %v1676 = vpop.f32.mrf.mxu0
    %v1677 = vadd.f32 0.0, %v1676
    %v1678 = vpop.f32.mrf.mxu0
    %1679 = vmatprep.mubr.f32.mxu0 0.0
    %1680 = vmatmul.mubr.f32.gmra.mxu0 %v1608
    %v1681 = vpop.f32.mrf.mxu0
    %v1682 = vadd.f32 0.0, %v1681
    %v1683 = vpop.f32.mrf.mxu0
    %1684 = vdwg.mxu0
    %s1685 = scalar_lea.vmem [#allocation7], 80
    %1686 = vst [vmem:[%s1685] sm:$0xff] %v1677
    %1687 = vst [vmem:[%s1685 + $0x8] sm:$0xff] %v1682
    %s1688 = scalar_lea.vmem [#allocation4], 192
    %v1689 = vld [vmem:[%s1688] sm:$0xff]
    %v1690 = vld [vmem:[%s1688 + $0x8] sm:$0xff]
    %v1691 = vld [vmem:[%s1688 + $0x10] sm:$0xff]
    %v1692 = vld [vmem:[%s1688 + $0x18] sm:$0xff]
    %1693 = vmatprep.subr.mxu0 0.0
    %1694 = vmatpush1.msra.mxu0 0.0
    %1695 = vmatprep.subr.mxu0 0.0
    %1696 = vmatpush1.msra.mxu0 0.0
    %1697 = vmatprep.subr.mxu0 0.0
    %1698 = vmatpush1.msra.mxu0 0.0
    %1699 = vmatprep.subr.mxu0 0.0
    %1700 = vmatpush1.msra.mxu0 0.0
    %1701 = vmatprep.subr.mxu0 0.0
    %1702 = vmatpush1.msra.mxu0 0.0
    %1703 = vmatprep.subr.mxu0 0.0
    %1704 = vmatpush1.msra.mxu0 0.0
    %1705 = vmatprep.subr.mxu0 0.0
    %1706 = vmatpush1.msra.mxu0 0.0
    %1707 = vmatprep.subr.mxu0 0.0
    %1708 = vmatpush1.msra.mxu0 0.0
    %1709 = vmatprep.subr.mxu0 0.0
    %1710 = vmatpush1.msra.mxu0 0.0
    %1711 = vmatprep.subr.mxu0 0.0
    %1712 = vmatpush1.msra.mxu0 0.0
    %1713 = vmatprep.subr.mxu0 0.0
    %1714 = vmatpush1.msra.mxu0 0.0
    %1715 = vmatprep.subr.mxu0 0.0
    %1716 = vmatpush1.msra.mxu0 0.0
    %1717 = vmatprep.subr.mxu0 0.0
    %1718 = vmatpush1.msra.mxu0 %v1692
    %1719 = vmatprep.subr.mxu0 0.0
    %1720 = vmatpush1.msra.mxu0 %v1691
    %1721 = vmatprep.subr.mxu0 0.0
    %1722 = vmatpush1.msra.mxu0 %v1690
    %1723 = vmatprep.subr.mxu0 0.0
    %1724 = vmatpush1.msra.mxu0 %v1689
    %1725 = vmatprep.subr.mxu0 0.0
    %1726 = vmatpush2.msra.mxu0 0.0
    %1727 = vmatprep.subr.mxu0 0.0
    %1728 = vmatpush2.msra.mxu0 0.0
    %1729 = vmatprep.subr.mxu0 0.0
    %1730 = vmatpush2.msra.mxu0 0.0
    %1731 = vmatprep.subr.mxu0 0.0
    %1732 = vmatpush2.msra.mxu0 0.0
    %1733 = vmatprep.subr.mxu0 0.0
    %1734 = vmatpush2.msra.mxu0 0.0
    %1735 = vmatprep.subr.mxu0 0.0
    %1736 = vmatpush2.msra.mxu0 0.0
    %1737 = vmatprep.subr.mxu0 0.0
    %1738 = vmatpush2.msra.mxu0 0.0
    %1739 = vmatprep.subr.mxu0 0.0
    %1740 = vmatpush2.msra.mxu0 0.0
    %1741 = vmatprep.subr.mxu0 0.0
    %1742 = vmatpush2.msra.mxu0 0.0
    %1743 = vmatprep.subr.mxu0 0.0
    %1744 = vmatpush2.msra.mxu0 0.0
    %1745 = vmatprep.subr.mxu0 0.0
    %1746 = vmatpush2.msra.mxu0 0.0
    %1747 = vmatprep.subr.mxu0 0.0
    %1748 = vmatpush2.msra.mxu0 0.0
    %1749 = vmatprep.subr.mxu0 0.0
    %1750 = vmatpush2.msra.mxu0 0.0
    %1751 = vmatprep.subr.mxu0 0.0
    %1752 = vmatpush2.msra.mxu0 0.0
    %1753 = vmatprep.subr.mxu0 0.0
    %1754 = vmatpush2.msra.mxu0 0.0
    %1755 = vmatprep.subr.mxu0 0.0
    %1756 = vmatpush2.msra.mxu0 0.0
    %1757 = vmatprep.mubr.f32.mxu0 0.0
    %1758 = vmatmul.mubr.f32.gmra.mxu0 %v705
    %v1759 = vpop.f32.mrf.mxu0
    %v1760 = vadd.f32 0.0, %v1759
    %v1761 = vpop.f32.mrf.mxu0
    %1762 = vmatprep.mubr.f32.mxu0 0.0
    %1763 = vmatmul.mubr.f32.gmra.mxu0 %v708
    %v1764 = vpop.f32.mrf.mxu0
    %v1765 = vadd.f32 0.0, %v1764
    %v1766 = vpop.f32.mrf.mxu0
    %1767 = vdwg.mxu0
    %v1769 = vsel %vm179, %v1760, 0
    %v1772 = vsel %vm179, %v1765, 0
    %1774 = vmatprep.subr.mxu0 0.0
    %1775 = vmatpush1.msra.mxu0 0.0
    %1776 = vmatprep.subr.mxu0 0.0
    %1777 = vmatpush1.msra.mxu0 0.0
    %1778 = vmatprep.subr.mxu0 0.0
    %1779 = vmatpush1.msra.mxu0 0.0
    %1780 = vmatprep.subr.mxu0 0.0
    %1781 = vmatpush1.msra.mxu0 0.0
    %1782 = vmatprep.subr.mxu0 0.0
    %1783 = vmatpush1.msra.mxu0 0.0
    %1784 = vmatprep.subr.mxu0 0.0
    %1785 = vmatpush1.msra.mxu0 0.0
    %1786 = vmatprep.subr.mxu0 0.0
    %1787 = vmatpush1.msra.mxu0 0.0
    %1788 = vmatprep.subr.mxu0 0.0
    %1789 = vmatpush1.msra.mxu0 0.0
    %1790 = vmatprep.subr.mxu0 0.0
    %1791 = vmatpush1.msra.mxu0 0.0
    %1792 = vmatprep.subr.mxu0 0.0
    %1793 = vmatpush1.msra.mxu0 0.0
    %1794 = vmatprep.subr.mxu0 0.0
    %1795 = vmatpush1.msra.mxu0 0.0
    %1796 = vmatprep.subr.mxu0 0.0
    %1797 = vmatpush1.msra.mxu0 0.0
    %1798 = vmatprep.subr.mxu0 0.0
    %1799 = vmatpush1.msra.mxu0 %v699
    %1800 = vmatprep.subr.mxu0 0.0
    %1801 = vmatpush1.msra.mxu0 %v698
    %1802 = vmatprep.subr.mxu0 0.0
    %1803 = vmatpush1.msra.mxu0 %v697
    %1804 = vmatprep.subr.mxu0 0.0
    %1805 = vmatpush1.msra.mxu0 %v696
    %1806 = vmatprep.subr.mxu0 0.0
    %1807 = vmatpush2.msra.mxu0 0.0
    %1808 = vmatprep.subr.mxu0 0.0
    %1809 = vmatpush2.msra.mxu0 0.0
    %1810 = vmatprep.subr.mxu0 0.0
    %1811 = vmatpush2.msra.mxu0 0.0
    %1812 = vmatprep.subr.mxu0 0.0
    %1813 = vmatpush2.msra.mxu0 0.0
    %1814 = vmatprep.subr.mxu0 0.0
    %1815 = vmatpush2.msra.mxu0 0.0
    %1816 = vmatprep.subr.mxu0 0.0
    %1817 = vmatpush2.msra.mxu0 0.0
    %1818 = vmatprep.subr.mxu0 0.0
    %1819 = vmatpush2.msra.mxu0 0.0
    %1820 = vmatprep.subr.mxu0 0.0
    %1821 = vmatpush2.msra.mxu0 0.0
    %1822 = vmatprep.subr.mxu0 0.0
    %1823 = vmatpush2.msra.mxu0 0.0
    %1824 = vmatprep.subr.mxu0 0.0
    %1825 = vmatpush2.msra.mxu0 0.0
    %1826 = vmatprep.subr.mxu0 0.0
    %1827 = vmatpush2.msra.mxu0 0.0
    %1828 = vmatprep.subr.mxu0 0.0
    %1829 = vmatpush2.msra.mxu0 0.0
    %1830 = vmatprep.subr.mxu0 0.0
    %1831 = vmatpush2.msra.mxu0 0.0
    %1832 = vmatprep.subr.mxu0 0.0
    %1833 = vmatpush2.msra.mxu0 0.0
    %1834 = vmatprep.subr.mxu0 0.0
    %1835 = vmatpush2.msra.mxu0 0.0
    %1836 = vmatprep.subr.mxu0 0.0
    %1837 = vmatpush2.msra.mxu0 0.0
    %1838 = vmatprep.mubr.f32.mxu0 0.0
    %1839 = vmatmul.mubr.f32.gmra.mxu0 %v1769
    %v1840 = vpop.f32.mrf.mxu0
    %v1841 = vadd.f32 0.0, %v1840
    %v1842 = vpop.f32.mrf.mxu0
    %1843 = vmatprep.mubr.f32.mxu0 0.0
    %1844 = vmatmul.mubr.f32.gmra.mxu0 %v1772
    %v1845 = vpop.f32.mrf.mxu0
    %v1846 = vadd.f32 0.0, %v1845
    %v1847 = vpop.f32.mrf.mxu0
    %1848 = vdwg.mxu0
    %s1849 = scalar_lea.vmem [#allocation7], 96
    %1850 = vst [vmem:[%s1849] sm:$0xff] %v1841
    %1851 = vst [vmem:[%s1849 + $0x8] sm:$0xff] %v1846
    %v1852 = vld [vmem:[%s169] sm:$0xff]
    %v1853 = vld [vmem:[%s169 + $0x8] sm:$0xff]
    %v1854 = vld [vmem:[%s169 + $0x10] sm:$0xff]
    %v1855 = vld [vmem:[%s169 + $0x18] sm:$0xff]
    %1856 = vmatprep.subr.mxu0 0.0
    %1857 = vmatpush1.msra.mxu0 0.0
    %1858 = vmatprep.subr.mxu0 0.0
    %1859 = vmatpush1.msra.mxu0 0.0
    %1860 = vmatprep.subr.mxu0 0.0
    %1861 = vmatpush1.msra.mxu0 0.0
    %1862 = vmatprep.subr.mxu0 0.0
    %1863 = vmatpush1.msra.mxu0 0.0
    %1864 = vmatprep.subr.mxu0 0.0
    %1865 = vmatpush1.msra.mxu0 0.0
    %1866 = vmatprep.subr.mxu0 0.0
    %1867 = vmatpush1.msra.mxu0 0.0
    %1868 = vmatprep.subr.mxu0 0.0
    %1869 = vmatpush1.msra.mxu0 0.0
    %1870 = vmatprep.subr.mxu0 0.0
    %1871 = vmatpush1.msra.mxu0 0.0
    %1872 = vmatprep.subr.mxu0 0.0
    %1873 = vmatpush1.msra.mxu0 0.0
    %1874 = vmatprep.subr.mxu0 0.0
    %1875 = vmatpush1.msra.mxu0 0.0
    %1876 = vmatprep.subr.mxu0 0.0
    %1877 = vmatpush1.msra.mxu0 0.0
    %1878 = vmatprep.subr.mxu0 0.0
    %1879 = vmatpush1.msra.mxu0 0.0
    %1880 = vmatprep.subr.mxu0 0.0
    %1881 = vmatpush1.msra.mxu0 %v1855
    %1882 = vmatprep.subr.mxu0 0.0
    %1883 = vmatpush1.msra.mxu0 %v1854
    %1884 = vmatprep.subr.mxu0 0.0
    %1885 = vmatpush1.msra.mxu0 %v1853
    %1886 = vmatprep.subr.mxu0 0.0
    %1887 = vmatpush1.msra.mxu0 %v1852
    %1888 = vmatprep.subr.mxu0 0.0
    %1889 = vmatpush2.msra.mxu0 0.0
    %1890 = vmatprep.subr.mxu0 0.0
    %1891 = vmatpush2.msra.mxu0 0.0
    %1892 = vmatprep.subr.mxu0 0.0
    %1893 = vmatpush2.msra.mxu0 0.0
    %1894 = vmatprep.subr.mxu0 0.0
    %1895 = vmatpush2.msra.mxu0 0.0
    %1896 = vmatprep.subr.mxu0 0.0
    %1897 = vmatpush2.msra.mxu0 0.0
    %1898 = vmatprep.subr.mxu0 0.0
    %1899 = vmatpush2.msra.mxu0 0.0
    %1900 = vmatprep.subr.mxu0 0.0
    %1901 = vmatpush2.msra.mxu0 0.0
    %1902 = vmatprep.subr.mxu0 0.0
    %1903 = vmatpush2.msra.mxu0 0.0
    %1904 = vmatprep.subr.mxu0 0.0
    %1905 = vmatpush2.msra.mxu0 0.0
    %1906 = vmatprep.subr.mxu0 0.0
    %1907 = vmatpush2.msra.mxu0 0.0
    %1908 = vmatprep.subr.mxu0 0.0
    %1909 = vmatpush2.msra.mxu0 0.0
    %1910 = vmatprep.subr.mxu0 0.0
    %1911 = vmatpush2.msra.mxu0 0.0
    %1912 = vmatprep.subr.mxu0 0.0
    %1913 = vmatpush2.msra.mxu0 0.0
    %1914 = vmatprep.subr.mxu0 0.0
    %1915 = vmatpush2.msra.mxu0 0.0
    %1916 = vmatprep.subr.mxu0 0.0
    %1917 = vmatpush2.msra.mxu0 0.0
    %1918 = vmatprep.subr.mxu0 0.0
    %1919 = vmatpush2.msra.mxu0 0.0
    %1920 = vmatprep.mubr.f32.mxu0 0.0
    %1921 = vmatmul.mubr.f32.gmra.mxu0 %v705
    %v1922 = vpop.f32.mrf.mxu0
    %v1923 = vadd.f32 0.0, %v1922
    %v1924 = vpop.f32.mrf.mxu0
    %1925 = vmatprep.mubr.f32.mxu0 0.0
    %1926 = vmatmul.mubr.f32.gmra.mxu0 %v708
    %v1927 = vpop.f32.mrf.mxu0
    %v1928 = vadd.f32 0.0, %v1927
    %v1929 = vpop.f32.mrf.mxu0
    %1930 = vdwg.mxu0
    %v1932 = vsel %vm179, %v1923, 0
    %v1935 = vsel %vm179, %v1928, 0
    %1937 = vmatprep.subr.mxu0 0.0
    %1938 = vmatpush1.msra.mxu0 0.0
    %1939 = vmatprep.subr.mxu0 0.0
    %1940 = vmatpush1.msra.mxu0 0.0
    %1941 = vmatprep.subr.mxu0 0.0
    %1942 = vmatpush1.msra.mxu0 0.0
    %1943 = vmatprep.subr.mxu0 0.0
    %1944 = vmatpush1.msra.mxu0 0.0
    %1945 = vmatprep.subr.mxu0 0.0
    %1946 = vmatpush1.msra.mxu0 0.0
    %1947 = vmatprep.subr.mxu0 0.0
    %1948 = vmatpush1.msra.mxu0 0.0
    %1949 = vmatprep.subr.mxu0 0.0
    %1950 = vmatpush1.msra.mxu0 0.0
    %1951 = vmatprep.subr.mxu0 0.0
    %1952 = vmatpush1.msra.mxu0 0.0
    %1953 = vmatprep.subr.mxu0 0.0
    %1954 = vmatpush1.msra.mxu0 0.0
    %1955 = vmatprep.subr.mxu0 0.0
    %1956 = vmatpush1.msra.mxu0 0.0
    %1957 = vmatprep.subr.mxu0 0.0
    %1958 = vmatpush1.msra.mxu0 0.0
    %1959 = vmatprep.subr.mxu0 0.0
    %1960 = vmatpush1.msra.mxu0 0.0
    %1961 = vmatprep.subr.mxu0 0.0
    %1962 = vmatpush1.msra.mxu0 %v699
    %1963 = vmatprep.subr.mxu0 0.0
    %1964 = vmatpush1.msra.mxu0 %v698
    %1965 = vmatprep.subr.mxu0 0.0
    %1966 = vmatpush1.msra.mxu0 %v697
    %1967 = vmatprep.subr.mxu0 0.0
    %1968 = vmatpush1.msra.mxu0 %v696
    %1969 = vmatprep.subr.mxu0 0.0
    %1970 = vmatpush2.msra.mxu0 0.0
    %1971 = vmatprep.subr.mxu0 0.0
    %1972 = vmatpush2.msra.mxu0 0.0
    %1973 = vmatprep.subr.mxu0 0.0
    %1974 = vmatpush2.msra.mxu0 0.0
    %1975 = vmatprep.subr.mxu0 0.0
    %1976 = vmatpush2.msra.mxu0 0.0
    %1977 = vmatprep.subr.mxu0 0.0
    %1978 = vmatpush2.msra.mxu0 0.0
    %1979 = vmatprep.subr.mxu0 0.0
    %1980 = vmatpush2.msra.mxu0 0.0
    %1981 = vmatprep.subr.mxu0 0.0
    %1982 = vmatpush2.msra.mxu0 0.0
    %1983 = vmatprep.subr.mxu0 0.0
    %1984 = vmatpush2.msra.mxu0 0.0
    %1985 = vmatprep.subr.mxu0 0.0
    %1986 = vmatpush2.msra.mxu0 0.0
    %1987 = vmatprep.subr.mxu0 0.0
    %1988 = vmatpush2.msra.mxu0 0.0
    %1989 = vmatprep.subr.mxu0 0.0
    %1990 = vmatpush2.msra.mxu0 0.0
    %1991 = vmatprep.subr.mxu0 0.0
    %1992 = vmatpush2.msra.mxu0 0.0
    %1993 = vmatprep.subr.mxu0 0.0
    %1994 = vmatpush2.msra.mxu0 0.0
    %1995 = vmatprep.subr.mxu0 0.0
    %1996 = vmatpush2.msra.mxu0 0.0
    %1997 = vmatprep.subr.mxu0 0.0
    %1998 = vmatpush2.msra.mxu0 0.0
    %1999 = vmatprep.subr.mxu0 0.0
    %2000 = vmatpush2.msra.mxu0 0.0
    %2001 = vmatprep.mubr.f32.mxu0 0.0
    %2002 = vmatmul.mubr.f32.gmra.mxu0 %v1932
    %v2003 = vpop.f32.mrf.mxu0
    %v2004 = vadd.f32 0.0, %v2003
    %v2005 = vpop.f32.mrf.mxu0
    %2006 = vmatprep.mubr.f32.mxu0 0.0
    %2007 = vmatmul.mubr.f32.gmra.mxu0 %v1935
    %v2008 = vpop.f32.mrf.mxu0
    %v2009 = vadd.f32 0.0, %v2008
    %v2010 = vpop.f32.mrf.mxu0
    %2011 = vdwg.mxu0
    %s2012 = scalar_lea.vmem [#allocation7], 112
    %2013 = vst [vmem:[%s2012] sm:$0xff] %v2004
    %2014 = vst [vmem:[%s2012 + $0x8] sm:$0xff] %v2009
    %v2015 = vld [vmem:[%s174] sm:$0xff]
    %v2016 = vld [vmem:[%s174 + $0x8] sm:$0xff]
    %v2017 = vld [vmem:[%s174 + $0x10] sm:$0xff]
    %v2018 = vld [vmem:[%s174 + $0x18] sm:$0xff]
    %2019 = vmatprep.subr.mxu0 0.0
    %2020 = vmatpush1.msra.mxu0 0.0
    %2021 = vmatprep.subr.mxu0 0.0
    %2022 = vmatpush1.msra.mxu0 0.0
    %2023 = vmatprep.subr.mxu0 0.0
    %2024 = vmatpush1.msra.mxu0 0.0
    %2025 = vmatprep.subr.mxu0 0.0
    %2026 = vmatpush1.msra.mxu0 0.0
    %2027 = vmatprep.subr.mxu0 0.0
    %2028 = vmatpush1.msra.mxu0 0.0
    %2029 = vmatprep.subr.mxu0 0.0
    %2030 = vmatpush1.msra.mxu0 0.0
    %2031 = vmatprep.subr.mxu0 0.0
    %2032 = vmatpush1.msra.mxu0 0.0
    %2033 = vmatprep.subr.mxu0 0.0
    %2034 = vmatpush1.msra.mxu0 0.0
    %2035 = vmatprep.subr.mxu0 0.0
    %2036 = vmatpush1.msra.mxu0 0.0
    %2037 = vmatprep.subr.mxu0 0.0
    %2038 = vmatpush1.msra.mxu0 0.0
    %2039 = vmatprep.subr.mxu0 0.0
    %2040 = vmatpush1.msra.mxu0 0.0
    %2041 = vmatprep.subr.mxu0 0.0
    %2042 = vmatpush1.msra.mxu0 0.0
    %2043 = vmatprep.subr.mxu0 0.0
    %2044 = vmatpush1.msra.mxu0 %v2018
    %2045 = vmatprep.subr.mxu0 0.0
    %2046 = vmatpush1.msra.mxu0 %v2017
    %2047 = vmatprep.subr.mxu0 0.0
    %2048 = vmatpush1.msra.mxu0 %v2016
    %2049 = vmatprep.subr.mxu0 0.0
    %2050 = vmatpush1.msra.mxu0 %v2015
    %2051 = vmatprep.subr.mxu0 0.0
    %2052 = vmatpush2.msra.mxu0 0.0
    %2053 = vmatprep.subr.mxu0 0.0
    %2054 = vmatpush2.msra.mxu0 0.0
    %2055 = vmatprep.subr.mxu0 0.0
    %2056 = vmatpush2.msra.mxu0 0.0
    %2057 = vmatprep.subr.mxu0 0.0
    %2058 = vmatpush2.msra.mxu0 0.0
    %2059 = vmatprep.subr.mxu0 0.0
    %2060 = vmatpush2.msra.mxu0 0.0
    %2061 = vmatprep.subr.mxu0 0.0
    %2062 = vmatpush2.msra.mxu0 0.0
    %2063 = vmatprep.subr.mxu0 0.0
    %2064 = vmatpush2.msra.mxu0 0.0
    %2065 = vmatprep.subr.mxu0 0.0
    %2066 = vmatpush2.msra.mxu0 0.0
    %2067 = vmatprep.subr.mxu0 0.0
    %2068 = vmatpush2.msra.mxu0 0.0
    %2069 = vmatprep.subr.mxu0 0.0
    %2070 = vmatpush2.msra.mxu0 0.0
    %2071 = vmatprep.subr.mxu0 0.0
    %2072 = vmatpush2.msra.mxu0 0.0
    %2073 = vmatprep.subr.mxu0 0.0
    %2074 = vmatpush2.msra.mxu0 0.0
    %2075 = vmatprep.subr.mxu0 0.0
    %2076 = vmatpush2.msra.mxu0 0.0
    %2077 = vmatprep.subr.mxu0 0.0
    %2078 = vmatpush2.msra.mxu0 0.0
    %2079 = vmatprep.subr.mxu0 0.0
    %2080 = vmatpush2.msra.mxu0 0.0
    %2081 = vmatprep.subr.mxu0 0.0
    %2082 = vmatpush2.msra.mxu0 0.0
    %2083 = vmatprep.mubr.f32.mxu0 0.0
    %2084 = vmatmul.mubr.f32.gmra.mxu0 %v705
    %v2085 = vpop.f32.mrf.mxu0
    %v2086 = vadd.f32 0.0, %v2085
    %v2087 = vpop.f32.mrf.mxu0
    %2088 = vmatprep.mubr.f32.mxu0 0.0
    %2089 = vmatmul.mubr.f32.gmra.mxu0 %v708
    %v2090 = vpop.f32.mrf.mxu0
    %v2091 = vadd.f32 0.0, %v2090
    %v2092 = vpop.f32.mrf.mxu0
    %2093 = vdwg.mxu0
    %v2095 = vsel %vm179, %v2086, 0
    %v2098 = vsel %vm179, %v2091, 0
    %2100 = vmatprep.subr.mxu0 0.0
    %2101 = vmatpush1.msra.mxu0 0.0
    %2102 = vmatprep.subr.mxu0 0.0
    %2103 = vmatpush1.msra.mxu0 0.0
    %2104 = vmatprep.subr.mxu0 0.0
    %2105 = vmatpush1.msra.mxu0 0.0
    %2106 = vmatprep.subr.mxu0 0.0
    %2107 = vmatpush1.msra.mxu0 0.0
    %2108 = vmatprep.subr.mxu0 0.0
    %2109 = vmatpush1.msra.mxu0 0.0
    %2110 = vmatprep.subr.mxu0 0.0
    %2111 = vmatpush1.msra.mxu0 0.0
    %2112 = vmatprep.subr.mxu0 0.0
    %2113 = vmatpush1.msra.mxu0 0.0
    %2114 = vmatprep.subr.mxu0 0.0
    %2115 = vmatpush1.msra.mxu0 0.0
    %2116 = vmatprep.subr.mxu0 0.0
    %2117 = vmatpush1.msra.mxu0 0.0
    %2118 = vmatprep.subr.mxu0 0.0
    %2119 = vmatpush1.msra.mxu0 0.0
    %2120 = vmatprep.subr.mxu0 0.0
    %2121 = vmatpush1.msra.mxu0 0.0
    %2122 = vmatprep.subr.mxu0 0.0
    %2123 = vmatpush1.msra.mxu0 0.0
    %2124 = vmatprep.subr.mxu0 0.0
    %2125 = vmatpush1.msra.mxu0 %v699
    %2126 = vmatprep.subr.mxu0 0.0
    %2127 = vmatpush1.msra.mxu0 %v698
    %2128 = vmatprep.subr.mxu0 0.0
    %2129 = vmatpush1.msra.mxu0 %v697
    %2130 = vmatprep.subr.mxu0 0.0
    %2131 = vmatpush1.msra.mxu0 %v696
    %2132 = vmatprep.subr.mxu0 0.0
    %2133 = vmatpush2.msra.mxu0 0.0
    %2134 = vmatprep.subr.mxu0 0.0
    %2135 = vmatpush2.msra.mxu0 0.0
    %2136 = vmatprep.subr.mxu0 0.0
    %2137 = vmatpush2.msra.mxu0 0.0
    %2138 = vmatprep.subr.mxu0 0.0
    %2139 = vmatpush2.msra.mxu0 0.0
    %2140 = vmatprep.subr.mxu0 0.0
    %2141 = vmatpush2.msra.mxu0 0.0
    %2142 = vmatprep.subr.mxu0 0.0
    %2143 = vmatpush2.msra.mxu0 0.0
    %2144 = vmatprep.subr.mxu0 0.0
    %2145 = vmatpush2.msra.mxu0 0.0
    %2146 = vmatprep.subr.mxu0 0.0
    %2147 = vmatpush2.msra.mxu0 0.0
    %2148 = vmatprep.subr.mxu0 0.0
    %2149 = vmatpush2.msra.mxu0 0.0
    %2150 = vmatprep.subr.mxu0 0.0
    %2151 = vmatpush2.msra.mxu0 0.0
    %2152 = vmatprep.subr.mxu0 0.0
    %2153 = vmatpush2.msra.mxu0 0.0
    %2154 = vmatprep.subr.mxu0 0.0
    %2155 = vmatpush2.msra.mxu0 0.0
    %2156 = vmatprep.subr.mxu0 0.0
    %2157 = vmatpush2.msra.mxu0 0.0
    %2158 = vmatprep.subr.mxu0 0.0
    %2159 = vmatpush2.msra.mxu0 0.0
    %2160 = vmatprep.subr.mxu0 0.0
    %2161 = vmatpush2.msra.mxu0 0.0
    %2162 = vmatprep.subr.mxu0 0.0
    %2163 = vmatpush2.msra.mxu0 0.0
    %2164 = vmatprep.mubr.f32.mxu0 0.0
    %2165 = vmatmul.mubr.f32.gmra.mxu0 %v2095
    %v2166 = vpop.f32.mrf.mxu0
    %v2167 = vadd.f32 0.0, %v2166
    %v2168 = vpop.f32.mrf.mxu0
    %2169 = vmatprep.mubr.f32.mxu0 0.0
    %2170 = vmatmul.mubr.f32.gmra.mxu0 %v2098
    %v2171 = vpop.f32.mrf.mxu0
    %v2172 = vadd.f32 0.0, %v2171
    %v2173 = vpop.f32.mrf.mxu0
    %2174 = vdwg.mxu0
    %s2175 = scalar_lea.vmem [#allocation7], 128
    %2176 = vst [vmem:[%s2175] sm:$0xff] %v2167
    %2177 = vst [vmem:[%s2175 + $0x8] sm:$0xff] %v2172
    %v2178 = vld [vmem:[%s338] sm:$0xff]
    %v2179 = vld [vmem:[%s338 + $0x8] sm:$0xff]
    %v2180 = vld [vmem:[%s338 + $0x10] sm:$0xff]
    %v2181 = vld [vmem:[%s338 + $0x18] sm:$0xff]
    %2182 = vmatprep.subr.mxu0 0.0
    %2183 = vmatpush1.msra.mxu0 0.0
    %2184 = vmatprep.subr.mxu0 0.0
    %2185 = vmatpush1.msra.mxu0 0.0
    %2186 = vmatprep.subr.mxu0 0.0
    %2187 = vmatpush1.msra.mxu0 0.0
    %2188 = vmatprep.subr.mxu0 0.0
    %2189 = vmatpush1.msra.mxu0 0.0
    %2190 = vmatprep.subr.mxu0 0.0
    %2191 = vmatpush1.msra.mxu0 0.0
    %2192 = vmatprep.subr.mxu0 0.0
    %2193 = vmatpush1.msra.mxu0 0.0
    %2194 = vmatprep.subr.mxu0 0.0
    %2195 = vmatpush1.msra.mxu0 0.0
    %2196 = vmatprep.subr.mxu0 0.0
    %2197 = vmatpush1.msra.mxu0 0.0
    %2198 = vmatprep.subr.mxu0 0.0
    %2199 = vmatpush1.msra.mxu0 0.0
    %2200 = vmatprep.subr.mxu0 0.0
    %2201 = vmatpush1.msra.mxu0 0.0
    %2202 = vmatprep.subr.mxu0 0.0
    %2203 = vmatpush1.msra.mxu0 0.0
    %2204 = vmatprep.subr.mxu0 0.0
    %2205 = vmatpush1.msra.mxu0 0.0
    %2206 = vmatprep.subr.mxu0 0.0
    %2207 = vmatpush1.msra.mxu0 %v2181
    %2208 = vmatprep.subr.mxu0 0.0
    %2209 = vmatpush1.msra.mxu0 %v2180
    %2210 = vmatprep.subr.mxu0 0.0
    %2211 = vmatpush1.msra.mxu0 %v2179
    %2212 = vmatprep.subr.mxu0 0.0
    %2213 = vmatpush1.msra.mxu0 %v2178
    %2214 = vmatprep.subr.mxu0 0.0
    %2215 = vmatpush2.msra.mxu0 0.0
    %2216 = vmatprep.subr.mxu0 0.0
    %2217 = vmatpush2.msra.mxu0 0.0
    %2218 = vmatprep.subr.mxu0 0.0
    %2219 = vmatpush2.msra.mxu0 0.0
    %2220 = vmatprep.subr.mxu0 0.0
    %2221 = vmatpush2.msra.mxu0 0.0
    %2222 = vmatprep.subr.mxu0 0.0
    %2223 = vmatpush2.msra.mxu0 0.0
    %2224 = vmatprep.subr.mxu0 0.0
    %2225 = vmatpush2.msra.mxu0 0.0
    %2226 = vmatprep.subr.mxu0 0.0
    %2227 = vmatpush2.msra.mxu0 0.0
    %2228 = vmatprep.subr.mxu0 0.0
    %2229 = vmatpush2.msra.mxu0 0.0
    %2230 = vmatprep.subr.mxu0 0.0
    %2231 = vmatpush2.msra.mxu0 0.0
    %2232 = vmatprep.subr.mxu0 0.0
    %2233 = vmatpush2.msra.mxu0 0.0
    %2234 = vmatprep.subr.mxu0 0.0
    %2235 = vmatpush2.msra.mxu0 0.0
    %2236 = vmatprep.subr.mxu0 0.0
    %2237 = vmatpush2.msra.mxu0 0.0
    %2238 = vmatprep.subr.mxu0 0.0
    %2239 = vmatpush2.msra.mxu0 0.0
    %2240 = vmatprep.subr.mxu0 0.0
    %2241 = vmatpush2.msra.mxu0 0.0
    %2242 = vmatprep.subr.mxu0 0.0
    %2243 = vmatpush2.msra.mxu0 0.0
    %2244 = vmatprep.subr.mxu0 0.0
    %2245 = vmatpush2.msra.mxu0 0.0
    %2246 = vmatprep.mubr.f32.mxu0 0.0
    %2247 = vmatmul.mubr.f32.gmra.mxu0 %v705
    %v2248 = vpop.f32.mrf.mxu0
    %v2249 = vadd.f32 0.0, %v2248
    %v2250 = vpop.f32.mrf.mxu0
    %2251 = vmatprep.mubr.f32.mxu0 0.0
    %2252 = vmatmul.mubr.f32.gmra.mxu0 %v708
    %v2253 = vpop.f32.mrf.mxu0
    %v2254 = vadd.f32 0.0, %v2253
    %v2255 = vpop.f32.mrf.mxu0
    %2256 = vdwg.mxu0
    %v2258 = vsel %vm179, %v2249, 0
    %v2261 = vsel %vm179, %v2254, 0
    %2263 = vmatprep.subr.mxu0 0.0
    %2264 = vmatpush1.msra.mxu0 0.0
    %2265 = vmatprep.subr.mxu0 0.0
    %2266 = vmatpush1.msra.mxu0 0.0
    %2267 = vmatprep.subr.mxu0 0.0
    %2268 = vmatpush1.msra.mxu0 0.0
    %2269 = vmatprep.subr.mxu0 0.0
    %2270 = vmatpush1.msra.mxu0 0.0
    %2271 = vmatprep.subr.mxu0 0.0
    %2272 = vmatpush1.msra.mxu0 0.0
    %2273 = vmatprep.subr.mxu0 0.0
    %2274 = vmatpush1.msra.mxu0 0.0
    %2275 = vmatprep.subr.mxu0 0.0
    %2276 = vmatpush1.msra.mxu0 0.0
    %2277 = vmatprep.subr.mxu0 0.0
    %2278 = vmatpush1.msra.mxu0 0.0
    %2279 = vmatprep.subr.mxu0 0.0
    %2280 = vmatpush1.msra.mxu0 0.0
    %2281 = vmatprep.subr.mxu0 0.0
    %2282 = vmatpush1.msra.mxu0 0.0
    %2283 = vmatprep.subr.mxu0 0.0
    %2284 = vmatpush1.msra.mxu0 0.0
    %2285 = vmatprep.subr.mxu0 0.0
    %2286 = vmatpush1.msra.mxu0 0.0
    %2287 = vmatprep.subr.mxu0 0.0
    %2288 = vmatpush1.msra.mxu0 %v699
    %2289 = vmatprep.subr.mxu0 0.0
    %2290 = vmatpush1.msra.mxu0 %v698
    %2291 = vmatprep.subr.mxu0 0.0
    %2292 = vmatpush1.msra.mxu0 %v697
    %2293 = vmatprep.subr.mxu0 0.0
    %2294 = vmatpush1.msra.mxu0 %v696
    %2295 = vmatprep.subr.mxu0 0.0
    %2296 = vmatpush2.msra.mxu0 0.0
    %2297 = vmatprep.subr.mxu0 0.0
    %2298 = vmatpush2.msra.mxu0 0.0
    %2299 = vmatprep.subr.mxu0 0.0
    %2300 = vmatpush2.msra.mxu0 0.0
    %2301 = vmatprep.subr.mxu0 0.0
    %2302 = vmatpush2.msra.mxu0 0.0
    %2303 = vmatprep.subr.mxu0 0.0
    %2304 = vmatpush2.msra.mxu0 0.0
    %2305 = vmatprep.subr.mxu0 0.0
    %2306 = vmatpush2.msra.mxu0 0.0
    %2307 = vmatprep.subr.mxu0 0.0
    %2308 = vmatpush2.msra.mxu0 0.0
    %2309 = vmatprep.subr.mxu0 0.0
    %2310 = vmatpush2.msra.mxu0 0.0
    %2311 = vmatprep.subr.mxu0 0.0
    %2312 = vmatpush2.msra.mxu0 0.0
    %2313 = vmatprep.subr.mxu0 0.0
    %2314 = vmatpush2.msra.mxu0 0.0
    %2315 = vmatprep.subr.mxu0 0.0
    %2316 = vmatpush2.msra.mxu0 0.0
    %2317 = vmatprep.subr.mxu0 0.0
    %2318 = vmatpush2.msra.mxu0 0.0
    %2319 = vmatprep.subr.mxu0 0.0
    %2320 = vmatpush2.msra.mxu0 0.0
    %2321 = vmatprep.subr.mxu0 0.0
    %2322 = vmatpush2.msra.mxu0 0.0
    %2323 = vmatprep.subr.mxu0 0.0
    %2324 = vmatpush2.msra.mxu0 0.0
    %2325 = vmatprep.subr.mxu0 0.0
    %2326 = vmatpush2.msra.mxu0 0.0
    %2327 = vmatprep.mubr.f32.mxu0 0.0
    %2328 = vmatmul.mubr.f32.gmra.mxu0 %v2258
    %v2329 = vpop.f32.mrf.mxu0
    %v2330 = vadd.f32 0.0, %v2329
    %v2331 = vpop.f32.mrf.mxu0
    %2332 = vmatprep.mubr.f32.mxu0 0.0
    %2333 = vmatmul.mubr.f32.gmra.mxu0 %v2261
    %v2334 = vpop.f32.mrf.mxu0
    %v2335 = vadd.f32 0.0, %v2334
    %v2336 = vpop.f32.mrf.mxu0
    %2337 = vdwg.mxu0
    %s2338 = scalar_lea.vmem [#allocation7], 144
    %2339 = vst [vmem:[%s2338] sm:$0xff] %v2330
    %2340 = vst [vmem:[%s2338 + $0x8] sm:$0xff] %v2335
    %v2341 = vld [vmem:[%s422] sm:$0xff]
    %v2342 = vld [vmem:[%s422 + $0x8] sm:$0xff]
    %v2343 = vld [vmem:[%s422 + $0x10] sm:$0xff]
    %v2344 = vld [vmem:[%s422 + $0x18] sm:$0xff]
    %2345 = vmatprep.subr.mxu0 0.0
    %2346 = vmatpush1.msra.mxu0 0.0
    %2347 = vmatprep.subr.mxu0 0.0
    %2348 = vmatpush1.msra.mxu0 0.0
    %2349 = vmatprep.subr.mxu0 0.0
    %2350 = vmatpush1.msra.mxu0 0.0
    %2351 = vmatprep.subr.mxu0 0.0
    %2352 = vmatpush1.msra.mxu0 0.0
    %2353 = vmatprep.subr.mxu0 0.0
    %2354 = vmatpush1.msra.mxu0 0.0
    %2355 = vmatprep.subr.mxu0 0.0
    %2356 = vmatpush1.msra.mxu0 0.0
    %2357 = vmatprep.subr.mxu0 0.0
    %2358 = vmatpush1.msra.mxu0 0.0
    %2359 = vmatprep.subr.mxu0 0.0
    %2360 = vmatpush1.msra.mxu0 0.0
    %2361 = vmatprep.subr.mxu0 0.0
    %2362 = vmatpush1.msra.mxu0 0.0
    %2363 = vmatprep.subr.mxu0 0.0
    %2364 = vmatpush1.msra.mxu0 0.0
    %2365 = vmatprep.subr.mxu0 0.0
    %2366 = vmatpush1.msra.mxu0 0.0
    %2367 = vmatprep.subr.mxu0 0.0
    %2368 = vmatpush1.msra.mxu0 0.0
    %2369 = vmatprep.subr.mxu0 0.0
    %2370 = vmatpush1.msra.mxu0 %v2344
    %2371 = vmatprep.subr.mxu0 0.0
    %2372 = vmatpush1.msra.mxu0 %v2343
    %2373 = vmatprep.subr.mxu0 0.0
    %2374 = vmatpush1.msra.mxu0 %v2342
    %2375 = vmatprep.subr.mxu0 0.0
    %2376 = vmatpush1.msra.mxu0 %v2341
    %2377 = vmatprep.subr.mxu0 0.0
    %2378 = vmatpush2.msra.mxu0 0.0
    %2379 = vmatprep.subr.mxu0 0.0
    %2380 = vmatpush2.msra.mxu0 0.0
    %2381 = vmatprep.subr.mxu0 0.0
    %2382 = vmatpush2.msra.mxu0 0.0
    %2383 = vmatprep.subr.mxu0 0.0
    %2384 = vmatpush2.msra.mxu0 0.0
    %2385 = vmatprep.subr.mxu0 0.0
    %2386 = vmatpush2.msra.mxu0 0.0
    %2387 = vmatprep.subr.mxu0 0.0
    %2388 = vmatpush2.msra.mxu0 0.0
    %2389 = vmatprep.subr.mxu0 0.0
    %2390 = vmatpush2.msra.mxu0 0.0
    %2391 = vmatprep.subr.mxu0 0.0
    %2392 = vmatpush2.msra.mxu0 0.0
    %2393 = vmatprep.subr.mxu0 0.0
    %2394 = vmatpush2.msra.mxu0 0.0
    %2395 = vmatprep.subr.mxu0 0.0
    %2396 = vmatpush2.msra.mxu0 0.0
    %2397 = vmatprep.subr.mxu0 0.0
    %2398 = vmatpush2.msra.mxu0 0.0
    %2399 = vmatprep.subr.mxu0 0.0
    %2400 = vmatpush2.msra.mxu0 0.0
    %2401 = vmatprep.subr.mxu0 0.0
    %2402 = vmatpush2.msra.mxu0 0.0
    %2403 = vmatprep.subr.mxu0 0.0
    %2404 = vmatpush2.msra.mxu0 0.0
    %2405 = vmatprep.subr.mxu0 0.0
    %2406 = vmatpush2.msra.mxu0 0.0
    %2407 = vmatprep.subr.mxu0 0.0
    %2408 = vmatpush2.msra.mxu0 0.0
    %2409 = vmatprep.mubr.f32.mxu0 0.0
    %2410 = vmatmul.mubr.f32.gmra.mxu0 %v705
    %v2411 = vpop.f32.mrf.mxu0
    %v2412 = vadd.f32 0.0, %v2411
    %v2413 = vpop.f32.mrf.mxu0
    %2414 = vmatprep.mubr.f32.mxu0 0.0
    %2415 = vmatmul.mubr.f32.gmra.mxu0 %v708
    %v2416 = vpop.f32.mrf.mxu0
    %v2417 = vadd.f32 0.0, %v2416
    %v2418 = vpop.f32.mrf.mxu0
    %2419 = vdwg.mxu0
    %v2421 = vsel %vm179, %v2412, 0
    %v2424 = vsel %vm179, %v2417, 0
    %2426 = vmatprep.subr.mxu0 0.0
    %2427 = vmatpush1.msra.mxu0 0.0
    %2428 = vmatprep.subr.mxu0 0.0
    %2429 = vmatpush1.msra.mxu0 0.0
    %2430 = vmatprep.subr.mxu0 0.0
    %2431 = vmatpush1.msra.mxu0 0.0
    %2432 = vmatprep.subr.mxu0 0.0
    %2433 = vmatpush1.msra.mxu0 0.0
    %2434 = vmatprep.subr.mxu0 0.0
    %2435 = vmatpush1.msra.mxu0 0.0
    %2436 = vmatprep.subr.mxu0 0.0
    %2437 = vmatpush1.msra.mxu0 0.0
    %2438 = vmatprep.subr.mxu0 0.0
    %2439 = vmatpush1.msra.mxu0 0.0
    %2440 = vmatprep.subr.mxu0 0.0
    %2441 = vmatpush1.msra.mxu0 0.0
    %2442 = vmatprep.subr.mxu0 0.0
    %2443 = vmatpush1.msra.mxu0 0.0
    %2444 = vmatprep.subr.mxu0 0.0
    %2445 = vmatpush1.msra.mxu0 0.0
    %2446 = vmatprep.subr.mxu0 0.0
    %2447 = vmatpush1.msra.mxu0 0.0
    %2448 = vmatprep.subr.mxu0 0.0
    %2449 = vmatpush1.msra.mxu0 0.0
    %2450 = vmatprep.subr.mxu0 0.0
    %2451 = vmatpush1.msra.mxu0 %v699
    %2452 = vmatprep.subr.mxu0 0.0
    %2453 = vmatpush1.msra.mxu0 %v698
    %2454 = vmatprep.subr.mxu0 0.0
    %2455 = vmatpush1.msra.mxu0 %v697
    %2456 = vmatprep.subr.mxu0 0.0
    %2457 = vmatpush1.msra.mxu0 %v696
    %2458 = vmatprep.subr.mxu0 0.0
    %2459 = vmatpush2.msra.mxu0 0.0
    %2460 = vmatprep.subr.mxu0 0.0
    %2461 = vmatpush2.msra.mxu0 0.0
    %2462 = vmatprep.subr.mxu0 0.0
    %2463 = vmatpush2.msra.mxu0 0.0
    %2464 = vmatprep.subr.mxu0 0.0
    %2465 = vmatpush2.msra.mxu0 0.0
    %2466 = vmatprep.subr.mxu0 0.0
    %2467 = vmatpush2.msra.mxu0 0.0
    %2468 = vmatprep.subr.mxu0 0.0
    %2469 = vmatpush2.msra.mxu0 0.0
    %2470 = vmatprep.subr.mxu0 0.0
    %2471 = vmatpush2.msra.mxu0 0.0
    %2472 = vmatprep.subr.mxu0 0.0
    %2473 = vmatpush2.msra.mxu0 0.0
    %2474 = vmatprep.subr.mxu0 0.0
    %2475 = vmatpush2.msra.mxu0 0.0
    %2476 = vmatprep.subr.mxu0 0.0
    %2477 = vmatpush2.msra.mxu0 0.0
    %2478 = vmatprep.subr.mxu0 0.0
    %2479 = vmatpush2.msra.mxu0 0.0
    %2480 = vmatprep.subr.mxu0 0.0
    %2481 = vmatpush2.msra.mxu0 0.0
    %2482 = vmatprep.subr.mxu0 0.0
    %2483 = vmatpush2.msra.mxu0 0.0
    %2484 = vmatprep.subr.mxu0 0.0
    %2485 = vmatpush2.msra.mxu0 0.0
    %2486 = vmatprep.subr.mxu0 0.0
    %2487 = vmatpush2.msra.mxu0 0.0
    %2488 = vmatprep.subr.mxu0 0.0
    %2489 = vmatpush2.msra.mxu0 0.0
    %2490 = vmatprep.mubr.f32.mxu0 0.0
    %2491 = vmatmul.mubr.f32.gmra.mxu0 %v2421
    %v2492 = vpop.f32.mrf.mxu0
    %v2493 = vadd.f32 0.0, %v2492
    %v2494 = vpop.f32.mrf.mxu0
    %2495 = vmatprep.mubr.f32.mxu0 0.0
    %2496 = vmatmul.mubr.f32.gmra.mxu0 %v2424
    %v2497 = vpop.f32.mrf.mxu0
    %v2498 = vadd.f32 0.0, %v2497
    %v2499 = vpop.f32.mrf.mxu0
    %2500 = vdwg.mxu0
    %s2501 = scalar_lea.vmem [#allocation7], 160
    %2502 = vst [vmem:[%s2501] sm:$0xff] %v2493
    %2503 = vst [vmem:[%s2501 + $0x8] sm:$0xff] %v2498
    // Predicated region
    $region18: #{run.1} parent=1 // pred_check
      _
    $region19: #{run.1} parent=1 // pred_check_branch
      %2505 = sbr.rel (0) target = $region21
    $region20: #{run.1} parent=1 // pred_region
      %s2507 = ssub.s32 2816, 2816
      %2508 = vsyncadd [#allocation6], %s2507
      %s2509 = sshll.u32 [#allocation7], 4
      %s2510 = int_to_ptr.vmem [resolvable:$true] %s2509
      %2515 = dma.vmem_to_hbm [thread:$0]  %s2510, 2816, %s4, [#allocation6], 128, 128, 8
    $region21: #{run.1} parent=1 // pred_fallthru
      _
    // Predicated region
    $region22: #{run.1} parent=1 // pred_check
      _
    $region23: #{run.1} parent=1 // pred_check_branch
      %2517 = sbr.rel (0) target = $region25
    $region24: #{run.1} parent=1 // pred_region
      %2518 = dma.done [#allocation6], 2816
    $region25: #{run.1} parent=1 // pred_fallthru
      _
    %2519 = vsyncpa [#allocation5], 1
    %2520 = vsyncpa [#allocation6], 1

</llo_original>
